<compile_context>
chip_gen: v7x
topology: tpu7x:2x2x1
jax: 0.10.0
libtpu: 0.0.40
codegen_flags: <defaults>
</compile_context>

<pallas_src>
import math

import jax
import jax.numpy as jnp
import numpy as np
from jax.experimental import pallas as pl
from jax.experimental.pallas import tpu as pltpu


# ----------------------------- Fused Pallas kernel ---------------------------

def _make_fused_kernel(T, Bp, H, L):
    """Fused IMUModel forward.

    Ref order:
      inputs : x2, x2_rev, expand_w_t, expand_b,
               (A, B, bgi, whh, bhn) * L, fcA, fcB
      outputs: pred (N, out_cols), natural time-major rows (row = t*Bp + b)
      scratch: gi (N, 6H) f32, ys (N, 2H) f32, ysr (N, 2H) f32

    Gate lane layout (6H): [r_f, r_b, z_f, z_b, n_f, n_b], each H wide.
    gi row t holds fwd gates for time t and bwd gates for time T-1-t, so the
    fused recurrence consumes ONE row block per step.
    ys row t = [h_f[t] | h_b[T-1-t]] (step order); ysr row t = ys[T-1-t].
    """
    f32 = jnp.float32
    bf16 = jnp.bfloat16
    n_in = 4 + 5 * L + 2

    def kernel(*refs):
        x_ref, xr_ref, ew_ref, eb_ref = refs[0:4]
        fcA_ref, fcB_ref = refs[4 + 5 * L], refs[5 + 5 * L]
        o_ref = refs[n_in]
        gi_sc, ys_sc, ysr_sc = refs[n_in + 1:]

        # ---- expand_conv + ReLU (dropout = identity in eval) ----
        ew = ew_ref[...]
        eb = eb_ref[...]
        u = jnp.maximum(
            jnp.dot(x_ref[...], ew, preferred_element_type=f32) + eb, 0.0
        ).astype(bf16)                                            # natural time
        u_rev = jnp.maximum(
            jnp.dot(xr_ref[...], ew, preferred_element_type=f32) + eb, 0.0
        ).astype(bf16)                                            # reversed time

        for l in range(L):
            A_ref, B_ref, bgi_ref, whh_ref, bhn_ref = refs[4 + 5 * l: 9 + 5 * l]

            # ---- hoisted input projection, both directions, one store ----
            gi_sc[...] = (
                jnp.dot(u, A_ref[...], preferred_element_type=f32)
                + jnp.dot(u_rev, B_ref[...], preferred_element_type=f32)
                + bgi_ref[...])

            whh = whh_ref[...]                                    # (2H, 6H) bf16
            bhn = jnp.broadcast_to(bhn_ref[...], (Bp, 2 * H))     # hoisted bcast
            h = jnp.zeros((Bp, 2 * H), f32)                       # [h_f | h_b]

            # ---- fused fwd+bwd recurrence: 1 matmul + 1 gate pass / step ----
            for t in range(T):
                gi = gi_sc[t * Bp:(t + 1) * Bp, :]                # (Bp, 6H)
                gh = jnp.dot(h.astype(bf16), whh,
                             preferred_element_type=f32)          # (Bp, 6H)
                rz = jax.nn.sigmoid(gi[:, :4 * H] + gh[:, :4 * H])
                r = rz[:, :2 * H]                                 # [r_f | r_b]
                z = rz[:, 2 * H:]                                 # [z_f | z_b]
                n = jnp.tanh(gi[:, 4 * H:] + r * (gh[:, 4 * H:] + bhn))
                h = (1.0 - z) * n + z * h
                ys_sc[t * Bp:(t + 1) * Bp, :] = h
                ysr_sc[(T - 1 - t) * Bp:(T - t) * Bp, :] = h

            u = ys_sc[...].astype(bf16)
            u_rev = ysr_sc[...].astype(bf16)

        # ---- fc(ReLU(.)), bias-free, lane-dense zero-padded output columns ----
        o_ref[...] = (
            jnp.dot(jnp.maximum(u, 0.0), fcA_ref[...],
                    preferred_element_type=f32)
            + jnp.dot(jnp.maximum(u_rev, 0.0), fcB_ref[...],
                      preferred_element_type=f32))

    return kernel


# ------------------------------- Param packing --------------------------------

def pack_params(params, out_cols):
    """Re-layout PyTorch-convention parameters for the fused kernel."""
    H = params["hidden"]
    L = params["num_layers"]
    G = 6 * H
    f32 = jnp.float32
    bf16 = jnp.bfloat16

    def place(w_t, d):
        """Scatter (in, 3H) [r|z|n] columns into interleaved fused layout."""
        out = jnp.zeros((w_t.shape[0], G), f32)
        for g in range(3):
            out = out.at[:, (2 * g + d) * H:(2 * g + d + 1) * H].set(
                w_t[:, g * H:(g + 1) * H])
        return out

    def place_bias(bias, d, out):
        for g in range(3):
            out = out.at[0, (2 * g + d) * H:(2 * g + d + 1) * H].set(
                bias[g * H:(g + 1) * H])
        return out

    packed = [params["expand_w"].T.astype(bf16),                  # (feat, E)
              params["expand_b"].reshape(1, -1).astype(f32)]      # (1, E)

    for l in range(L):
        wfT = params[f"w_ih_l{l}"].T                              # (in, 3H)
        wbT = params[f"w_ih_l{l}_rev"].T
        if l == 0:
            A = place(wfT, 0)                 # natural-time input -> fwd gates
            Bm = place(wbT, 1)                # reversed-time input -> bwd gates
        else:
            # input features: rows 0:H = fwd hidden, H:2H = bwd hidden.
            # ys row t = [hf[t] | hb[T-1-t]]; ysr row t = ys[T-1-t].
            A = jnp.zeros((2 * H, G), f32)
            A = A.at[:H].set(place(wfT[:H], 0))     # ys.h_f  -> fwd gate cols
            A = A.at[H:].set(place(wbT[H:], 1))     # ys.h_b  -> bwd gate cols
            Bm = jnp.zeros((2 * H, G), f32)
            Bm = Bm.at[:H].set(place(wbT[:H], 1))   # ysr.h_f -> bwd gate cols
            Bm = Bm.at[H:].set(place(wfT[H:], 0))   # ysr.h_b -> fwd gate cols

        whh = jnp.zeros((2 * H, G), f32)            # block-diagonal fused W_hh
        whh = whh.at[:H].set(place(params[f"w_hh_l{l}"].T, 0))
        whh = whh.at[H:].set(place(params[f"w_hh_l{l}_rev"].T, 1))

        bgi = jnp.zeros((1, G), f32)
        for d, sfx in ((0, ""), (1, "_rev")):
            b_ih = params[f"b_ih_l{l}{sfx}"]
            b_hh = params[f"b_hh_l{l}{sfx}"]
            fused = jnp.concatenate([b_ih[:2 * H] + b_hh[:2 * H], b_ih[2 * H:]])
            bgi = place_bias(fused, d, bgi)
        bhn = jnp.concatenate([params[f"b_hh_l{l}"][2 * H:],
                               params[f"b_hh_l{l}_rev"][2 * H:]]).reshape(1, 2 * H)

        packed += [A.astype(bf16), Bm.astype(bf16), bgi,
                   whh.astype(bf16), bhn]

    fcT = params["fc_w"].T                                        # (2H, feat)
    feat = fcT.shape[1]
    fcA = jnp.zeros((2 * H, out_cols), f32).at[:H, :feat].set(fcT[:H])
    fcB = jnp.zeros((2 * H, out_cols), f32).at[H:, :feat].set(fcT[H:])
    packed += [fcA.astype(bf16), fcB.astype(bf16)]
    return packed


# --------------------------------- Wrapper -------------------------------------

def imu_model_forward(params, x):
    """x: (B, F, J, C) -> (B, F, J, C). Single fused pallas_call."""
    b, f, j, c = x.shape
    feat = j * c
    H = params["hidden"]
    L = params["num_layers"]
    T = f
    Bp = ((b + 7) // 8) * 8                     # pad batch to full sublanes
    N = T * Bp
    out_cols = ((feat + 127) // 128) * 128      # lane-dense padded output width

    # Time-major, batch-padded input; tiny XLA transpose/pad of the raw input.
    x_tbf = x.reshape(b, f, feat).transpose(1, 0, 2)              # (T, b, feat)
    xp = jnp.zeros((T, Bp, feat), x.dtype).at[:, :b, :].set(x_tbf)
    x2 = xp.reshape(N, feat).astype(jnp.bfloat16)
    x2r = xp[::-1].reshape(N, feat).astype(jnp.bfloat16)          # time-reversed

    args = [x2, x2r] + pack_params(params, out_cols)

    def full_block(a):
        return pl.BlockSpec(a.shape, lambda i: (0, 0))

    out = pl.pallas_call(
        _make_fused_kernel(T=T, Bp=Bp, H=H, L=L),
        out_shape=jax.ShapeDtypeStruct((N, out_cols), jnp.float32),
        grid=(1,),
        in_specs=[full_block(a) for a in args],
        out_specs=pl.BlockSpec((N, out_cols), lambda i: (0, 0)),
        scratch_shapes=[
            pltpu.VMEM((N, 6 * H), jnp.float32),   # fused hoisted gate pre-acts
            pltpu.VMEM((N, 2 * H), jnp.float32),   # y, step order
            pltpu.VMEM((N, 2 * H), jnp.float32),   # y, reversed step order
        ],
        compiler_params=pltpu.CompilerParams(
            dimension_semantics=("arbitrary",)),
    )(*args)

    pred = out.reshape(T, Bp, out_cols)[:, :b, :feat]             # (T, b, feat)
    return pred.transpose(1, 0, 2).reshape(b, f, j, c)


# ------------------------- Parameters & reference -----------------------------

def init_params(key, num_joints, in_features, embed_dim, hidden, num_layers):
    feat = num_joints * in_features
    params = {"num_layers": num_layers, "hidden": hidden}
    keys = iter(jax.random.split(key, 64))

    def u(shape, scale):
        return jax.random.uniform(next(keys), shape, jnp.float32, -scale, scale)

    params["expand_w"] = u((embed_dim, feat), 1.0 / math.sqrt(feat))
    params["expand_b"] = u((embed_dim,), 1.0 / math.sqrt(feat))
    k = 1.0 / math.sqrt(hidden)
    for l in range(num_layers):
        in_size = embed_dim if l == 0 else 2 * hidden
        for suffix in ("", "_rev"):
            params[f"w_ih_l{l}{suffix}"] = u((3 * hidden, in_size), k)
            params[f"w_hh_l{l}{suffix}"] = u((3 * hidden, hidden), k)
            params[f"b_ih_l{l}{suffix}"] = u((3 * hidden,), k)
            params[f"b_hh_l{l}{suffix}"] = u((3 * hidden,), k)
    params["fc_w"] = u((feat, 2 * hidden), 1.0 / math.sqrt(2 * hidden))
    return params


def _gru_ref_dir(x_tbe, w_ih, w_hh, b_ih, b_hh, h0, reverse):
    H = w_hh.shape[1]
    xs = x_tbe[::-1] if reverse else x_tbe

    def step(h, x_t):
        gi = x_t @ w_ih.T + b_ih
        gh = h @ w_hh.T + b_hh
        r = jax.nn.sigmoid(gi[:, :H] + gh[:, :H])
        z = jax.nn.sigmoid(gi[:, H:2 * H] + gh[:, H:2 * H])
        n = jnp.tanh(gi[:, 2 * H:] + r * gh[:, 2 * H:])
        h_new = (1.0 - z) * n + z * h
        return h_new, h_new

    _, ys = jax.lax.scan(step, h0, xs)
    return ys[::-1] if reverse else ys


def imu_model_ref(params, x):
    b, f, j, c = x.shape
    H = params["hidden"]
    h = jnp.maximum(x.reshape(b * f, j * c) @ params["expand_w"].T
                    + params["expand_b"], 0.0)
    layer_in = h.reshape(b, f, -1).transpose(1, 0, 2)
    for l in range(params["num_layers"]):
        h0 = jnp.zeros((b, H), jnp.float32)
        fwd = _gru_ref_dir(layer_in, params[f"w_ih_l{l}"], params[f"w_hh_l{l}"],
                           params[f"b_ih_l{l}"], params[f"b_hh_l{l}"], h0, False)
        bwd = _gru_ref_dir(layer_in, params[f"w_ih_l{l}_rev"], params[f"w_hh_l{l}_rev"],
                           params[f"b_ih_l{l}_rev"], params[f"b_hh_l{l}_rev"], h0, True)
        layer_in = jnp.concatenate([fwd, bwd], axis=-1)
    gru_out = layer_in.transpose(1, 0, 2).reshape(b * f, 2 * H)
    pred = jnp.maximum(gru_out, 0.0) @ params["fc_w"].T
    return pred.reshape(b, f, j, c)


# --------------------------------- Main ----------------------------------------

if __name__ == "__main__":
    # Small shapes: batch=2, frames(seq)=8, joints=4, in_features=3,
    # embed_dim=32, hidden=32, num_layers=2, bidirectional.
    B, F, J, C = 2, 8, 4, 3
    EMBED, HIDDEN, LAYERS = 32, 32, 2

    key = jax.random.PRNGKey(0)
    k_param, k_x = jax.random.split(key)
    params = init_params(k_param, J, C, EMBED, HIDDEN, LAYERS)
    x = jax.random.normal(k_x, (B, F, J, C), jnp.float32)

    out = jax.block_until_ready(imu_model_forward(params, x))
    ref = jax.block_until_ready(imu_model_ref(params, x))

    assert out.shape == (B, F, J, C)
    np.testing.assert_allclose(np.asarray(out), np.asarray(ref),
                               rtol=2e-2, atol=2e-2)
    print("KERNEL_OK")
</pallas_src>

<mosaic_0001>
module attributes {stable_mosaic.version = 11 : i64} {
  func.func @kernel(%arg0: i32, %arg1: memref<64x12xbf16, #tpu.memory_space<vmem>>, %arg2: memref<64x12xbf16, #tpu.memory_space<vmem>>, %arg3: memref<12x32xbf16, #tpu.memory_space<vmem>>, %arg4: memref<1x32xf32, #tpu.memory_space<vmem>>, %arg5: memref<32x192xbf16, #tpu.memory_space<vmem>>, %arg6: memref<32x192xbf16, #tpu.memory_space<vmem>>, %arg7: memref<1x192xf32, #tpu.memory_space<vmem>>, %arg8: memref<64x192xbf16, #tpu.memory_space<vmem>>, %arg9: memref<1x64xf32, #tpu.memory_space<vmem>>, %arg10: memref<64x192xbf16, #tpu.memory_space<vmem>>, %arg11: memref<64x192xbf16, #tpu.memory_space<vmem>>, %arg12: memref<1x192xf32, #tpu.memory_space<vmem>>, %arg13: memref<64x192xbf16, #tpu.memory_space<vmem>>, %arg14: memref<1x64xf32, #tpu.memory_space<vmem>>, %arg15: memref<64x128xbf16, #tpu.memory_space<vmem>>, %arg16: memref<64x128xbf16, #tpu.memory_space<vmem>>, %arg17: memref<64x128xf32, #tpu.memory_space<vmem>>, %arg18: memref<64x192xf32, #tpu.memory_space<vmem>>, %arg19: memref<64x64xf32, #tpu.memory_space<vmem>>, %arg20: memref<64x64xf32, #tpu.memory_space<vmem>>) attributes {dimension_semantics = [#tpu.dimension_semantics<arbitrary>], iteration_bounds = array<i64: 1>, scalar_prefetch = 0 : i64, scratch_operands = 3 : i64, tpu.core_type = #tpu.core_type<tc>, window_params = [{pipeline_mode = #tpu.pipeline_mode<synchronous>, transform_indices = @transform_0, window_bounds = array<i64: 64, 12>}, {pipeline_mode = #tpu.pipeline_mode<synchronous>, transform_indices = @transform_1, window_bounds = array<i64: 64, 12>}, {pipeline_mode = #tpu.pipeline_mode<synchronous>, transform_indices = @transform_2, window_bounds = array<i64: 12, 32>}, {pipeline_mode = #tpu.pipeline_mode<synchronous>, transform_indices = @transform_3, window_bounds = array<i64: 1, 32>}, {pipeline_mode = #tpu.pipeline_mode<synchronous>, transform_indices = @transform_4, window_bounds = array<i64: 32, 192>}, {pipeline_mode = #tpu.pipeline_mode<synchronous>, transform_indices = @transform_5, window_bounds = array<i64: 32, 192>}, {pipeline_mode = #tpu.pipeline_mode<synchronous>, transform_indices = @transform_6, window_bounds = array<i64: 1, 192>}, {pipeline_mode = #tpu.pipeline_mode<synchronous>, transform_indices = @transform_7, window_bounds = array<i64: 64, 192>}, {pipeline_mode = #tpu.pipeline_mode<synchronous>, transform_indices = @transform_8, window_bounds = array<i64: 1, 64>}, {pipeline_mode = #tpu.pipeline_mode<synchronous>, transform_indices = @transform_9, window_bounds = array<i64: 64, 192>}, {pipeline_mode = #tpu.pipeline_mode<synchronous>, transform_indices = @transform_10, window_bounds = array<i64: 64, 192>}, {pipeline_mode = #tpu.pipeline_mode<synchronous>, transform_indices = @transform_11, window_bounds = array<i64: 1, 192>}, {pipeline_mode = #tpu.pipeline_mode<synchronous>, transform_indices = @transform_12, window_bounds = array<i64: 64, 192>}, {pipeline_mode = #tpu.pipeline_mode<synchronous>, transform_indices = @transform_13, window_bounds = array<i64: 1, 64>}, {pipeline_mode = #tpu.pipeline_mode<synchronous>, transform_indices = @transform_14, window_bounds = array<i64: 64, 128>}, {pipeline_mode = #tpu.pipeline_mode<synchronous>, transform_indices = @transform_15, window_bounds = array<i64: 64, 128>}, {pipeline_mode = #tpu.pipeline_mode<synchronous>, transform_indices = @transform_16, window_bounds = array<i64: 64, 128>}]} {
    %c0 = arith.constant 0 : index
    %c0_0 = arith.constant 0 : index
    %0 = vector.load %arg3[%c0, %c0_0] : memref<12x32xbf16, #tpu.memory_space<vmem>>, vector<12x32xbf16>
    %c0_1 = arith.constant 0 : index
    %c0_2 = arith.constant 0 : index
    %1 = vector.load %arg4[%c0_1, %c0_2] : memref<1x32xf32, #tpu.memory_space<vmem>>, vector<1x32xf32>
    %c0_3 = arith.constant 0 : index
    %c0_4 = arith.constant 0 : index
    %2 = vector.load %arg1[%c0_3, %c0_4] : memref<64x12xbf16, #tpu.memory_space<vmem>>, vector<64x12xbf16>
    %cst = arith.constant dense<0.000000e+00> : vector<64x32xf32>
    %3 = tpu.matmul %2, %0, %cst {dimension_numbers = #tpu.dot_dimension_numbers<[1], [0], [0], [1], [0, 0, 1, 1], [], []>} : vector<64x12xbf16>, vector<12x32xbf16>, vector<64x32xf32> -> vector<64x32xf32>
    %4 = vector.broadcast %1 : vector<1x32xf32> to vector<64x32xf32>
    %5 = arith.addf %3, %4 : vector<64x32xf32>
    %cst_5 = arith.constant 0.000000e+00 : f32
    %6 = vector.broadcast %cst_5 : f32 to vector<64x32xf32>
    %7 = arith.maximumf %5, %6 : vector<64x32xf32>
    %8 = arith.truncf %7 : vector<64x32xf32> to vector<64x32xbf16>
    %c0_6 = arith.constant 0 : index
    %c0_7 = arith.constant 0 : index
    %9 = vector.load %arg2[%c0_6, %c0_7] : memref<64x12xbf16, #tpu.memory_space<vmem>>, vector<64x12xbf16>
    %cst_8 = arith.constant dense<0.000000e+00> : vector<64x32xf32>
    %10 = tpu.matmul %9, %0, %cst_8 {dimension_numbers = #tpu.dot_dimension_numbers<[1], [0], [0], [1], [0, 0, 1, 1], [], []>} : vector<64x12xbf16>, vector<12x32xbf16>, vector<64x32xf32> -> vector<64x32xf32>
    %11 = vector.broadcast %1 : vector<1x32xf32> to vector<64x32xf32>
    %12 = arith.addf %10, %11 : vector<64x32xf32>
    %cst_9 = arith.constant 0.000000e+00 : f32
    %13 = vector.broadcast %cst_9 : f32 to vector<64x32xf32>
    %14 = arith.maximumf %12, %13 : vector<64x32xf32>
    %15 = arith.truncf %14 : vector<64x32xf32> to vector<64x32xbf16>
    %c0_10 = arith.constant 0 : index
    %c0_11 = arith.constant 0 : index
    %16 = vector.load %arg5[%c0_10, %c0_11] : memref<32x192xbf16, #tpu.memory_space<vmem>>, vector<32x192xbf16>
    %cst_12 = arith.constant dense<0.000000e+00> : vector<64x192xf32>
    %17 = tpu.matmul %8, %16, %cst_12 {dimension_numbers = #tpu.dot_dimension_numbers<[1], [0], [0], [1], [0, 0, 1, 1], [], []>} : vector<64x32xbf16>, vector<32x192xbf16>, vector<64x192xf32> -> vector<64x192xf32>
    %c0_13 = arith.constant 0 : index
    %c0_14 = arith.constant 0 : index
    %18 = vector.load %arg6[%c0_13, %c0_14] : memref<32x192xbf16, #tpu.memory_space<vmem>>, vector<32x192xbf16>
    %cst_15 = arith.constant dense<0.000000e+00> : vector<64x192xf32>
    %19 = tpu.matmul %15, %18, %cst_15 {dimension_numbers = #tpu.dot_dimension_numbers<[1], [0], [0], [1], [0, 0, 1, 1], [], []>} : vector<64x32xbf16>, vector<32x192xbf16>, vector<64x192xf32> -> vector<64x192xf32>
    %20 = arith.addf %17, %19 : vector<64x192xf32>
    %c0_16 = arith.constant 0 : index
    %c0_17 = arith.constant 0 : index
    %21 = vector.load %arg7[%c0_16, %c0_17] : memref<1x192xf32, #tpu.memory_space<vmem>>, vector<1x192xf32>
    %22 = vector.broadcast %21 : vector<1x192xf32> to vector<64x192xf32>
    %23 = arith.addf %20, %22 : vector<64x192xf32>
    %c0_18 = arith.constant 0 : index
    %c0_19 = arith.constant 0 : index
    %24 = vector.load %arg18[%c0_18, %c0_19] : memref<64x192xf32, #tpu.memory_space<vmem>>, vector<64x192xf32>
    tpu.vector_store %arg18[%c0_18, %c0_19], %23 {strides = array<i32>} : memref<64x192xf32, #tpu.memory_space<vmem>>, vector<64x192xf32>,
    %c0_20 = arith.constant 0 : index
    %c0_21 = arith.constant 0 : index
    %25 = vector.load %arg8[%c0_20, %c0_21] : memref<64x192xbf16, #tpu.memory_space<vmem>>, vector<64x192xbf16>
    %c0_22 = arith.constant 0 : index
    %c0_23 = arith.constant 0 : index
    %26 = vector.load %arg9[%c0_22, %c0_23] : memref<1x64xf32, #tpu.memory_space<vmem>>, vector<1x64xf32>
    %27 = vector.shape_cast %26 : vector<1x64xf32> to vector<1x64xf32>
    %28 = vector.broadcast %27 : vector<1x64xf32> to vector<8x64xf32>
    %cst_24 = arith.constant 0.000000e+00 : f32
    %29 = vector.broadcast %cst_24 : f32 to vector<8x64xf32>
    %c0_25 = arith.constant 0 : index
    %c0_26 = arith.constant 0 : index
    %30 = vector.load %arg18[%c0_25, %c0_26] : memref<64x192xf32, #tpu.memory_space<vmem>>, vector<8x192xf32>
    %31 = arith.truncf %29 : vector<8x64xf32> to vector<8x64xbf16>
    %cst_27 = arith.constant dense<0.000000e+00> : vector<8x192xf32>
    %32 = tpu.matmul %31, %25, %cst_27 {dimension_numbers = #tpu.dot_dimension_numbers<[1], [0], [0], [1], [0, 0, 1, 1], [], []>} : vector<8x64xbf16>, vector<64x192xbf16>, vector<8x192xf32> -> vector<8x192xf32>
    %33 = vector.extract_strided_slice %30 {offsets = [0, 0], sizes = [8, 128], strides = [1, 1]} : vector<8x192xf32> to vector<8x128xf32>
    %34 = vector.extract_strided_slice %32 {offsets = [0, 0], sizes = [8, 128], strides = [1, 1]} : vector<8x192xf32> to vector<8x128xf32>
    %35 = arith.addf %33, %34 : vector<8x128xf32>
    %36 = arith.negf %35 : vector<8x128xf32>
    %37 = math.exp %36 : vector<8x128xf32>
    %cst_28 = arith.constant 1.000000e+00 : f32
    %38 = vector.broadcast %cst_28 : f32 to vector<8x128xf32>
    %39 = arith.addf %38, %37 : vector<8x128xf32>
    %40 = arith.divf %38, %39 : vector<8x128xf32>
    %41 = vector.extract_strided_slice %40 {offsets = [0, 0], sizes = [8, 64], strides = [1, 1]} : vector<8x128xf32> to vector<8x64xf32>
    %42 = vector.extract_strided_slice %40 {offsets = [0, 64], sizes = [8, 64], strides = [1, 1]} : vector<8x128xf32> to vector<8x64xf32>
    %43 = vector.extract_strided_slice %30 {offsets = [0, 128], sizes = [8, 64], strides = [1, 1]} : vector<8x192xf32> to vector<8x64xf32>
    %44 = vector.extract_strided_slice %32 {offsets = [0, 128], sizes = [8, 64], strides = [1, 1]} : vector<8x192xf32> to vector<8x64xf32>
    %45 = arith.addf %44, %28 : vector<8x64xf32>
    %46 = arith.mulf %41, %45 : vector<8x64xf32>
    %47 = arith.addf %43, %46 : vector<8x64xf32>
    %48 = math.tanh %47 : vector<8x64xf32>
    %cst_29 = arith.constant 1.000000e+00 : f32
    %49 = vector.broadcast %cst_29 : f32 to vector<8x64xf32>
    %50 = arith.subf %49, %42 : vector<8x64xf32>
    %51 = arith.mulf %50, %48 : vector<8x64xf32>
    %52 = arith.mulf %42, %29 : vector<8x64xf32>
    %53 = arith.addf %51, %52 : vector<8x64xf32>
    %c0_30 = arith.constant 0 : index
    %c0_31 = arith.constant 0 : index
    %54 = vector.load %arg19[%c0_30, %c0_31] : memref<64x64xf32, #tpu.memory_space<vmem>>, vector<8x64xf32>
    tpu.vector_store %arg19[%c0_30, %c0_31], %53 {strides = array<i32>} : memref<64x64xf32, #tpu.memory_space<vmem>>, vector<8x64xf32>,
    %c56 = arith.constant 56 : index
    %c0_32 = arith.constant 0 : index
    %55 = vector.load %arg20[%c56, %c0_32] : memref<64x64xf32, #tpu.memory_space<vmem>>, vector<8x64xf32>
    tpu.vector_store %arg20[%c56, %c0_32], %53 {strides = array<i32>} : memref<64x64xf32, #tpu.memory_space<vmem>>, vector<8x64xf32>,
    %c8 = arith.constant 8 : index
    %c0_33 = arith.constant 0 : index
    %56 = vector.load %arg18[%c8, %c0_33] : memref<64x192xf32, #tpu.memory_space<vmem>>, vector<8x192xf32>
    %57 = arith.truncf %53 : vector<8x64xf32> to vector<8x64xbf16>
    %cst_34 = arith.constant dense<0.000000e+00> : vector<8x192xf32>
    %58 = tpu.matmul %57, %25, %cst_34 {dimension_numbers = #tpu.dot_dimension_numbers<[1], [0], [0], [1], [0, 0, 1, 1], [], []>} : vector<8x64xbf16>, vector<64x192xbf16>, vector<8x192xf32> -> vector<8x192xf32>
    %59 = vector.extract_strided_slice %56 {offsets = [0, 0], sizes = [8, 128], strides = [1, 1]} : vector<8x192xf32> to vector<8x128xf32>
    %60 = vector.extract_strided_slice %58 {offsets = [0, 0], sizes = [8, 128], strides = [1, 1]} : vector<8x192xf32> to vector<8x128xf32>
    %61 = arith.addf %59, %60 : vector<8x128xf32>
    %62 = arith.negf %61 : vector<8x128xf32>
    %63 = math.exp %62 : vector<8x128xf32>
    %cst_35 = arith.constant 1.000000e+00 : f32
    %64 = vector.broadcast %cst_35 : f32 to vector<8x128xf32>
    %65 = arith.addf %64, %63 : vector<8x128xf32>
    %66 = arith.divf %64, %65 : vector<8x128xf32>
    %67 = vector.extract_strided_slice %66 {offsets = [0, 0], sizes = [8, 64], strides = [1, 1]} : vector<8x128xf32> to vector<8x64xf32>
    %68 = vector.extract_strided_slice %66 {offsets = [0, 64], sizes = [8, 64], strides = [1, 1]} : vector<8x128xf32> to vector<8x64xf32>
    %69 = vector.extract_strided_slice %56 {offsets = [0, 128], sizes = [8, 64], strides = [1, 1]} : vector<8x192xf32> to vector<8x64xf32>
    %70 = vector.extract_strided_slice %58 {offsets = [0, 128], sizes = [8, 64], strides = [1, 1]} : vector<8x192xf32> to vector<8x64xf32>
    %71 = arith.addf %70, %28 : vector<8x64xf32>
    %72 = arith.mulf %67, %71 : vector<8x64xf32>
    %73 = arith.addf %69, %72 : vector<8x64xf32>
    %74 = math.tanh %73 : vector<8x64xf32>
    %cst_36 = arith.constant 1.000000e+00 : f32
    %75 = vector.broadcast %cst_36 : f32 to vector<8x64xf32>
    %76 = arith.subf %75, %68 : vector<8x64xf32>
    %77 = arith.mulf %76, %74 : vector<8x64xf32>
    %78 = arith.mulf %68, %53 : vector<8x64xf32>
    %79 = arith.addf %77, %78 : vector<8x64xf32>
    %c8_37 = arith.constant 8 : index
    %c0_38 = arith.constant 0 : index
    %80 = vector.load %arg19[%c8_37, %c0_38] : memref<64x64xf32, #tpu.memory_space<vmem>>, vector<8x64xf32>
    tpu.vector_store %arg19[%c8_37, %c0_38], %79 {strides = array<i32>} : memref<64x64xf32, #tpu.memory_space<vmem>>, vector<8x64xf32>,
    %c48 = arith.constant 48 : index
    %c0_39 = arith.constant 0 : index
    %81 = vector.load %arg20[%c48, %c0_39] : memref<64x64xf32, #tpu.memory_space<vmem>>, vector<8x64xf32>
    tpu.vector_store %arg20[%c48, %c0_39], %79 {strides = array<i32>} : memref<64x64xf32, #tpu.memory_space<vmem>>, vector<8x64xf32>,
    %c16 = arith.constant 16 : index
    %c0_40 = arith.constant 0 : index
    %82 = vector.load %arg18[%c16, %c0_40] : memref<64x192xf32, #tpu.memory_space<vmem>>, vector<8x192xf32>
    %83 = arith.truncf %79 : vector<8x64xf32> to vector<8x64xbf16>
    %cst_41 = arith.constant dense<0.000000e+00> : vector<8x192xf32>
    %84 = tpu.matmul %83, %25, %cst_41 {dimension_numbers = #tpu.dot_dimension_numbers<[1], [0], [0], [1], [0, 0, 1, 1], [], []>} : vector<8x64xbf16>, vector<64x192xbf16>, vector<8x192xf32> -> vector<8x192xf32>
    %85 = vector.extract_strided_slice %82 {offsets = [0, 0], sizes = [8, 128], strides = [1, 1]} : vector<8x192xf32> to vector<8x128xf32>
    %86 = vector.extract_strided_slice %84 {offsets = [0, 0], sizes = [8, 128], strides = [1, 1]} : vector<8x192xf32> to vector<8x128xf32>
    %87 = arith.addf %85, %86 : vector<8x128xf32>
    %88 = arith.negf %87 : vector<8x128xf32>
    %89 = math.exp %88 : vector<8x128xf32>
    %cst_42 = arith.constant 1.000000e+00 : f32
    %90 = vector.broadcast %cst_42 : f32 to vector<8x128xf32>
    %91 = arith.addf %90, %89 : vector<8x128xf32>
    %92 = arith.divf %90, %91 : vector<8x128xf32>
    %93 = vector.extract_strided_slice %92 {offsets = [0, 0], sizes = [8, 64], strides = [1, 1]} : vector<8x128xf32> to vector<8x64xf32>
    %94 = vector.extract_strided_slice %92 {offsets = [0, 64], sizes = [8, 64], strides = [1, 1]} : vector<8x128xf32> to vector<8x64xf32>
    %95 = vector.extract_strided_slice %82 {offsets = [0, 128], sizes = [8, 64], strides = [1, 1]} : vector<8x192xf32> to vector<8x64xf32>
    %96 = vector.extract_strided_slice %84 {offsets = [0, 128], sizes = [8, 64], strides = [1, 1]} : vector<8x192xf32> to vector<8x64xf32>
    %97 = arith.addf %96, %28 : vector<8x64xf32>
    %98 = arith.mulf %93, %97 : vector<8x64xf32>
    %99 = arith.addf %95, %98 : vector<8x64xf32>
    %100 = math.tanh %99 : vector<8x64xf32>
    %cst_43 = arith.constant 1.000000e+00 : f32
    %101 = vector.broadcast %cst_43 : f32 to vector<8x64xf32>
    %102 = arith.subf %101, %94 : vector<8x64xf32>
    %103 = arith.mulf %102, %100 : vector<8x64xf32>
    %104 = arith.mulf %94, %79 : vector<8x64xf32>
    %105 = arith.addf %103, %104 : vector<8x64xf32>
    %c16_44 = arith.constant 16 : index
    %c0_45 = arith.constant 0 : index
    %106 = vector.load %arg19[%c16_44, %c0_45] : memref<64x64xf32, #tpu.memory_space<vmem>>, vector<8x64xf32>
    tpu.vector_store %arg19[%c16_44, %c0_45], %105 {strides = array<i32>} : memref<64x64xf32, #tpu.memory_space<vmem>>, vector<8x64xf32>,
    %c40 = arith.constant 40 : index
    %c0_46 = arith.constant 0 : index
    %107 = vector.load %arg20[%c40, %c0_46] : memref<64x64xf32, #tpu.memory_space<vmem>>, vector<8x64xf32>
    tpu.vector_store %arg20[%c40, %c0_46], %105 {strides = array<i32>} : memref<64x64xf32, #tpu.memory_space<vmem>>, vector<8x64xf32>,
    %c24 = arith.constant 24 : index
    %c0_47 = arith.constant 0 : index
    %108 = vector.load %arg18[%c24, %c0_47] : memref<64x192xf32, #tpu.memory_space<vmem>>, vector<8x192xf32>
    %109 = arith.truncf %105 : vector<8x64xf32> to vector<8x64xbf16>
    %cst_48 = arith.constant dense<0.000000e+00> : vector<8x192xf32>
    %110 = tpu.matmul %109, %25, %cst_48 {dimension_numbers = #tpu.dot_dimension_numbers<[1], [0], [0], [1], [0, 0, 1, 1], [], []>} : vector<8x64xbf16>, vector<64x192xbf16>, vector<8x192xf32> -> vector<8x192xf32>
    %111 = vector.extract_strided_slice %108 {offsets = [0, 0], sizes = [8, 128], strides = [1, 1]} : vector<8x192xf32> to vector<8x128xf32>
    %112 = vector.extract_strided_slice %110 {offsets = [0, 0], sizes = [8, 128], strides = [1, 1]} : vector<8x192xf32> to vector<8x128xf32>
    %113 = arith.addf %111, %112 : vector<8x128xf32>
    %114 = arith.negf %113 : vector<8x128xf32>
    %115 = math.exp %114 : vector<8x128xf32>
    %cst_49 = arith.constant 1.000000e+00 : f32
    %116 = vector.broadcast %cst_49 : f32 to vector<8x128xf32>
    %117 = arith.addf %116, %115 : vector<8x128xf32>
    %118 = arith.divf %116, %117 : vector<8x128xf32>
    %119 = vector.extract_strided_slice %118 {offsets = [0, 0], sizes = [8, 64], strides = [1, 1]} : vector<8x128xf32> to vector<8x64xf32>
    %120 = vector.extract_strided_slice %118 {offsets = [0, 64], sizes = [8, 64], strides = [1, 1]} : vector<8x128xf32> to vector<8x64xf32>
    %121 = vector.extract_strided_slice %108 {offsets = [0, 128], sizes = [8, 64], strides = [1, 1]} : vector<8x192xf32> to vector<8x64xf32>
    %122 = vector.extract_strided_slice %110 {offsets = [0, 128], sizes = [8, 64], strides = [1, 1]} : vector<8x192xf32> to vector<8x64xf32>
    %123 = arith.addf %122, %28 : vector<8x64xf32>
    %124 = arith.mulf %119, %123 : vector<8x64xf32>
    %125 = arith.addf %121, %124 : vector<8x64xf32>
    %126 = math.tanh %125 : vector<8x64xf32>
    %cst_50 = arith.constant 1.000000e+00 : f32
    %127 = vector.broadcast %cst_50 : f32 to vector<8x64xf32>
    %128 = arith.subf %127, %120 : vector<8x64xf32>
    %129 = arith.mulf %128, %126 : vector<8x64xf32>
    %130 = arith.mulf %120, %105 : vector<8x64xf32>
    %131 = arith.addf %129, %130 : vector<8x64xf32>
    %c24_51 = arith.constant 24 : index
    %c0_52 = arith.constant 0 : index
    %132 = vector.load %arg19[%c24_51, %c0_52] : memref<64x64xf32, #tpu.memory_space<vmem>>, vector<8x64xf32>
    tpu.vector_store %arg19[%c24_51, %c0_52], %131 {strides = array<i32>} : memref<64x64xf32, #tpu.memory_space<vmem>>, vector<8x64xf32>,
    %c32 = arith.constant 32 : index
    %c0_53 = arith.constant 0 : index
    %133 = vector.load %arg20[%c32, %c0_53] : memref<64x64xf32, #tpu.memory_space<vmem>>, vector<8x64xf32>
    tpu.vector_store %arg20[%c32, %c0_53], %131 {strides = array<i32>} : memref<64x64xf32, #tpu.memory_space<vmem>>, vector<8x64xf32>,
    %c32_54 = arith.constant 32 : index
    %c0_55 = arith.constant 0 : index
    %134 = vector.load %arg18[%c32_54, %c0_55] : memref<64x192xf32, #tpu.memory_space<vmem>>, vector<8x192xf32>
    %135 = arith.truncf %131 : vector<8x64xf32> to vector<8x64xbf16>
    %cst_56 = arith.constant dense<0.000000e+00> : vector<8x192xf32>
    %136 = tpu.matmul %135, %25, %cst_56 {dimension_numbers = #tpu.dot_dimension_numbers<[1], [0], [0], [1], [0, 0, 1, 1], [], []>} : vector<8x64xbf16>, vector<64x192xbf16>, vector<8x192xf32> -> vector<8x192xf32>
    %137 = vector.extract_strided_slice %134 {offsets = [0, 0], sizes = [8, 128], strides = [1, 1]} : vector<8x192xf32> to vector<8x128xf32>
    %138 = vector.extract_strided_slice %136 {offsets = [0, 0], sizes = [8, 128], strides = [1, 1]} : vector<8x192xf32> to vector<8x128xf32>
    %139 = arith.addf %137, %138 : vector<8x128xf32>
    %140 = arith.negf %139 : vector<8x128xf32>
    %141 = math.exp %140 : vector<8x128xf32>
    %cst_57 = arith.constant 1.000000e+00 : f32
    %142 = vector.broadcast %cst_57 : f32 to vector<8x128xf32>
    %143 = arith.addf %142, %141 : vector<8x128xf32>
    %144 = arith.divf %142, %143 : vector<8x128xf32>
    %145 = vector.extract_strided_slice %144 {offsets = [0, 0], sizes = [8, 64], strides = [1, 1]} : vector<8x128xf32> to vector<8x64xf32>
    %146 = vector.extract_strided_slice %144 {offsets = [0, 64], sizes = [8, 64], strides = [1, 1]} : vector<8x128xf32> to vector<8x64xf32>
    %147 = vector.extract_strided_slice %134 {offsets = [0, 128], sizes = [8, 64], strides = [1, 1]} : vector<8x192xf32> to vector<8x64xf32>
    %148 = vector.extract_strided_slice %136 {offsets = [0, 128], sizes = [8, 64], strides = [1, 1]} : vector<8x192xf32> to vector<8x64xf32>
    %149 = arith.addf %148, %28 : vector<8x64xf32>
    %150 = arith.mulf %145, %149 : vector<8x64xf32>
    %151 = arith.addf %147, %150 : vector<8x64xf32>
    %152 = math.tanh %151 : vector<8x64xf32>
    %cst_58 = arith.constant 1.000000e+00 : f32
    %153 = vector.broadcast %cst_58 : f32 to vector<8x64xf32>
    %154 = arith.subf %153, %146 : vector<8x64xf32>
    %155 = arith.mulf %154, %152 : vector<8x64xf32>
    %156 = arith.mulf %146, %131 : vector<8x64xf32>
    %157 = arith.addf %155, %156 : vector<8x64xf32>
    %c32_59 = arith.constant 32 : index
    %c0_60 = arith.constant 0 : index
    %158 = vector.load %arg19[%c32_59, %c0_60] : memref<64x64xf32, #tpu.memory_space<vmem>>, vector<8x64xf32>
    tpu.vector_store %arg19[%c32_59, %c0_60], %157 {strides = array<i32>} : memref<64x64xf32, #tpu.memory_space<vmem>>, vector<8x64xf32>,
    %c24_61 = arith.constant 24 : index
    %c0_62 = arith.constant 0 : index
    %159 = vector.load %arg20[%c24_61, %c0_62] : memref<64x64xf32, #tpu.memory_space<vmem>>, vector<8x64xf32>
    tpu.vector_store %arg20[%c24_61, %c0_62], %157 {strides = array<i32>} : memref<64x64xf32, #tpu.memory_space<vmem>>, vector<8x64xf32>,
    %c40_63 = arith.constant 40 : index
    %c0_64 = arith.constant 0 : index
    %160 = vector.load %arg18[%c40_63, %c0_64] : memref<64x192xf32, #tpu.memory_space<vmem>>, vector<8x192xf32>
    %161 = arith.truncf %157 : vector<8x64xf32> to vector<8x64xbf16>
    %cst_65 = arith.constant dense<0.000000e+00> : vector<8x192xf32>
    %162 = tpu.matmul %161, %25, %cst_65 {dimension_numbers = #tpu.dot_dimension_numbers<[1], [0], [0], [1], [0, 0, 1, 1], [], []>} : vector<8x64xbf16>, vector<64x192xbf16>, vector<8x192xf32> -> vector<8x192xf32>
    %163 = vector.extract_strided_slice %160 {offsets = [0, 0], sizes = [8, 128], strides = [1, 1]} : vector<8x192xf32> to vector<8x128xf32>
    %164 = vector.extract_strided_slice %162 {offsets = [0, 0], sizes = [8, 128], strides = [1, 1]} : vector<8x192xf32> to vector<8x128xf32>
    %165 = arith.addf %163, %164 : vector<8x128xf32>
    %166 = arith.negf %165 : vector<8x128xf32>
    %167 = math.exp %166 : vector<8x128xf32>
    %cst_66 = arith.constant 1.000000e+00 : f32
    %168 = vector.broadcast %cst_66 : f32 to vector<8x128xf32>
    %169 = arith.addf %168, %167 : vector<8x128xf32>
    %170 = arith.divf %168, %169 : vector<8x128xf32>
    %171 = vector.extract_strided_slice %170 {offsets = [0, 0], sizes = [8, 64], strides = [1, 1]} : vector<8x128xf32> to vector<8x64xf32>
    %172 = vector.extract_strided_slice %170 {offsets = [0, 64], sizes = [8, 64], strides = [1, 1]} : vector<8x128xf32> to vector<8x64xf32>
    %173 = vector.extract_strided_slice %160 {offsets = [0, 128], sizes = [8, 64], strides = [1, 1]} : vector<8x192xf32> to vector<8x64xf32>
    %174 = vector.extract_strided_slice %162 {offsets = [0, 128], sizes = [8, 64], strides = [1, 1]} : vector<8x192xf32> to vector<8x64xf32>
    %175 = arith.addf %174, %28 : vector<8x64xf32>
    %176 = arith.mulf %171, %175 : vector<8x64xf32>
    %177 = arith.addf %173, %176 : vector<8x64xf32>
    %178 = math.tanh %177 : vector<8x64xf32>
    %cst_67 = arith.constant 1.000000e+00 : f32
    %179 = vector.broadcast %cst_67 : f32 to vector<8x64xf32>
    %180 = arith.subf %179, %172 : vector<8x64xf32>
    %181 = arith.mulf %180, %178 : vector<8x64xf32>
    %182 = arith.mulf %172, %157 : vector<8x64xf32>
    %183 = arith.addf %181, %182 : vector<8x64xf32>
    %c40_68 = arith.constant 40 : index
    %c0_69 = arith.constant 0 : index
    %184 = vector.load %arg19[%c40_68, %c0_69] : memref<64x64xf32, #tpu.memory_space<vmem>>, vector<8x64xf32>
    tpu.vector_store %arg19[%c40_68, %c0_69], %183 {strides = array<i32>} : memref<64x64xf32, #tpu.memory_space<vmem>>, vector<8x64xf32>,
    %c16_70 = arith.constant 16 : index
    %c0_71 = arith.constant 0 : index
    %185 = vector.load %arg20[%c16_70, %c0_71] : memref<64x64xf32, #tpu.memory_space<vmem>>, vector<8x64xf32>
    tpu.vector_store %arg20[%c16_70, %c0_71], %183 {strides = array<i32>} : memref<64x64xf32, #tpu.memory_space<vmem>>, vector<8x64xf32>,
    %c48_72 = arith.constant 48 : index
    %c0_73 = arith.constant 0 : index
    %186 = vector.load %arg18[%c48_72, %c0_73] : memref<64x192xf32, #tpu.memory_space<vmem>>, vector<8x192xf32>
    %187 = arith.truncf %183 : vector<8x64xf32> to vector<8x64xbf16>
    %cst_74 = arith.constant dense<0.000000e+00> : vector<8x192xf32>
    %188 = tpu.matmul %187, %25, %cst_74 {dimension_numbers = #tpu.dot_dimension_numbers<[1], [0], [0], [1], [0, 0, 1, 1], [], []>} : vector<8x64xbf16>, vector<64x192xbf16>, vector<8x192xf32> -> vector<8x192xf32>
    %189 = vector.extract_strided_slice %186 {offsets = [0, 0], sizes = [8, 128], strides = [1, 1]} : vector<8x192xf32> to vector<8x128xf32>
    %190 = vector.extract_strided_slice %188 {offsets = [0, 0], sizes = [8, 128], strides = [1, 1]} : vector<8x192xf32> to vector<8x128xf32>
    %191 = arith.addf %189, %190 : vector<8x128xf32>
    %192 = arith.negf %191 : vector<8x128xf32>
    %193 = math.exp %192 : vector<8x128xf32>
    %cst_75 = arith.constant 1.000000e+00 : f32
    %194 = vector.broadcast %cst_75 : f32 to vector<8x128xf32>
    %195 = arith.addf %194, %193 : vector<8x128xf32>
    %196 = arith.divf %194, %195 : vector<8x128xf32>
    %197 = vector.extract_strided_slice %196 {offsets = [0, 0], sizes = [8, 64], strides = [1, 1]} : vector<8x128xf32> to vector<8x64xf32>
    %198 = vector.extract_strided_slice %196 {offsets = [0, 64], sizes = [8, 64], strides = [1, 1]} : vector<8x128xf32> to vector<8x64xf32>
    %199 = vector.extract_strided_slice %186 {offsets = [0, 128], sizes = [8, 64], strides = [1, 1]} : vector<8x192xf32> to vector<8x64xf32>
    %200 = vector.extract_strided_slice %188 {offsets = [0, 128], sizes = [8, 64], strides = [1, 1]} : vector<8x192xf32> to vector<8x64xf32>
    %201 = arith.addf %200, %28 : vector<8x64xf32>
    %202 = arith.mulf %197, %201 : vector<8x64xf32>
    %203 = arith.addf %199, %202 : vector<8x64xf32>
    %204 = math.tanh %203 : vector<8x64xf32>
    %cst_76 = arith.constant 1.000000e+00 : f32
    %205 = vector.broadcast %cst_76 : f32 to vector<8x64xf32>
    %206 = arith.subf %205, %198 : vector<8x64xf32>
    %207 = arith.mulf %206, %204 : vector<8x64xf32>
    %208 = arith.mulf %198, %183 : vector<8x64xf32>
    %209 = arith.addf %207, %208 : vector<8x64xf32>
    %c48_77 = arith.constant 48 : index
    %c0_78 = arith.constant 0 : index
    %210 = vector.load %arg19[%c48_77, %c0_78] : memref<64x64xf32, #tpu.memory_space<vmem>>, vector<8x64xf32>
    tpu.vector_store %arg19[%c48_77, %c0_78], %209 {strides = array<i32>} : memref<64x64xf32, #tpu.memory_space<vmem>>, vector<8x64xf32>,
    %c8_79 = arith.constant 8 : index
    %c0_80 = arith.constant 0 : index
    %211 = vector.load %arg20[%c8_79, %c0_80] : memref<64x64xf32, #tpu.memory_space<vmem>>, vector<8x64xf32>
    tpu.vector_store %arg20[%c8_79, %c0_80], %209 {strides = array<i32>} : memref<64x64xf32, #tpu.memory_space<vmem>>, vector<8x64xf32>,
    %c56_81 = arith.constant 56 : index
    %c0_82 = arith.constant 0 : index
    %212 = vector.load %arg18[%c56_81, %c0_82] : memref<64x192xf32, #tpu.memory_space<vmem>>, vector<8x192xf32>
    %213 = arith.truncf %209 : vector<8x64xf32> to vector<8x64xbf16>
    %cst_83 = arith.constant dense<0.000000e+00> : vector<8x192xf32>
    %214 = tpu.matmul %213, %25, %cst_83 {dimension_numbers = #tpu.dot_dimension_numbers<[1], [0], [0], [1], [0, 0, 1, 1], [], []>} : vector<8x64xbf16>, vector<64x192xbf16>, vector<8x192xf32> -> vector<8x192xf32>
    %215 = vector.extract_strided_slice %212 {offsets = [0, 0], sizes = [8, 128], strides = [1, 1]} : vector<8x192xf32> to vector<8x128xf32>
    %216 = vector.extract_strided_slice %214 {offsets = [0, 0], sizes = [8, 128], strides = [1, 1]} : vector<8x192xf32> to vector<8x128xf32>
    %217 = arith.addf %215, %216 : vector<8x128xf32>
    %218 = arith.negf %217 : vector<8x128xf32>
    %219 = math.exp %218 : vector<8x128xf32>
    %cst_84 = arith.constant 1.000000e+00 : f32
    %220 = vector.broadcast %cst_84 : f32 to vector<8x128xf32>
    %221 = arith.addf %220, %219 : vector<8x128xf32>
    %222 = arith.divf %220, %221 : vector<8x128xf32>
    %223 = vector.extract_strided_slice %222 {offsets = [0, 0], sizes = [8, 64], strides = [1, 1]} : vector<8x128xf32> to vector<8x64xf32>
    %224 = vector.extract_strided_slice %222 {offsets = [0, 64], sizes = [8, 64], strides = [1, 1]} : vector<8x128xf32> to vector<8x64xf32>
    %225 = vector.extract_strided_slice %212 {offsets = [0, 128], sizes = [8, 64], strides = [1, 1]} : vector<8x192xf32> to vector<8x64xf32>
    %226 = vector.extract_strided_slice %214 {offsets = [0, 128], sizes = [8, 64], strides = [1, 1]} : vector<8x192xf32> to vector<8x64xf32>
    %227 = arith.addf %226, %28 : vector<8x64xf32>
    %228 = arith.mulf %223, %227 : vector<8x64xf32>
    %229 = arith.addf %225, %228 : vector<8x64xf32>
    %230 = math.tanh %229 : vector<8x64xf32>
    %cst_85 = arith.constant 1.000000e+00 : f32
    %231 = vector.broadcast %cst_85 : f32 to vector<8x64xf32>
    %232 = arith.subf %231, %224 : vector<8x64xf32>
    %233 = arith.mulf %232, %230 : vector<8x64xf32>
    %234 = arith.mulf %224, %209 : vector<8x64xf32>
    %235 = arith.addf %233, %234 : vector<8x64xf32>
    %c56_86 = arith.constant 56 : index
    %c0_87 = arith.constant 0 : index
    %236 = vector.load %arg19[%c56_86, %c0_87] : memref<64x64xf32, #tpu.memory_space<vmem>>, vector<8x64xf32>
    tpu.vector_store %arg19[%c56_86, %c0_87], %235 {strides = array<i32>} : memref<64x64xf32, #tpu.memory_space<vmem>>, vector<8x64xf32>,
    %c0_88 = arith.constant 0 : index
    %c0_89 = arith.constant 0 : index
    %237 = vector.load %arg20[%c0_88, %c0_89] : memref<64x64xf32, #tpu.memory_space<vmem>>, vector<8x64xf32>
    tpu.vector_store %arg20[%c0_88, %c0_89], %235 {strides = array<i32>} : memref<64x64xf32, #tpu.memory_space<vmem>>, vector<8x64xf32>,
    %c0_90 = arith.constant 0 : index
    %c0_91 = arith.constant 0 : index
    %238 = vector.load %arg19[%c0_90, %c0_91] : memref<64x64xf32, #tpu.memory_space<vmem>>, vector<64x64xf32>
    %239 = arith.truncf %238 : vector<64x64xf32> to vector<64x64xbf16>
    %c0_92 = arith.constant 0 : index
    %c0_93 = arith.constant 0 : index
    %240 = vector.load %arg20[%c0_92, %c0_93] : memref<64x64xf32, #tpu.memory_space<vmem>>, vector<64x64xf32>
    %241 = arith.truncf %240 : vector<64x64xf32> to vector<64x64xbf16>
    %c0_94 = arith.constant 0 : index
    %c0_95 = arith.constant 0 : index
    %242 = vector.load %arg10[%c0_94, %c0_95] : memref<64x192xbf16, #tpu.memory_space<vmem>>, vector<64x192xbf16>
    %cst_96 = arith.constant dense<0.000000e+00> : vector<64x192xf32>
    %243 = tpu.matmul %239, %242, %cst_96 {dimension_numbers = #tpu.dot_dimension_numbers<[1], [0], [0], [1], [0, 0, 1, 1], [], []>} : vector<64x64xbf16>, vector<64x192xbf16>, vector<64x192xf32> -> vector<64x192xf32>
    %c0_97 = arith.constant 0 : index
    %c0_98 = arith.constant 0 : index
    %244 = vector.load %arg11[%c0_97, %c0_98] : memref<64x192xbf16, #tpu.memory_space<vmem>>, vector<64x192xbf16>
    %cst_99 = arith.constant dense<0.000000e+00> : vector<64x192xf32>
    %245 = tpu.matmul %241, %244, %cst_99 {dimension_numbers = #tpu.dot_dimension_numbers<[1], [0], [0], [1], [0, 0, 1, 1], [], []>} : vector<64x64xbf16>, vector<64x192xbf16>, vector<64x192xf32> -> vector<64x192xf32>
    %246 = arith.addf %243, %245 : vector<64x192xf32>
    %c0_100 = arith.constant 0 : index
    %c0_101 = arith.constant 0 : index
    %247 = vector.load %arg12[%c0_100, %c0_101] : memref<1x192xf32, #tpu.memory_space<vmem>>, vector<1x192xf32>
    %248 = vector.broadcast %247 : vector<1x192xf32> to vector<64x192xf32>
    %249 = arith.addf %246, %248 : vector<64x192xf32>
    %c0_102 = arith.constant 0 : index
    %c0_103 = arith.constant 0 : index
    %250 = vector.load %arg18[%c0_102, %c0_103] : memref<64x192xf32, #tpu.memory_space<vmem>>, vector<64x192xf32>
    tpu.vector_store %arg18[%c0_102, %c0_103], %249 {strides = array<i32>} : memref<64x192xf32, #tpu.memory_space<vmem>>, vector<64x192xf32>,
    %c0_104 = arith.constant 0 : index
    %c0_105 = arith.constant 0 : index
    %251 = vector.load %arg13[%c0_104, %c0_105] : memref<64x192xbf16, #tpu.memory_space<vmem>>, vector<64x192xbf16>
    %c0_106 = arith.constant 0 : index
    %c0_107 = arith.constant 0 : index
    %252 = vector.load %arg14[%c0_106, %c0_107] : memref<1x64xf32, #tpu.memory_space<vmem>>, vector<1x64xf32>
    %253 = vector.shape_cast %252 : vector<1x64xf32> to vector<1x64xf32>
    %254 = vector.broadcast %253 : vector<1x64xf32> to vector<8x64xf32>
    %cst_108 = arith.constant 0.000000e+00 : f32
    %255 = vector.broadcast %cst_108 : f32 to vector<8x64xf32>
    %c0_109 = arith.constant 0 : index
    %c0_110 = arith.constant 0 : index
    %256 = vector.load %arg18[%c0_109, %c0_110] : memref<64x192xf32, #tpu.memory_space<vmem>>, vector<8x192xf32>
    %257 = arith.truncf %255 : vector<8x64xf32> to vector<8x64xbf16>
    %cst_111 = arith.constant dense<0.000000e+00> : vector<8x192xf32>
    %258 = tpu.matmul %257, %251, %cst_111 {dimension_numbers = #tpu.dot_dimension_numbers<[1], [0], [0], [1], [0, 0, 1, 1], [], []>} : vector<8x64xbf16>, vector<64x192xbf16>, vector<8x192xf32> -> vector<8x192xf32>
    %259 = vector.extract_strided_slice %256 {offsets = [0, 0], sizes = [8, 128], strides = [1, 1]} : vector<8x192xf32> to vector<8x128xf32>
    %260 = vector.extract_strided_slice %258 {offsets = [0, 0], sizes = [8, 128], strides = [1, 1]} : vector<8x192xf32> to vector<8x128xf32>
    %261 = arith.addf %259, %260 : vector<8x128xf32>
    %262 = arith.negf %261 : vector<8x128xf32>
    %263 = math.exp %262 : vector<8x128xf32>
    %cst_112 = arith.constant 1.000000e+00 : f32
    %264 = vector.broadcast %cst_112 : f32 to vector<8x128xf32>
    %265 = arith.addf %264, %263 : vector<8x128xf32>
    %266 = arith.divf %264, %265 : vector<8x128xf32>
    %267 = vector.extract_strided_slice %266 {offsets = [0, 0], sizes = [8, 64], strides = [1, 1]} : vector<8x128xf32> to vector<8x64xf32>
    %268 = vector.extract_strided_slice %266 {offsets = [0, 64], sizes = [8, 64], strides = [1, 1]} : vector<8x128xf32> to vector<8x64xf32>
    %269 = vector.extract_strided_slice %256 {offsets = [0, 128], sizes = [8, 64], strides = [1, 1]} : vector<8x192xf32> to vector<8x64xf32>
    %270 = vector.extract_strided_slice %258 {offsets = [0, 128], sizes = [8, 64], strides = [1, 1]} : vector<8x192xf32> to vector<8x64xf32>
    %271 = arith.addf %270, %254 : vector<8x64xf32>
    %272 = arith.mulf %267, %271 : vector<8x64xf32>
    %273 = arith.addf %269, %272 : vector<8x64xf32>
    %274 = math.tanh %273 : vector<8x64xf32>
    %cst_113 = arith.constant 1.000000e+00 : f32
    %275 = vector.broadcast %cst_113 : f32 to vector<8x64xf32>
    %276 = arith.subf %275, %268 : vector<8x64xf32>
    %277 = arith.mulf %276, %274 : vector<8x64xf32>
    %278 = arith.mulf %268, %255 : vector<8x64xf32>
    %279 = arith.addf %277, %278 : vector<8x64xf32>
    %c0_114 = arith.constant 0 : index
    %c0_115 = arith.constant 0 : index
    %280 = vector.load %arg19[%c0_114, %c0_115] : memref<64x64xf32, #tpu.memory_space<vmem>>, vector<8x64xf32>
    tpu.vector_store %arg19[%c0_114, %c0_115], %279 {strides = array<i32>} : memref<64x64xf32, #tpu.memory_space<vmem>>, vector<8x64xf32>,
    %c56_116 = arith.constant 56 : index
    %c0_117 = arith.constant 0 : index
    %281 = vector.load %arg20[%c56_116, %c0_117] : memref<64x64xf32, #tpu.memory_space<vmem>>, vector<8x64xf32>
    tpu.vector_store %arg20[%c56_116, %c0_117], %279 {strides = array<i32>} : memref<64x64xf32, #tpu.memory_space<vmem>>, vector<8x64xf32>,
    %c8_118 = arith.constant 8 : index
    %c0_119 = arith.constant 0 : index
    %282 = vector.load %arg18[%c8_118, %c0_119] : memref<64x192xf32, #tpu.memory_space<vmem>>, vector<8x192xf32>
    %283 = arith.truncf %279 : vector<8x64xf32> to vector<8x64xbf16>
    %cst_120 = arith.constant dense<0.000000e+00> : vector<8x192xf32>
    %284 = tpu.matmul %283, %251, %cst_120 {dimension_numbers = #tpu.dot_dimension_numbers<[1], [0], [0], [1], [0, 0, 1, 1], [], []>} : vector<8x64xbf16>, vector<64x192xbf16>, vector<8x192xf32> -> vector<8x192xf32>
    %285 = vector.extract_strided_slice %282 {offsets = [0, 0], sizes = [8, 128], strides = [1, 1]} : vector<8x192xf32> to vector<8x128xf32>
    %286 = vector.extract_strided_slice %284 {offsets = [0, 0], sizes = [8, 128], strides = [1, 1]} : vector<8x192xf32> to vector<8x128xf32>
    %287 = arith.addf %285, %286 : vector<8x128xf32>
    %288 = arith.negf %287 : vector<8x128xf32>
    %289 = math.exp %288 : vector<8x128xf32>
    %cst_121 = arith.constant 1.000000e+00 : f32
    %290 = vector.broadcast %cst_121 : f32 to vector<8x128xf32>
    %291 = arith.addf %290, %289 : vector<8x128xf32>
    %292 = arith.divf %290, %291 : vector<8x128xf32>
    %293 = vector.extract_strided_slice %292 {offsets = [0, 0], sizes = [8, 64], strides = [1, 1]} : vector<8x128xf32> to vector<8x64xf32>
    %294 = vector.extract_strided_slice %292 {offsets = [0, 64], sizes = [8, 64], strides = [1, 1]} : vector<8x128xf32> to vector<8x64xf32>
    %295 = vector.extract_strided_slice %282 {offsets = [0, 128], sizes = [8, 64], strides = [1, 1]} : vector<8x192xf32> to vector<8x64xf32>
    %296 = vector.extract_strided_slice %284 {offsets = [0, 128], sizes = [8, 64], strides = [1, 1]} : vector<8x192xf32> to vector<8x64xf32>
    %297 = arith.addf %296, %254 : vector<8x64xf32>
    %298 = arith.mulf %293, %297 : vector<8x64xf32>
    %299 = arith.addf %295, %298 : vector<8x64xf32>
    %300 = math.tanh %299 : vector<8x64xf32>
    %cst_122 = arith.constant 1.000000e+00 : f32
    %301 = vector.broadcast %cst_122 : f32 to vector<8x64xf32>
    %302 = arith.subf %301, %294 : vector<8x64xf32>
    %303 = arith.mulf %302, %300 : vector<8x64xf32>
    %304 = arith.mulf %294, %279 : vector<8x64xf32>
    %305 = arith.addf %303, %304 : vector<8x64xf32>
    %c8_123 = arith.constant 8 : index
    %c0_124 = arith.constant 0 : index
    %306 = vector.load %arg19[%c8_123, %c0_124] : memref<64x64xf32, #tpu.memory_space<vmem>>, vector<8x64xf32>
    tpu.vector_store %arg19[%c8_123, %c0_124], %305 {strides = array<i32>} : memref<64x64xf32, #tpu.memory_space<vmem>>, vector<8x64xf32>,
    %c48_125 = arith.constant 48 : index
    %c0_126 = arith.constant 0 : index
    %307 = vector.load %arg20[%c48_125, %c0_126] : memref<64x64xf32, #tpu.memory_space<vmem>>, vector<8x64xf32>
    tpu.vector_store %arg20[%c48_125, %c0_126], %305 {strides = array<i32>} : memref<64x64xf32, #tpu.memory_space<vmem>>, vector<8x64xf32>,
    %c16_127 = arith.constant 16 : index
    %c0_128 = arith.constant 0 : index
    %308 = vector.load %arg18[%c16_127, %c0_128] : memref<64x192xf32, #tpu.memory_space<vmem>>, vector<8x192xf32>
    %309 = arith.truncf %305 : vector<8x64xf32> to vector<8x64xbf16>
    %cst_129 = arith.constant dense<0.000000e+00> : vector<8x192xf32>
    %310 = tpu.matmul %309, %251, %cst_129 {dimension_numbers = #tpu.dot_dimension_numbers<[1], [0], [0], [1], [0, 0, 1, 1], [], []>} : vector<8x64xbf16>, vector<64x192xbf16>, vector<8x192xf32> -> vector<8x192xf32>
    %311 = vector.extract_strided_slice %308 {offsets = [0, 0], sizes = [8, 128], strides = [1, 1]} : vector<8x192xf32> to vector<8x128xf32>
    %312 = vector.extract_strided_slice %310 {offsets = [0, 0], sizes = [8, 128], strides = [1, 1]} : vector<8x192xf32> to vector<8x128xf32>
    %313 = arith.addf %311, %312 : vector<8x128xf32>
    %314 = arith.negf %313 : vector<8x128xf32>
    %315 = math.exp %314 : vector<8x128xf32>
    %cst_130 = arith.constant 1.000000e+00 : f32
    %316 = vector.broadcast %cst_130 : f32 to vector<8x128xf32>
    %317 = arith.addf %316, %315 : vector<8x128xf32>
    %318 = arith.divf %316, %317 : vector<8x128xf32>
    %319 = vector.extract_strided_slice %318 {offsets = [0, 0], sizes = [8, 64], strides = [1, 1]} : vector<8x128xf32> to vector<8x64xf32>
    %320 = vector.extract_strided_slice %318 {offsets = [0, 64], sizes = [8, 64], strides = [1, 1]} : vector<8x128xf32> to vector<8x64xf32>
    %321 = vector.extract_strided_slice %308 {offsets = [0, 128], sizes = [8, 64], strides = [1, 1]} : vector<8x192xf32> to vector<8x64xf32>
    %322 = vector.extract_strided_slice %310 {offsets = [0, 128], sizes = [8, 64], strides = [1, 1]} : vector<8x192xf32> to vector<8x64xf32>
    %323 = arith.addf %322, %254 : vector<8x64xf32>
    %324 = arith.mulf %319, %323 : vector<8x64xf32>
    %325 = arith.addf %321, %324 : vector<8x64xf32>
    %326 = math.tanh %325 : vector<8x64xf32>
    %cst_131 = arith.constant 1.000000e+00 : f32
    %327 = vector.broadcast %cst_131 : f32 to vector<8x64xf32>
    %328 = arith.subf %327, %320 : vector<8x64xf32>
    %329 = arith.mulf %328, %326 : vector<8x64xf32>
    %330 = arith.mulf %320, %305 : vector<8x64xf32>
    %331 = arith.addf %329, %330 : vector<8x64xf32>
    %c16_132 = arith.constant 16 : index
    %c0_133 = arith.constant 0 : index
    %332 = vector.load %arg19[%c16_132, %c0_133] : memref<64x64xf32, #tpu.memory_space<vmem>>, vector<8x64xf32>
    tpu.vector_store %arg19[%c16_132, %c0_133], %331 {strides = array<i32>} : memref<64x64xf32, #tpu.memory_space<vmem>>, vector<8x64xf32>,
    %c40_134 = arith.constant 40 : index
    %c0_135 = arith.constant 0 : index
    %333 = vector.load %arg20[%c40_134, %c0_135] : memref<64x64xf32, #tpu.memory_space<vmem>>, vector<8x64xf32>
    tpu.vector_store %arg20[%c40_134, %c0_135], %331 {strides = array<i32>} : memref<64x64xf32, #tpu.memory_space<vmem>>, vector<8x64xf32>,
    %c24_136 = arith.constant 24 : index
    %c0_137 = arith.constant 0 : index
    %334 = vector.load %arg18[%c24_136, %c0_137] : memref<64x192xf32, #tpu.memory_space<vmem>>, vector<8x192xf32>
    %335 = arith.truncf %331 : vector<8x64xf32> to vector<8x64xbf16>
    %cst_138 = arith.constant dense<0.000000e+00> : vector<8x192xf32>
    %336 = tpu.matmul %335, %251, %cst_138 {dimension_numbers = #tpu.dot_dimension_numbers<[1], [0], [0], [1], [0, 0, 1, 1], [], []>} : vector<8x64xbf16>, vector<64x192xbf16>, vector<8x192xf32> -> vector<8x192xf32>
    %337 = vector.extract_strided_slice %334 {offsets = [0, 0], sizes = [8, 128], strides = [1, 1]} : vector<8x192xf32> to vector<8x128xf32>
    %338 = vector.extract_strided_slice %336 {offsets = [0, 0], sizes = [8, 128], strides = [1, 1]} : vector<8x192xf32> to vector<8x128xf32>
    %339 = arith.addf %337, %338 : vector<8x128xf32>
    %340 = arith.negf %339 : vector<8x128xf32>
    %341 = math.exp %340 : vector<8x128xf32>
    %cst_139 = arith.constant 1.000000e+00 : f32
    %342 = vector.broadcast %cst_139 : f32 to vector<8x128xf32>
    %343 = arith.addf %342, %341 : vector<8x128xf32>
    %344 = arith.divf %342, %343 : vector<8x128xf32>
    %345 = vector.extract_strided_slice %344 {offsets = [0, 0], sizes = [8, 64], strides = [1, 1]} : vector<8x128xf32> to vector<8x64xf32>
    %346 = vector.extract_strided_slice %344 {offsets = [0, 64], sizes = [8, 64], strides = [1, 1]} : vector<8x128xf32> to vector<8x64xf32>
    %347 = vector.extract_strided_slice %334 {offsets = [0, 128], sizes = [8, 64], strides = [1, 1]} : vector<8x192xf32> to vector<8x64xf32>
    %348 = vector.extract_strided_slice %336 {offsets = [0, 128], sizes = [8, 64], strides = [1, 1]} : vector<8x192xf32> to vector<8x64xf32>
    %349 = arith.addf %348, %254 : vector<8x64xf32>
    %350 = arith.mulf %345, %349 : vector<8x64xf32>
    %351 = arith.addf %347, %350 : vector<8x64xf32>
    %352 = math.tanh %351 : vector<8x64xf32>
    %cst_140 = arith.constant 1.000000e+00 : f32
    %353 = vector.broadcast %cst_140 : f32 to vector<8x64xf32>
    %354 = arith.subf %353, %346 : vector<8x64xf32>
    %355 = arith.mulf %354, %352 : vector<8x64xf32>
    %356 = arith.mulf %346, %331 : vector<8x64xf32>
    %357 = arith.addf %355, %356 : vector<8x64xf32>
    %c24_141 = arith.constant 24 : index
    %c0_142 = arith.constant 0 : index
    %358 = vector.load %arg19[%c24_141, %c0_142] : memref<64x64xf32, #tpu.memory_space<vmem>>, vector<8x64xf32>
    tpu.vector_store %arg19[%c24_141, %c0_142], %357 {strides = array<i32>} : memref<64x64xf32, #tpu.memory_space<vmem>>, vector<8x64xf32>,
    %c32_143 = arith.constant 32 : index
    %c0_144 = arith.constant 0 : index
    %359 = vector.load %arg20[%c32_143, %c0_144] : memref<64x64xf32, #tpu.memory_space<vmem>>, vector<8x64xf32>
    tpu.vector_store %arg20[%c32_143, %c0_144], %357 {strides = array<i32>} : memref<64x64xf32, #tpu.memory_space<vmem>>, vector<8x64xf32>,
    %c32_145 = arith.constant 32 : index
    %c0_146 = arith.constant 0 : index
    %360 = vector.load %arg18[%c32_145, %c0_146] : memref<64x192xf32, #tpu.memory_space<vmem>>, vector<8x192xf32>
    %361 = arith.truncf %357 : vector<8x64xf32> to vector<8x64xbf16>
    %cst_147 = arith.constant dense<0.000000e+00> : vector<8x192xf32>
    %362 = tpu.matmul %361, %251, %cst_147 {dimension_numbers = #tpu.dot_dimension_numbers<[1], [0], [0], [1], [0, 0, 1, 1], [], []>} : vector<8x64xbf16>, vector<64x192xbf16>, vector<8x192xf32> -> vector<8x192xf32>
    %363 = vector.extract_strided_slice %360 {offsets = [0, 0], sizes = [8, 128], strides = [1, 1]} : vector<8x192xf32> to vector<8x128xf32>
    %364 = vector.extract_strided_slice %362 {offsets = [0, 0], sizes = [8, 128], strides = [1, 1]} : vector<8x192xf32> to vector<8x128xf32>
    %365 = arith.addf %363, %364 : vector<8x128xf32>
    %366 = arith.negf %365 : vector<8x128xf32>
    %367 = math.exp %366 : vector<8x128xf32>
    %cst_148 = arith.constant 1.000000e+00 : f32
    %368 = vector.broadcast %cst_148 : f32 to vector<8x128xf32>
    %369 = arith.addf %368, %367 : vector<8x128xf32>
    %370 = arith.divf %368, %369 : vector<8x128xf32>
    %371 = vector.extract_strided_slice %370 {offsets = [0, 0], sizes = [8, 64], strides = [1, 1]} : vector<8x128xf32> to vector<8x64xf32>
    %372 = vector.extract_strided_slice %370 {offsets = [0, 64], sizes = [8, 64], strides = [1, 1]} : vector<8x128xf32> to vector<8x64xf32>
    %373 = vector.extract_strided_slice %360 {offsets = [0, 128], sizes = [8, 64], strides = [1, 1]} : vector<8x192xf32> to vector<8x64xf32>
    %374 = vector.extract_strided_slice %362 {offsets = [0, 128], sizes = [8, 64], strides = [1, 1]} : vector<8x192xf32> to vector<8x64xf32>
    %375 = arith.addf %374, %254 : vector<8x64xf32>
    %376 = arith.mulf %371, %375 : vector<8x64xf32>
    %377 = arith.addf %373, %376 : vector<8x64xf32>
    %378 = math.tanh %377 : vector<8x64xf32>
    %cst_149 = arith.constant 1.000000e+00 : f32
    %379 = vector.broadcast %cst_149 : f32 to vector<8x64xf32>
    %380 = arith.subf %379, %372 : vector<8x64xf32>
    %381 = arith.mulf %380, %378 : vector<8x64xf32>
    %382 = arith.mulf %372, %357 : vector<8x64xf32>
    %383 = arith.addf %381, %382 : vector<8x64xf32>
    %c32_150 = arith.constant 32 : index
    %c0_151 = arith.constant 0 : index
    %384 = vector.load %arg19[%c32_150, %c0_151] : memref<64x64xf32, #tpu.memory_space<vmem>>, vector<8x64xf32>
    tpu.vector_store %arg19[%c32_150, %c0_151], %383 {strides = array<i32>} : memref<64x64xf32, #tpu.memory_space<vmem>>, vector<8x64xf32>,
    %c24_152 = arith.constant 24 : index
    %c0_153 = arith.constant 0 : index
    %385 = vector.load %arg20[%c24_152, %c0_153] : memref<64x64xf32, #tpu.memory_space<vmem>>, vector<8x64xf32>
    tpu.vector_store %arg20[%c24_152, %c0_153], %383 {strides = array<i32>} : memref<64x64xf32, #tpu.memory_space<vmem>>, vector<8x64xf32>,
    %c40_154 = arith.constant 40 : index
    %c0_155 = arith.constant 0 : index
    %386 = vector.load %arg18[%c40_154, %c0_155] : memref<64x192xf32, #tpu.memory_space<vmem>>, vector<8x192xf32>
    %387 = arith.truncf %383 : vector<8x64xf32> to vector<8x64xbf16>
    %cst_156 = arith.constant dense<0.000000e+00> : vector<8x192xf32>
    %388 = tpu.matmul %387, %251, %cst_156 {dimension_numbers = #tpu.dot_dimension_numbers<[1], [0], [0], [1], [0, 0, 1, 1], [], []>} : vector<8x64xbf16>, vector<64x192xbf16>, vector<8x192xf32> -> vector<8x192xf32>
    %389 = vector.extract_strided_slice %386 {offsets = [0, 0], sizes = [8, 128], strides = [1, 1]} : vector<8x192xf32> to vector<8x128xf32>
    %390 = vector.extract_strided_slice %388 {offsets = [0, 0], sizes = [8, 128], strides = [1, 1]} : vector<8x192xf32> to vector<8x128xf32>
    %391 = arith.addf %389, %390 : vector<8x128xf32>
    %392 = arith.negf %391 : vector<8x128xf32>
    %393 = math.exp %392 : vector<8x128xf32>
    %cst_157 = arith.constant 1.000000e+00 : f32
    %394 = vector.broadcast %cst_157 : f32 to vector<8x128xf32>
    %395 = arith.addf %394, %393 : vector<8x128xf32>
    %396 = arith.divf %394, %395 : vector<8x128xf32>
    %397 = vector.extract_strided_slice %396 {offsets = [0, 0], sizes = [8, 64], strides = [1, 1]} : vector<8x128xf32> to vector<8x64xf32>
    %398 = vector.extract_strided_slice %396 {offsets = [0, 64], sizes = [8, 64], strides = [1, 1]} : vector<8x128xf32> to vector<8x64xf32>
    %399 = vector.extract_strided_slice %386 {offsets = [0, 128], sizes = [8, 64], strides = [1, 1]} : vector<8x192xf32> to vector<8x64xf32>
    %400 = vector.extract_strided_slice %388 {offsets = [0, 128], sizes = [8, 64], strides = [1, 1]} : vector<8x192xf32> to vector<8x64xf32>
    %401 = arith.addf %400, %254 : vector<8x64xf32>
    %402 = arith.mulf %397, %401 : vector<8x64xf32>
    %403 = arith.addf %399, %402 : vector<8x64xf32>
    %404 = math.tanh %403 : vector<8x64xf32>
    %cst_158 = arith.constant 1.000000e+00 : f32
    %405 = vector.broadcast %cst_158 : f32 to vector<8x64xf32>
    %406 = arith.subf %405, %398 : vector<8x64xf32>
    %407 = arith.mulf %406, %404 : vector<8x64xf32>
    %408 = arith.mulf %398, %383 : vector<8x64xf32>
    %409 = arith.addf %407, %408 : vector<8x64xf32>
    %c40_159 = arith.constant 40 : index
    %c0_160 = arith.constant 0 : index
    %410 = vector.load %arg19[%c40_159, %c0_160] : memref<64x64xf32, #tpu.memory_space<vmem>>, vector<8x64xf32>
    tpu.vector_store %arg19[%c40_159, %c0_160], %409 {strides = array<i32>} : memref<64x64xf32, #tpu.memory_space<vmem>>, vector<8x64xf32>,
    %c16_161 = arith.constant 16 : index
    %c0_162 = arith.constant 0 : index
    %411 = vector.load %arg20[%c16_161, %c0_162] : memref<64x64xf32, #tpu.memory_space<vmem>>, vector<8x64xf32>
    tpu.vector_store %arg20[%c16_161, %c0_162], %409 {strides = array<i32>} : memref<64x64xf32, #tpu.memory_space<vmem>>, vector<8x64xf32>,
    %c48_163 = arith.constant 48 : index
    %c0_164 = arith.constant 0 : index
    %412 = vector.load %arg18[%c48_163, %c0_164] : memref<64x192xf32, #tpu.memory_space<vmem>>, vector<8x192xf32>
    %413 = arith.truncf %409 : vector<8x64xf32> to vector<8x64xbf16>
    %cst_165 = arith.constant dense<0.000000e+00> : vector<8x192xf32>
    %414 = tpu.matmul %413, %251, %cst_165 {dimension_numbers = #tpu.dot_dimension_numbers<[1], [0], [0], [1], [0, 0, 1, 1], [], []>} : vector<8x64xbf16>, vector<64x192xbf16>, vector<8x192xf32> -> vector<8x192xf32>
    %415 = vector.extract_strided_slice %412 {offsets = [0, 0], sizes = [8, 128], strides = [1, 1]} : vector<8x192xf32> to vector<8x128xf32>
    %416 = vector.extract_strided_slice %414 {offsets = [0, 0], sizes = [8, 128], strides = [1, 1]} : vector<8x192xf32> to vector<8x128xf32>
    %417 = arith.addf %415, %416 : vector<8x128xf32>
    %418 = arith.negf %417 : vector<8x128xf32>
    %419 = math.exp %418 : vector<8x128xf32>
    %cst_166 = arith.constant 1.000000e+00 : f32
    %420 = vector.broadcast %cst_166 : f32 to vector<8x128xf32>
    %421 = arith.addf %420, %419 : vector<8x128xf32>
    %422 = arith.divf %420, %421 : vector<8x128xf32>
    %423 = vector.extract_strided_slice %422 {offsets = [0, 0], sizes = [8, 64], strides = [1, 1]} : vector<8x128xf32> to vector<8x64xf32>
    %424 = vector.extract_strided_slice %422 {offsets = [0, 64], sizes = [8, 64], strides = [1, 1]} : vector<8x128xf32> to vector<8x64xf32>
    %425 = vector.extract_strided_slice %412 {offsets = [0, 128], sizes = [8, 64], strides = [1, 1]} : vector<8x192xf32> to vector<8x64xf32>
    %426 = vector.extract_strided_slice %414 {offsets = [0, 128], sizes = [8, 64], strides = [1, 1]} : vector<8x192xf32> to vector<8x64xf32>
    %427 = arith.addf %426, %254 : vector<8x64xf32>
    %428 = arith.mulf %423, %427 : vector<8x64xf32>
    %429 = arith.addf %425, %428 : vector<8x64xf32>
    %430 = math.tanh %429 : vector<8x64xf32>
    %cst_167 = arith.constant 1.000000e+00 : f32
    %431 = vector.broadcast %cst_167 : f32 to vector<8x64xf32>
    %432 = arith.subf %431, %424 : vector<8x64xf32>
    %433 = arith.mulf %432, %430 : vector<8x64xf32>
    %434 = arith.mulf %424, %409 : vector<8x64xf32>
    %435 = arith.addf %433, %434 : vector<8x64xf32>
    %c48_168 = arith.constant 48 : index
    %c0_169 = arith.constant 0 : index
    %436 = vector.load %arg19[%c48_168, %c0_169] : memref<64x64xf32, #tpu.memory_space<vmem>>, vector<8x64xf32>
    tpu.vector_store %arg19[%c48_168, %c0_169], %435 {strides = array<i32>} : memref<64x64xf32, #tpu.memory_space<vmem>>, vector<8x64xf32>,
    %c8_170 = arith.constant 8 : index
    %c0_171 = arith.constant 0 : index
    %437 = vector.load %arg20[%c8_170, %c0_171] : memref<64x64xf32, #tpu.memory_space<vmem>>, vector<8x64xf32>
    tpu.vector_store %arg20[%c8_170, %c0_171], %435 {strides = array<i32>} : memref<64x64xf32, #tpu.memory_space<vmem>>, vector<8x64xf32>,
    %c56_172 = arith.constant 56 : index
    %c0_173 = arith.constant 0 : index
    %438 = vector.load %arg18[%c56_172, %c0_173] : memref<64x192xf32, #tpu.memory_space<vmem>>, vector<8x192xf32>
    %439 = arith.truncf %435 : vector<8x64xf32> to vector<8x64xbf16>
    %cst_174 = arith.constant dense<0.000000e+00> : vector<8x192xf32>
    %440 = tpu.matmul %439, %251, %cst_174 {dimension_numbers = #tpu.dot_dimension_numbers<[1], [0], [0], [1], [0, 0, 1, 1], [], []>} : vector<8x64xbf16>, vector<64x192xbf16>, vector<8x192xf32> -> vector<8x192xf32>
    %441 = vector.extract_strided_slice %438 {offsets = [0, 0], sizes = [8, 128], strides = [1, 1]} : vector<8x192xf32> to vector<8x128xf32>
    %442 = vector.extract_strided_slice %440 {offsets = [0, 0], sizes = [8, 128], strides = [1, 1]} : vector<8x192xf32> to vector<8x128xf32>
    %443 = arith.addf %441, %442 : vector<8x128xf32>
    %444 = arith.negf %443 : vector<8x128xf32>
    %445 = math.exp %444 : vector<8x128xf32>
    %cst_175 = arith.constant 1.000000e+00 : f32
    %446 = vector.broadcast %cst_175 : f32 to vector<8x128xf32>
    %447 = arith.addf %446, %445 : vector<8x128xf32>
    %448 = arith.divf %446, %447 : vector<8x128xf32>
    %449 = vector.extract_strided_slice %448 {offsets = [0, 0], sizes = [8, 64], strides = [1, 1]} : vector<8x128xf32> to vector<8x64xf32>
    %450 = vector.extract_strided_slice %448 {offsets = [0, 64], sizes = [8, 64], strides = [1, 1]} : vector<8x128xf32> to vector<8x64xf32>
    %451 = vector.extract_strided_slice %438 {offsets = [0, 128], sizes = [8, 64], strides = [1, 1]} : vector<8x192xf32> to vector<8x64xf32>
    %452 = vector.extract_strided_slice %440 {offsets = [0, 128], sizes = [8, 64], strides = [1, 1]} : vector<8x192xf32> to vector<8x64xf32>
    %453 = arith.addf %452, %254 : vector<8x64xf32>
    %454 = arith.mulf %449, %453 : vector<8x64xf32>
    %455 = arith.addf %451, %454 : vector<8x64xf32>
    %456 = math.tanh %455 : vector<8x64xf32>
    %cst_176 = arith.constant 1.000000e+00 : f32
    %457 = vector.broadcast %cst_176 : f32 to vector<8x64xf32>
    %458 = arith.subf %457, %450 : vector<8x64xf32>
    %459 = arith.mulf %458, %456 : vector<8x64xf32>
    %460 = arith.mulf %450, %435 : vector<8x64xf32>
    %461 = arith.addf %459, %460 : vector<8x64xf32>
    %c56_177 = arith.constant 56 : index
    %c0_178 = arith.constant 0 : index
    %462 = vector.load %arg19[%c56_177, %c0_178] : memref<64x64xf32, #tpu.memory_space<vmem>>, vector<8x64xf32>
    tpu.vector_store %arg19[%c56_177, %c0_178], %461 {strides = array<i32>} : memref<64x64xf32, #tpu.memory_space<vmem>>, vector<8x64xf32>,
    %c0_179 = arith.constant 0 : index
    %c0_180 = arith.constant 0 : index
    %463 = vector.load %arg20[%c0_179, %c0_180] : memref<64x64xf32, #tpu.memory_space<vmem>>, vector<8x64xf32>
    tpu.vector_store %arg20[%c0_179, %c0_180], %461 {strides = array<i32>} : memref<64x64xf32, #tpu.memory_space<vmem>>, vector<8x64xf32>,
    %c0_181 = arith.constant 0 : index
    %c0_182 = arith.constant 0 : index
    %464 = vector.load %arg19[%c0_181, %c0_182] : memref<64x64xf32, #tpu.memory_space<vmem>>, vector<64x64xf32>
    %465 = arith.truncf %464 : vector<64x64xf32> to vector<64x64xbf16>
    %c0_183 = arith.constant 0 : index
    %c0_184 = arith.constant 0 : index
    %466 = vector.load %arg20[%c0_183, %c0_184] : memref<64x64xf32, #tpu.memory_space<vmem>>, vector<64x64xf32>
    %467 = arith.truncf %466 : vector<64x64xf32> to vector<64x64xbf16>
    %cst_185 = arith.constant 0.000000e+00 : bf16
    %468 = vector.broadcast %cst_185 : bf16 to vector<64x64xbf16>
    %469 = arith.maximumf %465, %468 : vector<64x64xbf16>
    %c0_186 = arith.constant 0 : index
    %c0_187 = arith.constant 0 : index
    %470 = vector.load %arg15[%c0_186, %c0_187] : memref<64x128xbf16, #tpu.memory_space<vmem>>, vector<64x128xbf16>
    %cst_188 = arith.constant dense<0.000000e+00> : vector<64x128xf32>
    %471 = tpu.matmul %469, %470, %cst_188 {dimension_numbers = #tpu.dot_dimension_numbers<[1], [0], [0], [1], [0, 0, 1, 1], [], []>} : vector<64x64xbf16>, vector<64x128xbf16>, vector<64x128xf32> -> vector<64x128xf32>
    %cst_189 = arith.constant 0.000000e+00 : bf16
    %472 = vector.broadcast %cst_189 : bf16 to vector<64x64xbf16>
    %473 = arith.maximumf %467, %472 : vector<64x64xbf16>
    %c0_190 = arith.constant 0 : index
    %c0_191 = arith.constant 0 : index
    %474 = vector.load %arg16[%c0_190, %c0_191] : memref<64x128xbf16, #tpu.memory_space<vmem>>, vector<64x128xbf16>
    %cst_192 = arith.constant dense<0.000000e+00> : vector<64x128xf32>
    %475 = tpu.matmul %473, %474, %cst_192 {dimension_numbers = #tpu.dot_dimension_numbers<[1], [0], [0], [1], [0, 0, 1, 1], [], []>} : vector<64x64xbf16>, vector<64x128xbf16>, vector<64x128xf32> -> vector<64x128xf32>
    %476 = arith.addf %471, %475 : vector<64x128xf32>
    %c0_193 = arith.constant 0 : index
    %c0_194 = arith.constant 0 : index
    %477 = vector.load %arg17[%c0_193, %c0_194] : memref<64x128xf32, #tpu.memory_space<vmem>>, vector<64x128xf32>
    tpu.vector_store %arg17[%c0_193, %c0_194], %476 {strides = array<i32>} : memref<64x128xf32, #tpu.memory_space<vmem>>, vector<64x128xf32>,
    return
  }
  func.func @transform_0(%arg0: i32) -> (i32, i32) {
    %c0_i32 = arith.constant 0 : i32
    %c0_i32_0 = arith.constant 0 : i32
    %c0_i32_1 = arith.constant 0 : i32
    return %c0_i32, %c0_i32_0 : i32, i32
  }
  func.func @transform_1(%arg0: i32) -> (i32, i32) {
    %c0_i32 = arith.constant 0 : i32
    %c0_i32_0 = arith.constant 0 : i32
    %c0_i32_1 = arith.constant 0 : i32
    return %c0_i32, %c0_i32_0 : i32, i32
  }
  func.func @transform_2(%arg0: i32) -> (i32, i32) {
    %c0_i32 = arith.constant 0 : i32
    %c0_i32_0 = arith.constant 0 : i32
    %c0_i32_1 = arith.constant 0 : i32
    return %c0_i32, %c0_i32_0 : i32, i32
  }
  func.func @transform_3(%arg0: i32) -> (i32, i32) {
    %c0_i32 = arith.constant 0 : i32
    %c0_i32_0 = arith.constant 0 : i32
    %c0_i32_1 = arith.constant 0 : i32
    return %c0_i32, %c0_i32_0 : i32, i32
  }
  func.func @transform_4(%arg0: i32) -> (i32, i32) {
    %c0_i32 = arith.constant 0 : i32
    %c0_i32_0 = arith.constant 0 : i32
    %c0_i32_1 = arith.constant 0 : i32
    return %c0_i32, %c0_i32_0 : i32, i32
  }
  func.func @transform_5(%arg0: i32) -> (i32, i32) {
    %c0_i32 = arith.constant 0 : i32
    %c0_i32_0 = arith.constant 0 : i32
    %c0_i32_1 = arith.constant 0 : i32
    return %c0_i32, %c0_i32_0 : i32, i32
  }
  func.func @transform_6(%arg0: i32) -> (i32, i32) {
    %c0_i32 = arith.constant 0 : i32
    %c0_i32_0 = arith.constant 0 : i32
    %c0_i32_1 = arith.constant 0 : i32
    return %c0_i32, %c0_i32_0 : i32, i32
  }
  func.func @transform_7(%arg0: i32) -> (i32, i32) {
    %c0_i32 = arith.constant 0 : i32
    %c0_i32_0 = arith.constant 0 : i32
    %c0_i32_1 = arith.constant 0 : i32
    return %c0_i32, %c0_i32_0 : i32, i32
  }
  func.func @transform_8(%arg0: i32) -> (i32, i32) {
    %c0_i32 = arith.constant 0 : i32
    %c0_i32_0 = arith.constant 0 : i32
    %c0_i32_1 = arith.constant 0 : i32
    return %c0_i32, %c0_i32_0 : i32, i32
  }
  func.func @transform_9(%arg0: i32) -> (i32, i32) {
    %c0_i32 = arith.constant 0 : i32
    %c0_i32_0 = arith.constant 0 : i32
    %c0_i32_1 = arith.constant 0 : i32
    return %c0_i32, %c0_i32_0 : i32, i32
  }
  func.func @transform_10(%arg0: i32) -> (i32, i32) {
    %c0_i32 = arith.constant 0 : i32
    %c0_i32_0 = arith.constant 0 : i32
    %c0_i32_1 = arith.constant 0 : i32
    return %c0_i32, %c0_i32_0 : i32, i32
  }
  func.func @transform_11(%arg0: i32) -> (i32, i32) {
    %c0_i32 = arith.constant 0 : i32
    %c0_i32_0 = arith.constant 0 : i32
    %c0_i32_1 = arith.constant 0 : i32
    return %c0_i32, %c0_i32_0 : i32, i32
  }
  func.func @transform_12(%arg0: i32) -> (i32, i32) {
    %c0_i32 = arith.constant 0 : i32
    %c0_i32_0 = arith.constant 0 : i32
    %c0_i32_1 = arith.constant 0 : i32
    return %c0_i32, %c0_i32_0 : i32, i32
  }
  func.func @transform_13(%arg0: i32) -> (i32, i32) {
    %c0_i32 = arith.constant 0 : i32
    %c0_i32_0 = arith.constant 0 : i32
    %c0_i32_1 = arith.constant 0 : i32
    return %c0_i32, %c0_i32_0 : i32, i32
  }
  func.func @transform_14(%arg0: i32) -> (i32, i32) {
    %c0_i32 = arith.constant 0 : i32
    %c0_i32_0 = arith.constant 0 : i32
    %c0_i32_1 = arith.constant 0 : i32
    return %c0_i32, %c0_i32_0 : i32, i32
  }
  func.func @transform_15(%arg0: i32) -> (i32, i32) {
    %c0_i32 = arith.constant 0 : i32
    %c0_i32_0 = arith.constant 0 : i32
    %c0_i32_1 = arith.constant 0 : i32
    return %c0_i32, %c0_i32_0 : i32, i32
  }
  func.func @transform_16(%arg0: i32) -> (i32, i32) {
    %c0_i32 = arith.constant 0 : i32
    %c0_i32_0 = arith.constant 0 : i32
    %c0_i32_1 = arith.constant 0 : i32
    return %c0_i32, %c0_i32_0 : i32, i32
  }
}

</mosaic_0001>

<llo_original>
// kernel: tpu_custom_call.1
$region0: #{tpu_custom_call.1}
  #allocation0 [shape = 'u32[]', space=smem, size = 0x4, offset = 0x4, fixed_abs, tag = 'smem constant byte address 0x4 - core index']
  #allocation1 [shape = 'u32[144,128]{1,0:T(1,128)}', space=vmem, size = 0x12000, scoped, tag = 'internal scratch']
  #allocation2 [shape = 'f32[64,192]{1,0:T(8,128)}', space=vmem, size = 0x10000, scoped, tag = 'scratch operand']
  #allocation3 [shape = 'f32[64,64]{1,0:T(8,128)}', space=vmem, size = 0x8000, scoped, tag = 'scratch operand']
  #allocation4 [shape = 'f32[64,64]{1,0:T(8,128)}', space=vmem, size = 0x8000, scoped, tag = 'scratch operand']
  %s0 = inlined_call_operand.vmem [shape: bf16[64,12], index: 0, kind: input, shape index: {}]
  %s1 = inlined_call_operand.vmem [shape: bf16[64,12], index: 1, kind: input, shape index: {}]
  %s2 = inlined_call_operand.hbm [shape: bf16[12,32], index: 2, kind: input, shape index: {}]
  %s3 = inlined_call_operand.vmem [shape: f32[1,32], index: 3, kind: input, shape index: {}]
  %s4 = inlined_call_operand.vmem [shape: bf16[32,192], index: 4, kind: input, shape index: {}]
  %s5 = inlined_call_operand.hbm [shape: bf16[32,192], index: 5, kind: input, shape index: {}]
  %s6 = inlined_call_operand.hbm [shape: f32[1,192], index: 6, kind: input, shape index: {}]
  %s7 = inlined_call_operand.vmem [shape: bf16[64,192], index: 7, kind: input, shape index: {}]
  %s8 = inlined_call_operand.hbm [shape: f32[1,64], index: 8, kind: input, shape index: {}]
  %s9 = inlined_call_operand.hbm [shape: bf16[64,192], index: 9, kind: input, shape index: {}]
  %s10 = inlined_call_operand.hbm [shape: bf16[64,192], index: 10, kind: input, shape index: {}]
  %s11 = inlined_call_operand.hbm [shape: f32[1,192], index: 11, kind: input, shape index: {}]
  %s12 = inlined_call_operand.hbm [shape: bf16[64,192], index: 12, kind: input, shape index: {}]
  %s13 = inlined_call_operand.hbm [shape: f32[1,64], index: 13, kind: input, shape index: {}]
  %s14 = inlined_call_operand.vmem [shape: bf16[64,128], index: 14, kind: input, shape index: {}]
  %s15 = inlined_call_operand.hbm [shape: bf16[64,128], index: 15, kind: input, shape index: {}]
  %s16 = inlined_call_operand.hbm [shape: f32[64,128], index: 16, kind: output, shape index: {}]
  %s17 = sld [smem:[#allocation0]]
  $region114: #{tpu_custom_call.1} parent=0
    _
  %s19 = ssub.s32 1, %s17
  %s20 = scalar_select 0, %s19, %s17
  $region1: #{tpu_custom_call.1} parent=0
    #allocation5 [shape = 'u8[4096]{0}', space=vmem, size = 0x1000, scoped, tag = 'input window, operand 2, single buffered']
    #allocation6 [shape = 's32[1]{0}', space=sflag, size = 0x4, scoped, tag = 'scoped memory for tpu_custom_call.1']
    #allocation7 [shape = 's32[1]{0}', space=sflag, size = 0x4, scoped, tag = 'scoped memory for tpu_custom_call.1']
    #allocation8 [shape = 'u8[16384]{0}', space=vmem, size = 0x4000, scoped, tag = 'input window, operand 5, single buffered']
    #allocation9 [shape = 's32[1]{0}', space=sflag, size = 0x4, scoped, tag = 'scoped memory for tpu_custom_call.1']
    #allocation10 [shape = 'u8[1024]{0}', space=vmem, size = 0x400, scoped, tag = 'input window, operand 6, single buffered']
    #allocation11 [shape = 'u8[512]{0}', space=vmem, size = 0x400, scoped, tag = 'input window, operand 8, single buffered']
    #allocation12 [shape = 's32[1]{0}', space=sflag, size = 0x4, scoped, tag = 'scoped memory for tpu_custom_call.1']
    #allocation13 [shape = 'u8[32768]{0}', space=vmem, size = 0x8000, scoped, tag = 'input window, operand 9, single buffered']
    #allocation14 [shape = 'u8[32768]{0}', space=vmem, size = 0x8000, scoped, tag = 'input window, operand 10, single buffered']
    #allocation15 [shape = 's32[1]{0}', space=sflag, size = 0x4, scoped, tag = 'scoped memory for tpu_custom_call.1']
    #allocation16 [shape = 'u8[1024]{0}', space=vmem, size = 0x400, scoped, tag = 'input window, operand 11, single buffered']
    #allocation17 [shape = 'u8[32768]{0}', space=vmem, size = 0x8000, scoped, tag = 'input window, operand 12, single buffered']
    #allocation18 [shape = 's32[1]{0}', space=sflag, size = 0x4, scoped, tag = 'scoped memory for tpu_custom_call.1']
    #allocation19 [shape = 'u8[512]{0}', space=vmem, size = 0x400, scoped, tag = 'input window, operand 13, single buffered']
    #allocation20 [shape = 'u8[16384]{0}', space=vmem, size = 0x4000, scoped, tag = 'input window, operand 15, single buffered']
    #allocation21 [shape = 's32[1]{0}', space=sflag, size = 0x4, scoped, tag = 'scoped memory for tpu_custom_call.1']
    #allocation22 [shape = 'u8[32768]{0}', space=vmem, size = 0x8000, scoped, tag = 'output window, operand 0, single buffered']
    %21 = vsyncpa [#allocation6], 0
    %22 = vsyncpa [#allocation9], 0
    %23 = vsyncpa [#allocation12], 0
    %24 = vsyncpa [#allocation15], 0
    %25 = vsyncpa [#allocation18], 0
    %26 = vsyncpa [#allocation21], 0
    %27 = vsyncpa [#allocation7], 0
    // Predicated region
    $region2: #{tpu_custom_call.1} parent=1 // pred_check
      _
    $region3: #{tpu_custom_call.1} parent=1 // pred_check_branch
      %29 = sbr.rel (0) target = $region5
    $region4: #{tpu_custom_call.1} parent=1 // pred_region
      _
    $region5: #{tpu_custom_call.1} parent=1 // pred_fallthru
      _
    // Predicated region
    $region6: #{tpu_custom_call.1} parent=1 // pred_check
      _
    $region7: #{tpu_custom_call.1} parent=1 // pred_check_branch
      %31 = sbr.rel (0) target = $region9
    $region8: #{tpu_custom_call.1} parent=1 // pred_region
      _
    $region9: #{tpu_custom_call.1} parent=1 // pred_fallthru
      _
    // Predicated region
    $region10: #{tpu_custom_call.1} parent=1 // pred_check
      _
    $region11: #{tpu_custom_call.1} parent=1 // pred_check_branch
      %33 = sbr.rel (0) target = $region13
    $region12: #{tpu_custom_call.1} parent=1 // pred_region
      %s35 = ssub.s32 128, 128
      %36 = vsyncadd [#allocation6], %s35
      %s37 = sshll.u32 [#allocation5], 4
      %s38 = int_to_ptr.vmem [resolvable:$true] %s37
      %43 = dma.hbm_to_vmem [thread:$0]  %s2, 128, %s38, [#allocation6], 64, 64, 4
    $region13: #{tpu_custom_call.1} parent=1 // pred_fallthru
      _
    // Predicated region
    $region14: #{tpu_custom_call.1} parent=1 // pred_check
      _
    $region15: #{tpu_custom_call.1} parent=1 // pred_check_branch
      %45 = sbr.rel (0) target = $region17
    $region16: #{tpu_custom_call.1} parent=1 // pred_region
      _
    $region17: #{tpu_custom_call.1} parent=1 // pred_fallthru
      _
    // Predicated region
    $region18: #{tpu_custom_call.1} parent=1 // pred_check
      _
    $region19: #{tpu_custom_call.1} parent=1 // pred_check_branch
      %47 = sbr.rel (0) target = $region21
    $region20: #{tpu_custom_call.1} parent=1 // pred_region
      _
    $region21: #{tpu_custom_call.1} parent=1 // pred_fallthru
      _
    // Predicated region
    $region22: #{tpu_custom_call.1} parent=1 // pred_check
      _
    $region23: #{tpu_custom_call.1} parent=1 // pred_check_branch
      %49 = sbr.rel (0) target = $region25
    $region24: #{tpu_custom_call.1} parent=1 // pred_region
      %s51 = ssub.s32 512, 512
      %52 = vsyncadd [#allocation9], %s51
      %s53 = sshll.u32 [#allocation8], 4
      %s54 = int_to_ptr.vmem [resolvable:$true] %s53
      %59 = dma.hbm_to_vmem [thread:$0]  %s5, 512, %s54, [#allocation9], 128, 128, 8
    $region25: #{tpu_custom_call.1} parent=1 // pred_fallthru
      _
    // Predicated region
    $region26: #{tpu_custom_call.1} parent=1 // pred_check
      _
    $region27: #{tpu_custom_call.1} parent=1 // pred_check_branch
      %61 = sbr.rel (0) target = $region29
    $region28: #{tpu_custom_call.1} parent=1 // pred_region
      %s63 = ssub.s32 32, 32
      %64 = vsyncadd [#allocation9], %s63
      %s66 = sshll.u32 [#allocation10], 4
      %s67 = int_to_ptr.vmem [resolvable:$true] %s66
      %69 = dma.hbm_to_vmem [thread:$0]  %s6, 32, %s67, [#allocation9]
    $region29: #{tpu_custom_call.1} parent=1 // pred_fallthru
      _
    // Predicated region
    $region30: #{tpu_custom_call.1} parent=1 // pred_check
      _
    $region31: #{tpu_custom_call.1} parent=1 // pred_check_branch
      %71 = sbr.rel (0) target = $region33
    $region32: #{tpu_custom_call.1} parent=1 // pred_region
      _
    $region33: #{tpu_custom_call.1} parent=1 // pred_fallthru
      _
    // Predicated region
    $region34: #{tpu_custom_call.1} parent=1 // pred_check
      _
    $region35: #{tpu_custom_call.1} parent=1 // pred_check_branch
      %73 = sbr.rel (0) target = $region37
    $region36: #{tpu_custom_call.1} parent=1 // pred_region
      %s75 = ssub.s32 16, 16
      %76 = vsyncadd [#allocation12], %s75
      %s78 = sshll.u32 [#allocation11], 4
      %s79 = int_to_ptr.vmem [resolvable:$true] %s78
      %81 = dma.hbm_to_vmem [thread:$0]  %s8, 16, %s79, [#allocation12]
    $region37: #{tpu_custom_call.1} parent=1 // pred_fallthru
      _
    // Predicated region
    $region38: #{tpu_custom_call.1} parent=1 // pred_check
      _
    $region39: #{tpu_custom_call.1} parent=1 // pred_check_branch
      %83 = sbr.rel (0) target = $region41
    $region40: #{tpu_custom_call.1} parent=1 // pred_region
      %s85 = ssub.s32 1024, 1024
      %86 = vsyncadd [#allocation12], %s85
      %s87 = sshll.u32 [#allocation13], 4
      %s88 = int_to_ptr.vmem [resolvable:$true] %s87
      %93 = dma.hbm_to_vmem [thread:$0]  %s9, 1024, %s88, [#allocation12], 128, 128, 8
    $region41: #{tpu_custom_call.1} parent=1 // pred_fallthru
      _
    // Predicated region
    $region42: #{tpu_custom_call.1} parent=1 // pred_check
      _
    $region43: #{tpu_custom_call.1} parent=1 // pred_check_branch
      %95 = sbr.rel (0) target = $region45
    $region44: #{tpu_custom_call.1} parent=1 // pred_region
      %s97 = ssub.s32 1024, 1024
      %98 = vsyncadd [#allocation15], %s97
      %s99 = sshll.u32 [#allocation14], 4
      %s100 = int_to_ptr.vmem [resolvable:$true] %s99
      %105 = dma.hbm_to_vmem [thread:$0]  %s10, 1024, %s100, [#allocation15], 128, 128, 8
    $region45: #{tpu_custom_call.1} parent=1 // pred_fallthru
      _
    // Predicated region
    $region46: #{tpu_custom_call.1} parent=1 // pred_check
      _
    $region47: #{tpu_custom_call.1} parent=1 // pred_check_branch
      %107 = sbr.rel (0) target = $region49
    $region48: #{tpu_custom_call.1} parent=1 // pred_region
      %s109 = ssub.s32 32, 32
      %110 = vsyncadd [#allocation15], %s109
      %s112 = sshll.u32 [#allocation16], 4
      %s113 = int_to_ptr.vmem [resolvable:$true] %s112
      %115 = dma.hbm_to_vmem [thread:$0]  %s11, 32, %s113, [#allocation15]
    $region49: #{tpu_custom_call.1} parent=1 // pred_fallthru
      _
    // Predicated region
    $region50: #{tpu_custom_call.1} parent=1 // pred_check
      _
    $region51: #{tpu_custom_call.1} parent=1 // pred_check_branch
      %117 = sbr.rel (0) target = $region53
    $region52: #{tpu_custom_call.1} parent=1 // pred_region
      %s119 = ssub.s32 1024, 1024
      %120 = vsyncadd [#allocation18], %s119
      %s121 = sshll.u32 [#allocation17], 4
      %s122 = int_to_ptr.vmem [resolvable:$true] %s121
      %127 = dma.hbm_to_vmem [thread:$0]  %s12, 1024, %s122, [#allocation18], 128, 128, 8
    $region53: #{tpu_custom_call.1} parent=1 // pred_fallthru
      _
    // Predicated region
    $region54: #{tpu_custom_call.1} parent=1 // pred_check
      _
    $region55: #{tpu_custom_call.1} parent=1 // pred_check_branch
      %129 = sbr.rel (0) target = $region57
    $region56: #{tpu_custom_call.1} parent=1 // pred_region
      %s131 = ssub.s32 16, 16
      %132 = vsyncadd [#allocation18], %s131
      %s134 = sshll.u32 [#allocation19], 4
      %s135 = int_to_ptr.vmem [resolvable:$true] %s134
      %137 = dma.hbm_to_vmem [thread:$0]  %s13, 16, %s135, [#allocation18]
    $region57: #{tpu_custom_call.1} parent=1 // pred_fallthru
      _
    // Predicated region
    $region58: #{tpu_custom_call.1} parent=1 // pred_check
      _
    $region59: #{tpu_custom_call.1} parent=1 // pred_check_branch
      %139 = sbr.rel (0) target = $region61
    $region60: #{tpu_custom_call.1} parent=1 // pred_region
      _
    $region61: #{tpu_custom_call.1} parent=1 // pred_fallthru
      _
    // Predicated region
    $region62: #{tpu_custom_call.1} parent=1 // pred_check
      _
    $region63: #{tpu_custom_call.1} parent=1 // pred_check_branch
      %141 = sbr.rel (0) target = $region65
    $region64: #{tpu_custom_call.1} parent=1 // pred_region
      %s143 = ssub.s32 512, 512
      %144 = vsyncadd [#allocation21], %s143
      %s145 = sshll.u32 [#allocation20], 4
      %s146 = int_to_ptr.vmem [resolvable:$true] %s145
      %151 = dma.hbm_to_vmem [thread:$0]  %s15, 512, %s146, [#allocation21], 64, 64, 4
    $region65: #{tpu_custom_call.1} parent=1 // pred_fallthru
      _
    // Predicated region
    $region66: #{tpu_custom_call.1} parent=1 // pred_check
      _
    $region67: #{tpu_custom_call.1} parent=1 // pred_check_branch
      %153 = sbr.rel (0) target = $region69
    $region68: #{tpu_custom_call.1} parent=1 // pred_region
      %154 = dma.done [#allocation6], 128
    $region69: #{tpu_custom_call.1} parent=1 // pred_fallthru
      _
    // Predicated region
    $region70: #{tpu_custom_call.1} parent=1 // pred_check
      _
    $region71: #{tpu_custom_call.1} parent=1 // pred_check_branch
      %156 = sbr.rel (0) target = $region73
    $region72: #{tpu_custom_call.1} parent=1 // pred_region
      %157 = dma.done [#allocation9], 512
    $region73: #{tpu_custom_call.1} parent=1 // pred_fallthru
      _
    // Predicated region
    $region74: #{tpu_custom_call.1} parent=1 // pred_check
      _
    $region75: #{tpu_custom_call.1} parent=1 // pred_check_branch
      %159 = sbr.rel (0) target = $region77
    $region76: #{tpu_custom_call.1} parent=1 // pred_region
      %160 = dma.done [#allocation9], 32
    $region77: #{tpu_custom_call.1} parent=1 // pred_fallthru
      _
    // Predicated region
    $region78: #{tpu_custom_call.1} parent=1 // pred_check
      _
    $region79: #{tpu_custom_call.1} parent=1 // pred_check_branch
      %162 = sbr.rel (0) target = $region81
    $region80: #{tpu_custom_call.1} parent=1 // pred_region
      %163 = dma.done [#allocation12], 16
    $region81: #{tpu_custom_call.1} parent=1 // pred_fallthru
      _
    // Predicated region
    $region82: #{tpu_custom_call.1} parent=1 // pred_check
      _
    $region83: #{tpu_custom_call.1} parent=1 // pred_check_branch
      %165 = sbr.rel (0) target = $region85
    $region84: #{tpu_custom_call.1} parent=1 // pred_region
      %166 = dma.done [#allocation12], 1024
    $region85: #{tpu_custom_call.1} parent=1 // pred_fallthru
      _
    // Predicated region
    $region86: #{tpu_custom_call.1} parent=1 // pred_check
      _
    $region87: #{tpu_custom_call.1} parent=1 // pred_check_branch
      %168 = sbr.rel (0) target = $region89
    $region88: #{tpu_custom_call.1} parent=1 // pred_region
      %169 = dma.done [#allocation15], 1024
    $region89: #{tpu_custom_call.1} parent=1 // pred_fallthru
      _
    // Predicated region
    $region90: #{tpu_custom_call.1} parent=1 // pred_check
      _
    $region91: #{tpu_custom_call.1} parent=1 // pred_check_branch
      %171 = sbr.rel (0) target = $region93
    $region92: #{tpu_custom_call.1} parent=1 // pred_region
      %172 = dma.done [#allocation15], 32
    $region93: #{tpu_custom_call.1} parent=1 // pred_fallthru
      _
    // Predicated region
    $region94: #{tpu_custom_call.1} parent=1 // pred_check
      _
    $region95: #{tpu_custom_call.1} parent=1 // pred_check_branch
      %174 = sbr.rel (0) target = $region97
    $region96: #{tpu_custom_call.1} parent=1 // pred_region
      %175 = dma.done [#allocation18], 1024
    $region97: #{tpu_custom_call.1} parent=1 // pred_fallthru
      _
    // Predicated region
    $region98: #{tpu_custom_call.1} parent=1 // pred_check
      _
    $region99: #{tpu_custom_call.1} parent=1 // pred_check_branch
      %177 = sbr.rel (0) target = $region101
    $region100: #{tpu_custom_call.1} parent=1 // pred_region
      %178 = dma.done [#allocation18], 16
    $region101: #{tpu_custom_call.1} parent=1 // pred_fallthru
      _
    // Predicated region
    $region102: #{tpu_custom_call.1} parent=1 // pred_check
      _
    $region103: #{tpu_custom_call.1} parent=1 // pred_check_branch
      %180 = sbr.rel (0) target = $region105
    $region104: #{tpu_custom_call.1} parent=1 // pred_region
      %181 = dma.done [#allocation21], 512
    $region105: #{tpu_custom_call.1} parent=1 // pred_fallthru
      _
    %v183 = vld [vmem:[#allocation5] sm:$0xf]
    %v184 = vld [vmem:[#allocation5 + $0x4] sm:$0x3]
    %v185 = vld [vmem:[%s3] sm:$0x1]
    %v186 = vld [vmem:[%s0] sm:$0xf]
    %v187 = vld [vmem:[%s0 + $0x4] sm:$0xf]
    %v188 = vld [vmem:[%s0 + $0x8] sm:$0xf]
    %v189 = vld [vmem:[%s0 + $0xc] sm:$0xf]
    %v190 = vld [vmem:[%s0 + $0x10] sm:$0xf]
    %v191 = vld [vmem:[%s0 + $0x14] sm:$0xf]
    %v192 = vld [vmem:[%s0 + $0x18] sm:$0xf]
    %v193 = vld [vmem:[%s0 + $0x1c] sm:$0xf]
    %v195 = vlaneseq
    %v196 = vshrl.u32 %v195, 7
    %v197 = vsub.s32 0, %v196
    %v198 = vrot.slane %v185, %v197
    %v208 = vunpack.c.l.b16 %v186
    %v209 = vunpack.c.l.b16 %v187
    %v210 = vunpack.c.l.b16 %v188
    %v211 = vunpack.c.l.b16 %v189
    %v212 = vunpack.c.l.b16 %v190
    %v213 = vunpack.c.l.b16 %v191
    %v214 = vunpack.c.l.b16 %v192
    %v215 = vunpack.c.l.b16 %v193
    %v216 = vpack.c.b16 %v209, %v208
    %v217 = vpack.c.b16 %v211, %v210
    %v218 = vpack.c.b16 %v213, %v212
    %v219 = vpack.c.b16 %v215, %v214
    %v222 = vunpack.c.l.b16 %v183
    %v223 = vunpack.c.l.b16 %v184
    %v224 = vpack.c.b16 %v223, %v222
    %vm225 = vcmask 97280
    %v227 = vsel %vm225, %v216, 0
    %v230 = vsel %vm225, %v217, 0
    %v233 = vsel %vm225, %v218, 0
    %v236 = vsel %vm225, %v219, 0
    %vm238 = vcmask 1045504
    %v240 = vsel %vm238, %v224, 0
    %242 = vmatprep.subr.bf16.mxu0 0
    %243 = vmatpush1.bf16.msra.mxu0 %v240
    %244 = vmatprep.subr.bf16.mxu0 0
    %245 = vmatpush1.bf16.msra.mxu0 0
    %246 = vmatprep.subr.bf16.mxu0 0
    %247 = vmatpush1.bf16.msra.mxu0 0
    %248 = vmatprep.subr.bf16.mxu0 0
    %249 = vmatpush1.bf16.msra.mxu0 0
    %250 = vmatprep.subr.bf16.mxu0 0
    %251 = vmatpush1.bf16.msra.mxu0 0
    %252 = vmatprep.subr.bf16.mxu0 0
    %253 = vmatpush1.bf16.msra.mxu0 0
    %254 = vmatprep.subr.bf16.mxu0 0
    %255 = vmatpush1.bf16.msra.mxu0 0
    %256 = vmatprep.subr.bf16.mxu0 0
    %257 = vmatpush1.bf16.msra.mxu0 0
    %258 = vmatprep.subr.bf16.mxu0 0
    %259 = vmatpush1.bf16.msra.mxu0 0
    %260 = vmatprep.subr.bf16.mxu0 0
    %261 = vmatpush1.bf16.msra.mxu0 0
    %262 = vmatprep.subr.bf16.mxu0 0
    %263 = vmatpush1.bf16.msra.mxu0 0
    %264 = vmatprep.subr.bf16.mxu0 0
    %265 = vmatpush1.bf16.msra.mxu0 0
    %266 = vmatprep.subr.bf16.mxu0 0
    %267 = vmatpush1.bf16.msra.mxu0 0
    %268 = vmatprep.subr.bf16.mxu0 0
    %269 = vmatpush1.bf16.msra.mxu0 0
    %270 = vmatprep.subr.bf16.mxu0 0
    %271 = vmatpush1.bf16.msra.mxu0 0
    %272 = vmatprep.subr.bf16.mxu0 0
    %273 = vmatpush1.bf16.msra.mxu0 0
    %274 = vmatprep.mubr.bf16.mxu0 0
    %275 = vmatmul.mubr.bf16.gmra.mrb[0].mxu0 %v227
    %v276 = vpop.f32.mrb[0].mxu0
    %v277 = vadd.f32 %v198, %v276
    %v278 = vpop.f32.mrb[0].mxu0
    %v279 = vpop.f32.mrb[0].mxu0
    %v280 = vadd.f32 %v198, %v279
    %v281 = vpop.f32.mrb[0].mxu0
    %282 = vmatprep.mubr.bf16.mxu0 0
    %283 = vmatmul.mubr.bf16.gmra.mrb[0].mxu0 %v230
    %v284 = vpop.f32.mrb[0].mxu0
    %v285 = vadd.f32 %v198, %v284
    %v286 = vpop.f32.mrb[0].mxu0
    %v287 = vpop.f32.mrb[0].mxu0
    %v288 = vadd.f32 %v198, %v287
    %v289 = vpop.f32.mrb[0].mxu0
    %290 = vmatprep.mubr.bf16.mxu0 0
    %291 = vmatmul.mubr.bf16.gmra.mrb[0].mxu0 %v233
    %v292 = vpop.f32.mrb[0].mxu0
    %v293 = vadd.f32 %v198, %v292
    %v294 = vpop.f32.mrb[0].mxu0
    %v295 = vpop.f32.mrb[0].mxu0
    %v296 = vadd.f32 %v198, %v295
    %v297 = vpop.f32.mrb[0].mxu0
    %298 = vmatprep.mubr.bf16.mxu0 0
    %299 = vmatmul.mubr.bf16.gmra.mrb[0].mxu0 %v236
    %v300 = vpop.f32.mrb[0].mxu0
    %v301 = vadd.f32 %v198, %v300
    %v302 = vpop.f32.mrb[0].mxu0
    %v303 = vpop.f32.mrb[0].mxu0
    %v304 = vadd.f32 %v198, %v303
    %v305 = vpop.f32.mrb[0].mxu0
    %306 = vdwg.mxu0
    %v307 = vmax.f32 %v277, 0.0
    %v308 = vmax.f32 %v280, 0.0
    %v309 = vmax.f32 %v285, 0.0
    %v310 = vmax.f32 %v288, 0.0
    %v311 = vmax.f32 %v293, 0.0
    %v312 = vmax.f32 %v296, 0.0
    %v313 = vmax.f32 %v301, 0.0
    %v314 = vmax.f32 %v304, 0.0
    %v315 = vpack.c.bf16 %v308, %v307
    %v316 = vpack.c.bf16 %v310, %v309
    %v317 = vpack.c.bf16 %v312, %v311
    %v318 = vpack.c.bf16 %v314, %v313
    %v319 = vld [vmem:[%s1] sm:$0xf]
    %v320 = vld [vmem:[%s1 + $0x4] sm:$0xf]
    %v321 = vld [vmem:[%s1 + $0x8] sm:$0xf]
    %v322 = vld [vmem:[%s1 + $0xc] sm:$0xf]
    %v323 = vld [vmem:[%s1 + $0x10] sm:$0xf]
    %v324 = vld [vmem:[%s1 + $0x14] sm:$0xf]
    %v325 = vld [vmem:[%s1 + $0x18] sm:$0xf]
    %v326 = vld [vmem:[%s1 + $0x1c] sm:$0xf]
    %v335 = vunpack.c.l.b16 %v319
    %v336 = vunpack.c.l.b16 %v320
    %v337 = vunpack.c.l.b16 %v321
    %v338 = vunpack.c.l.b16 %v322
    %v339 = vunpack.c.l.b16 %v323
    %v340 = vunpack.c.l.b16 %v324
    %v341 = vunpack.c.l.b16 %v325
    %v342 = vunpack.c.l.b16 %v326
    %v343 = vpack.c.b16 %v336, %v335
    %v344 = vpack.c.b16 %v338, %v337
    %v345 = vpack.c.b16 %v340, %v339
    %v346 = vpack.c.b16 %v342, %v341
    %v348 = vsel %vm225, %v343, 0
    %v351 = vsel %vm225, %v344, 0
    %v354 = vsel %vm225, %v345, 0
    %v357 = vsel %vm225, %v346, 0
    %359 = vmatprep.subr.bf16.mxu0 0
    %360 = vmatpush1.bf16.msra.mxu0 %v240
    %361 = vmatprep.subr.bf16.mxu0 0
    %362 = vmatpush1.bf16.msra.mxu0 0
    %363 = vmatprep.subr.bf16.mxu0 0
    %364 = vmatpush1.bf16.msra.mxu0 0
    %365 = vmatprep.subr.bf16.mxu0 0
    %366 = vmatpush1.bf16.msra.mxu0 0
    %367 = vmatprep.subr.bf16.mxu0 0
    %368 = vmatpush1.bf16.msra.mxu0 0
    %369 = vmatprep.subr.bf16.mxu0 0
    %370 = vmatpush1.bf16.msra.mxu0 0
    %371 = vmatprep.subr.bf16.mxu0 0
    %372 = vmatpush1.bf16.msra.mxu0 0
    %373 = vmatprep.subr.bf16.mxu0 0
    %374 = vmatpush1.bf16.msra.mxu0 0
    %375 = vmatprep.subr.bf16.mxu0 0
    %376 = vmatpush1.bf16.msra.mxu0 0
    %377 = vmatprep.subr.bf16.mxu0 0
    %378 = vmatpush1.bf16.msra.mxu0 0
    %379 = vmatprep.subr.bf16.mxu0 0
    %380 = vmatpush1.bf16.msra.mxu0 0
    %381 = vmatprep.subr.bf16.mxu0 0
    %382 = vmatpush1.bf16.msra.mxu0 0
    %383 = vmatprep.subr.bf16.mxu0 0
    %384 = vmatpush1.bf16.msra.mxu0 0
    %385 = vmatprep.subr.bf16.mxu0 0
    %386 = vmatpush1.bf16.msra.mxu0 0
    %387 = vmatprep.subr.bf16.mxu0 0
    %388 = vmatpush1.bf16.msra.mxu0 0
    %389 = vmatprep.subr.bf16.mxu0 0
    %390 = vmatpush1.bf16.msra.mxu0 0
    %391 = vmatprep.mubr.bf16.mxu0 0
    %392 = vmatmul.mubr.bf16.gmra.mrb[0].mxu0 %v348
    %v393 = vpop.f32.mrb[0].mxu0
    %v394 = vadd.f32 %v198, %v393
    %v395 = vpop.f32.mrb[0].mxu0
    %v396 = vpop.f32.mrb[0].mxu0
    %v397 = vadd.f32 %v198, %v396
    %v398 = vpop.f32.mrb[0].mxu0
    %399 = vmatprep.mubr.bf16.mxu0 0
    %400 = vmatmul.mubr.bf16.gmra.mrb[0].mxu0 %v351
    %v401 = vpop.f32.mrb[0].mxu0
    %v402 = vadd.f32 %v198, %v401
    %v403 = vpop.f32.mrb[0].mxu0
    %v404 = vpop.f32.mrb[0].mxu0
    %v405 = vadd.f32 %v198, %v404
    %v406 = vpop.f32.mrb[0].mxu0
    %407 = vmatprep.mubr.bf16.mxu0 0
    %408 = vmatmul.mubr.bf16.gmra.mrb[0].mxu0 %v354
    %v409 = vpop.f32.mrb[0].mxu0
    %v410 = vadd.f32 %v198, %v409
    %v411 = vpop.f32.mrb[0].mxu0
    %v412 = vpop.f32.mrb[0].mxu0
    %v413 = vadd.f32 %v198, %v412
    %v414 = vpop.f32.mrb[0].mxu0
    %415 = vmatprep.mubr.bf16.mxu0 0
    %416 = vmatmul.mubr.bf16.gmra.mrb[0].mxu0 %v357
    %v417 = vpop.f32.mrb[0].mxu0
    %v418 = vadd.f32 %v198, %v417
    %v419 = vpop.f32.mrb[0].mxu0
    %v420 = vpop.f32.mrb[0].mxu0
    %v421 = vadd.f32 %v198, %v420
    %v422 = vpop.f32.mrb[0].mxu0
    %423 = vdwg.mxu0
    %v424 = vmax.f32 %v394, 0.0
    %v425 = vmax.f32 %v397, 0.0
    %v426 = vmax.f32 %v402, 0.0
    %v427 = vmax.f32 %v405, 0.0
    %v428 = vmax.f32 %v410, 0.0
    %v429 = vmax.f32 %v413, 0.0
    %v430 = vmax.f32 %v418, 0.0
    %v431 = vmax.f32 %v421, 0.0
    %v432 = vpack.c.bf16 %v425, %v424
    %v433 = vpack.c.bf16 %v427, %v426
    %v434 = vpack.c.bf16 %v429, %v428
    %v435 = vpack.c.bf16 %v431, %v430
    %v436 = vld [vmem:[%s4] sm:$0xff]
    %v437 = vld [vmem:[%s4 + $0x8] sm:$0xff]
    %v438 = vld [vmem:[%s4 + $0x10] sm:$0xff]
    %v439 = vld [vmem:[%s4 + $0x18] sm:$0xff]
    %v440 = vld [vmem:[#allocation8] sm:$0xff]
    %v441 = vld [vmem:[#allocation8 + $0x8] sm:$0xff]
    %v442 = vld [vmem:[#allocation8 + $0x10] sm:$0xff]
    %v443 = vld [vmem:[#allocation8 + $0x18] sm:$0xff]
    %v448 = vunpack.c.l.b16 %v440
    %v449 = vunpack.c.h.b16 %v440
    %v450 = vunpack.c.l.b16 %v441
    %v451 = vunpack.c.h.b16 %v441
    %v452 = vunpack.c.l.b16 %v442
    %v453 = vunpack.c.h.b16 %v442
    %v454 = vunpack.c.l.b16 %v443
    %v455 = vunpack.c.h.b16 %v443
    %v456 = vpack.c.b16 %v450, %v448
    %v457 = vpack.c.b16 %v451, %v449
    %v458 = vpack.c.b16 %v454, %v452
    %v459 = vpack.c.b16 %v455, %v453
    %vm464 = vcmask 261120
    %v466 = vsel %vm464, %v432, 0
    %v469 = vsel %vm464, %v433, 0
    %v472 = vsel %vm464, %v434, 0
    %v475 = vsel %vm464, %v435, 0
    %477 = vmatprep.subr.bf16.mxu0 %v457
    %478 = vmatpush1.bf16.msra.mxu0 %v456
    %479 = vmatprep.subr.bf16.mxu0 %v459
    %480 = vmatpush1.bf16.msra.mxu0 %v458
    %481 = vmatprep.subr.bf16.mxu0 0
    %482 = vmatpush1.bf16.msra.mxu0 0
    %483 = vmatprep.subr.bf16.mxu0 0
    %484 = vmatpush1.bf16.msra.mxu0 0
    %485 = vmatprep.subr.bf16.mxu0 0
    %486 = vmatpush1.bf16.msra.mxu0 0
    %487 = vmatprep.subr.bf16.mxu0 0
    %488 = vmatpush1.bf16.msra.mxu0 0
    %489 = vmatprep.subr.bf16.mxu0 0
    %490 = vmatpush1.bf16.msra.mxu0 0
    %491 = vmatprep.subr.bf16.mxu0 0
    %492 = vmatpush1.bf16.msra.mxu0 0
    %493 = vmatprep.subr.bf16.mxu0 0
    %494 = vmatpush1.bf16.msra.mxu0 0
    %495 = vmatprep.subr.bf16.mxu0 0
    %496 = vmatpush1.bf16.msra.mxu0 0
    %497 = vmatprep.subr.bf16.mxu0 0
    %498 = vmatpush1.bf16.msra.mxu0 0
    %499 = vmatprep.subr.bf16.mxu0 0
    %500 = vmatpush1.bf16.msra.mxu0 0
    %501 = vmatprep.subr.bf16.mxu0 0
    %502 = vmatpush1.bf16.msra.mxu0 0
    %503 = vmatprep.subr.bf16.mxu0 0
    %504 = vmatpush1.bf16.msra.mxu0 0
    %505 = vmatprep.subr.bf16.mxu0 0
    %506 = vmatpush1.bf16.msra.mxu0 0
    %507 = vmatprep.subr.bf16.mxu0 0
    %508 = vmatpush1.bf16.msra.mxu0 0
    %509 = vmatprep.mubr.bf16.mxu0 0
    %510 = vmatmul.mubr.bf16.gmra.mrb[0].mxu0 %v466
    %v511 = vpop.f32.mrb[0].mxu0
    %v512 = vadd.f32 0.0, %v511
    %v513 = vpop.f32.mrb[0].mxu0
    %v514 = vadd.f32 0.0, %v513
    %v515 = vpop.f32.mrb[0].mxu0
    %v516 = vadd.f32 0.0, %v515
    %v517 = vpop.f32.mrb[0].mxu0
    %v518 = vadd.f32 0.0, %v517
    %519 = vmatprep.mubr.bf16.mxu0 0
    %520 = vmatmul.mubr.bf16.gmra.mrb[0].mxu0 %v469
    %v521 = vpop.f32.mrb[0].mxu0
    %v522 = vadd.f32 0.0, %v521
    %v523 = vpop.f32.mrb[0].mxu0
    %v524 = vadd.f32 0.0, %v523
    %v525 = vpop.f32.mrb[0].mxu0
    %v526 = vadd.f32 0.0, %v525
    %v527 = vpop.f32.mrb[0].mxu0
    %v528 = vadd.f32 0.0, %v527
    %529 = vmatprep.mubr.bf16.mxu0 0
    %530 = vmatmul.mubr.bf16.gmra.mrb[0].mxu0 %v472
    %v531 = vpop.f32.mrb[0].mxu0
    %v532 = vadd.f32 0.0, %v531
    %v533 = vpop.f32.mrb[0].mxu0
    %v534 = vadd.f32 0.0, %v533
    %v535 = vpop.f32.mrb[0].mxu0
    %v536 = vadd.f32 0.0, %v535
    %v537 = vpop.f32.mrb[0].mxu0
    %v538 = vadd.f32 0.0, %v537
    %539 = vmatprep.mubr.bf16.mxu0 0
    %540 = vmatmul.mubr.bf16.gmra.mrb[0].mxu0 %v475
    %v541 = vpop.f32.mrb[0].mxu0
    %v542 = vadd.f32 0.0, %v541
    %v543 = vpop.f32.mrb[0].mxu0
    %v544 = vadd.f32 0.0, %v543
    %v545 = vpop.f32.mrb[0].mxu0
    %v546 = vadd.f32 0.0, %v545
    %v547 = vpop.f32.mrb[0].mxu0
    %v548 = vadd.f32 0.0, %v547
    %549 = vdwg.mxu0
    %v554 = vunpack.c.l.b16 %v436
    %v555 = vunpack.c.h.b16 %v436
    %v556 = vunpack.c.l.b16 %v437
    %v557 = vunpack.c.h.b16 %v437
    %v558 = vunpack.c.l.b16 %v438
    %v559 = vunpack.c.h.b16 %v438
    %v560 = vunpack.c.l.b16 %v439
    %v561 = vunpack.c.h.b16 %v439
    %v562 = vpack.c.b16 %v556, %v554
    %v563 = vpack.c.b16 %v557, %v555
    %v564 = vpack.c.b16 %v560, %v558
    %v565 = vpack.c.b16 %v561, %v559
    %v571 = vsel %vm464, %v315, 0
    %v574 = vsel %vm464, %v316, 0
    %v577 = vsel %vm464, %v317, 0
    %v580 = vsel %vm464, %v318, 0
    %582 = vmatprep.subr.bf16.mxu0 %v563
    %583 = vmatpush1.bf16.msra.mxu0 %v562
    %584 = vmatprep.subr.bf16.mxu0 %v565
    %585 = vmatpush1.bf16.msra.mxu0 %v564
    %586 = vmatprep.subr.bf16.mxu0 0
    %587 = vmatpush1.bf16.msra.mxu0 0
    %588 = vmatprep.subr.bf16.mxu0 0
    %589 = vmatpush1.bf16.msra.mxu0 0
    %590 = vmatprep.subr.bf16.mxu0 0
    %591 = vmatpush1.bf16.msra.mxu0 0
    %592 = vmatprep.subr.bf16.mxu0 0
    %593 = vmatpush1.bf16.msra.mxu0 0
    %594 = vmatprep.subr.bf16.mxu0 0
    %595 = vmatpush1.bf16.msra.mxu0 0
    %596 = vmatprep.subr.bf16.mxu0 0
    %597 = vmatpush1.bf16.msra.mxu0 0
    %598 = vmatprep.subr.bf16.mxu0 0
    %599 = vmatpush1.bf16.msra.mxu0 0
    %600 = vmatprep.subr.bf16.mxu0 0
    %601 = vmatpush1.bf16.msra.mxu0 0
    %602 = vmatprep.subr.bf16.mxu0 0
    %603 = vmatpush1.bf16.msra.mxu0 0
    %604 = vmatprep.subr.bf16.mxu0 0
    %605 = vmatpush1.bf16.msra.mxu0 0
    %606 = vmatprep.subr.bf16.mxu0 0
    %607 = vmatpush1.bf16.msra.mxu0 0
    %608 = vmatprep.subr.bf16.mxu0 0
    %609 = vmatpush1.bf16.msra.mxu0 0
    %610 = vmatprep.subr.bf16.mxu0 0
    %611 = vmatpush1.bf16.msra.mxu0 0
    %612 = vmatprep.subr.bf16.mxu0 0
    %613 = vmatpush1.bf16.msra.mxu0 0
    %614 = vmatprep.mubr.bf16.mxu0 0
    %615 = vmatmul.mubr.bf16.gmra.mrb[0].mxu0 %v571
    %v616 = vpop.f32.mrb[0].mxu0
    %v617 = vadd.f32 %v512, %v616
    %v618 = vpop.f32.mrb[0].mxu0
    %v619 = vadd.f32 %v514, %v618
    %v620 = vpop.f32.mrb[0].mxu0
    %v621 = vadd.f32 %v516, %v620
    %v622 = vpop.f32.mrb[0].mxu0
    %v623 = vadd.f32 %v518, %v622
    %624 = vmatprep.mubr.bf16.mxu0 0
    %625 = vmatmul.mubr.bf16.gmra.mrb[0].mxu0 %v574
    %v626 = vpop.f32.mrb[0].mxu0
    %v627 = vadd.f32 %v522, %v626
    %v628 = vpop.f32.mrb[0].mxu0
    %v629 = vadd.f32 %v524, %v628
    %v630 = vpop.f32.mrb[0].mxu0
    %v631 = vadd.f32 %v526, %v630
    %v632 = vpop.f32.mrb[0].mxu0
    %v633 = vadd.f32 %v528, %v632
    %634 = vmatprep.mubr.bf16.mxu0 0
    %635 = vmatmul.mubr.bf16.gmra.mrb[0].mxu0 %v577
    %v636 = vpop.f32.mrb[0].mxu0
    %v637 = vadd.f32 %v532, %v636
    %v638 = vpop.f32.mrb[0].mxu0
    %v639 = vadd.f32 %v534, %v638
    %v640 = vpop.f32.mrb[0].mxu0
    %v641 = vadd.f32 %v536, %v640
    %v642 = vpop.f32.mrb[0].mxu0
    %v643 = vadd.f32 %v538, %v642
    %644 = vmatprep.mubr.bf16.mxu0 0
    %645 = vmatmul.mubr.bf16.gmra.mrb[0].mxu0 %v580
    %v646 = vpop.f32.mrb[0].mxu0
    %v647 = vadd.f32 %v542, %v646
    %v648 = vpop.f32.mrb[0].mxu0
    %v649 = vadd.f32 %v544, %v648
    %v650 = vpop.f32.mrb[0].mxu0
    %v651 = vadd.f32 %v546, %v650
    %v652 = vpop.f32.mrb[0].mxu0
    %v653 = vadd.f32 %v548, %v652
    %654 = vdwg.mxu0
    %v655 = vld [vmem:[#allocation10] sm:$0x3]
    %v657 = vlaneseq
    %v658 = vshrl.u32 %v657, 7
    %v659 = vsub.s32 0, %v658
    %v660 = vrot.slane %v655, %v659
    %v661 = vlaneseq
    %v662 = vshrl.u32 %v661, 7
    %v663 = vsub.s32 1, %v662
    %v664 = vrot.slane %v655, %v663
    %v667 = vadd.f32 %v617, %v660
    %v668 = vadd.f32 %v619, %v664
    %v669 = vadd.f32 %v621, %v660
    %v670 = vadd.f32 %v623, %v664
    %v671 = vadd.f32 %v627, %v660
    %v672 = vadd.f32 %v629, %v664
    %v673 = vadd.f32 %v631, %v660
    %v674 = vadd.f32 %v633, %v664
    %v675 = vadd.f32 %v637, %v660
    %v676 = vadd.f32 %v639, %v664
    %v677 = vadd.f32 %v641, %v660
    %v678 = vadd.f32 %v643, %v664
    %v679 = vadd.f32 %v647, %v660
    %v680 = vadd.f32 %v649, %v664
    %v681 = vadd.f32 %v651, %v660
    %v682 = vadd.f32 %v653, %v664
    %683 = vst [vmem:[#allocation2] sm:$0xff] %v667
    %vm684 = vcmask 523264
    %685 = vst.msk [vmem:[#allocation2 + $0x8] sm:$0xff] %vm684, %v668
    %686 = vst [vmem:[#allocation2 + $0x10] sm:$0xff] %v669
    %687 = vst.msk [vmem:[#allocation2 + $0x18] sm:$0xff] %vm684, %v670
    %688 = vst [vmem:[#allocation2 + $0x20] sm:$0xff] %v671
    %689 = vst.msk [vmem:[#allocation2 + $0x28] sm:$0xff] %vm684, %v672
    %690 = vst [vmem:[#allocation2 + $0x30] sm:$0xff] %v673
    %691 = vst.msk [vmem:[#allocation2 + $0x38] sm:$0xff] %vm684, %v674
    %692 = vst [vmem:[#allocation2 + $0x40] sm:$0xff] %v675
    %693 = vst.msk [vmem:[#allocation2 + $0x48] sm:$0xff] %vm684, %v676
    %694 = vst [vmem:[#allocation2 + $0x50] sm:$0xff] %v677
    %695 = vst.msk [vmem:[#allocation2 + $0x58] sm:$0xff] %vm684, %v678
    %696 = vst [vmem:[#allocation2 + $0x60] sm:$0xff] %v679
    %697 = vst.msk [vmem:[#allocation2 + $0x68] sm:$0xff] %vm684, %v680
    %698 = vst [vmem:[#allocation2 + $0x70] sm:$0xff] %v681
    %699 = vst.msk [vmem:[#allocation2 + $0x78] sm:$0xff] %vm684, %v682
    %v700 = vld [vmem:[%s7] sm:$0xff]
    %v701 = vld [vmem:[%s7 + $0x8] sm:$0xff]
    %v702 = vld [vmem:[%s7 + $0x10] sm:$0xff]
    %v703 = vld [vmem:[%s7 + $0x18] sm:$0xff]
    %v704 = vld [vmem:[%s7 + $0x20] sm:$0xff]
    %v705 = vld [vmem:[%s7 + $0x28] sm:$0xff]
    %v706 = vld [vmem:[%s7 + $0x30] sm:$0xff]
    %v707 = vld [vmem:[%s7 + $0x38] sm:$0xff]
    %v708 = vld [vmem:[#allocation11] sm:$0x1]
    %v710 = vlaneseq
    %v711 = vshrl.u32 %v710, 7
    %v712 = vsub.s32 0, %v711
    %v713 = vrot.slane %v708, %v712
    %v715 = vld [vmem:[#allocation2] sm:$0xff]
    %v716 = vld [vmem:[#allocation2 + $0x8] sm:$0xff]
    %v725 = vunpack.c.l.b16 %v700
    %v726 = vunpack.c.h.b16 %v700
    %v727 = vunpack.c.l.b16 %v701
    %v728 = vunpack.c.h.b16 %v701
    %v729 = vunpack.c.l.b16 %v702
    %v730 = vunpack.c.h.b16 %v702
    %v731 = vunpack.c.l.b16 %v703
    %v732 = vunpack.c.h.b16 %v703
    %v733 = vunpack.c.l.b16 %v704
    %v734 = vunpack.c.h.b16 %v704
    %v735 = vunpack.c.l.b16 %v705
    %v736 = vunpack.c.h.b16 %v705
    %v737 = vunpack.c.l.b16 %v706
    %v738 = vunpack.c.h.b16 %v706
    %v739 = vunpack.c.l.b16 %v707
    %v740 = vunpack.c.h.b16 %v707
    %v741 = vpack.c.b16 %v727, %v725
    %v742 = vpack.c.b16 %v728, %v726
    %v743 = vpack.c.b16 %v731, %v729
    %v744 = vpack.c.b16 %v732, %v730
    %v745 = vpack.c.b16 %v735, %v733
    %v746 = vpack.c.b16 %v736, %v734
    %v747 = vpack.c.b16 %v739, %v737
    %v748 = vpack.c.b16 %v740, %v738
    %v758 = vsel %vm684, 0, 0
    %760 = vmatprep.subr.bf16.mxu0 %v742
    %761 = vmatpush1.bf16.msra.mxu0 %v741
    %762 = vmatprep.subr.bf16.mxu0 %v744
    %763 = vmatpush1.bf16.msra.mxu0 %v743
    %764 = vmatprep.subr.bf16.mxu0 %v746
    %765 = vmatpush1.bf16.msra.mxu0 %v745
    %766 = vmatprep.subr.bf16.mxu0 %v748
    %767 = vmatpush1.bf16.msra.mxu0 %v747
    %768 = vmatprep.subr.bf16.mxu0 0
    %769 = vmatpush1.bf16.msra.mxu0 0
    %770 = vmatprep.subr.bf16.mxu0 0
    %771 = vmatpush1.bf16.msra.mxu0 0
    %772 = vmatprep.subr.bf16.mxu0 0
    %773 = vmatpush1.bf16.msra.mxu0 0
    %774 = vmatprep.subr.bf16.mxu0 0
    %775 = vmatpush1.bf16.msra.mxu0 0
    %776 = vmatprep.subr.bf16.mxu0 0
    %777 = vmatpush1.bf16.msra.mxu0 0
    %778 = vmatprep.subr.bf16.mxu0 0
    %779 = vmatpush1.bf16.msra.mxu0 0
    %780 = vmatprep.subr.bf16.mxu0 0
    %781 = vmatpush1.bf16.msra.mxu0 0
    %782 = vmatprep.subr.bf16.mxu0 0
    %783 = vmatpush1.bf16.msra.mxu0 0
    %784 = vmatprep.subr.bf16.mxu0 0
    %785 = vmatpush1.bf16.msra.mxu0 0
    %786 = vmatprep.subr.bf16.mxu0 0
    %787 = vmatpush1.bf16.msra.mxu0 0
    %788 = vmatprep.subr.bf16.mxu0 0
    %789 = vmatpush1.bf16.msra.mxu0 0
    %790 = vmatprep.subr.bf16.mxu0 0
    %791 = vmatpush1.bf16.msra.mxu0 0
    %792 = vmatprep.mubr.bf16.mxu0 0
    %793 = vmatmul.mubr.bf16.gmra.mrb[0].mxu0 %v758
    %v794 = vpop.f32.mrb[0].mxu0
    %v795 = vadd.f32 0.0, %v794
    %v796 = vpop.f32.mrb[0].mxu0
    %v797 = vadd.f32 0.0, %v796
    %v798 = vpop.f32.mrb[0].mxu0
    %v799 = vpop.f32.mrb[0].mxu0
    %800 = vdwg.mxu0
    %v801 = vadd.f32 %v715, %v795
    %v802 = vxor.u32 %v801, 2147483648
    %v803 = vmul.f32 %v802, 1.442695
    %v804 = vpow.pop %v803
    %v805 = vadd.f32 %v804, 1.0
    %v806 = vrcp.pop %v805
    %v807 = vmul.f32 1.0, %v806
    %v808 = vadd.f32 %v797, %v713
    %v809 = vmul.f32 %v807, %v808
    %v810 = vadd.f32 %v716, %v809
    %v811 = vtanh.pop %v810
    %v812 = vsub.f32 1.0, %v807
    %814 = vrot.lane.b32.xlu0 %v811, 64
    %v815 = vpop.permute.xlu0 %814
    %v817 = vmul.f32 %v812, %v815
    %v818 = vmul.f32 %v807, 0.0
    %v819 = vadd.f32 %v817, %v818
    %821 = vrot.lane.b32.xlu0 %v819, 64
    %v822 = vpop.permute.xlu0 %821
    %824 = vst.msk [vmem:[#allocation3] sm:$0xff] %vm684, %v822
    %825 = vst.msk [vmem:[#allocation4 + $0x38] sm:$0xff] %vm684, %v822
    %v826 = vld [vmem:[#allocation2 + $0x10] sm:$0xff]
    %v827 = vld [vmem:[#allocation2 + $0x18] sm:$0xff]
    %v828 = vpack.c.bf16 %v819, %v819
    %830 = vrot.lane.b32.xlu0 %v828, 64
    %v831 = vpop.permute.xlu0 %830
    %v833 = vsel %vm684, %v831, 0
    %835 = vmatprep.subr.bf16.mxu0 %v742
    %836 = vmatpush1.bf16.msra.mxu0 %v741
    %837 = vmatprep.subr.bf16.mxu0 %v744
    %838 = vmatpush1.bf16.msra.mxu0 %v743
    %839 = vmatprep.subr.bf16.mxu0 %v746
    %840 = vmatpush1.bf16.msra.mxu0 %v745
    %841 = vmatprep.subr.bf16.mxu0 %v748
    %842 = vmatpush1.bf16.msra.mxu0 %v747
    %843 = vmatprep.subr.bf16.mxu0 0
    %844 = vmatpush1.bf16.msra.mxu0 0
    %845 = vmatprep.subr.bf16.mxu0 0
    %846 = vmatpush1.bf16.msra.mxu0 0
    %847 = vmatprep.subr.bf16.mxu0 0
    %848 = vmatpush1.bf16.msra.mxu0 0
    %849 = vmatprep.subr.bf16.mxu0 0
    %850 = vmatpush1.bf16.msra.mxu0 0
    %851 = vmatprep.subr.bf16.mxu0 0
    %852 = vmatpush1.bf16.msra.mxu0 0
    %853 = vmatprep.subr.bf16.mxu0 0
    %854 = vmatpush1.bf16.msra.mxu0 0
    %855 = vmatprep.subr.bf16.mxu0 0
    %856 = vmatpush1.bf16.msra.mxu0 0
    %857 = vmatprep.subr.bf16.mxu0 0
    %858 = vmatpush1.bf16.msra.mxu0 0
    %859 = vmatprep.subr.bf16.mxu0 0
    %860 = vmatpush1.bf16.msra.mxu0 0
    %861 = vmatprep.subr.bf16.mxu0 0
    %862 = vmatpush1.bf16.msra.mxu0 0
    %863 = vmatprep.subr.bf16.mxu0 0
    %864 = vmatpush1.bf16.msra.mxu0 0
    %865 = vmatprep.subr.bf16.mxu0 0
    %866 = vmatpush1.bf16.msra.mxu0 0
    %867 = vmatprep.mubr.bf16.mxu0 0
    %868 = vmatmul.mubr.bf16.gmra.mrb[0].mxu0 %v833
    %v869 = vpop.f32.mrb[0].mxu0
    %v870 = vadd.f32 0.0, %v869
    %v871 = vpop.f32.mrb[0].mxu0
    %v872 = vadd.f32 0.0, %v871
    %v873 = vpop.f32.mrb[0].mxu0
    %v874 = vpop.f32.mrb[0].mxu0
    %875 = vdwg.mxu0
    %v876 = vadd.f32 %v826, %v870
    %v877 = vxor.u32 %v876, 2147483648
    %v878 = vmul.f32 %v877, 1.442695
    %v879 = vpow.pop %v878
    %v880 = vadd.f32 %v879, 1.0
    %v881 = vrcp.pop %v880
    %v882 = vmul.f32 1.0, %v881
    %v883 = vadd.f32 %v872, %v713
    %v884 = vmul.f32 %v882, %v883
    %v885 = vadd.f32 %v827, %v884
    %v886 = vtanh.pop %v885
    %v887 = vsub.f32 1.0, %v882
    %889 = vrot.lane.b32.xlu0 %v886, 64
    %v890 = vpop.permute.xlu0 %889
    %v892 = vmul.f32 %v887, %v890
    %v893 = vmul.f32 %v882, %v819
    %v894 = vadd.f32 %v892, %v893
    %896 = vrot.lane.b32.xlu0 %v894, 64
    %v897 = vpop.permute.xlu0 %896
    %899 = vst.msk [vmem:[#allocation3 + $0x8] sm:$0xff] %vm684, %v897
    %900 = vst.msk [vmem:[#allocation4 + $0x30] sm:$0xff] %vm684, %v897
    %v901 = vld [vmem:[#allocation2 + $0x20] sm:$0xff]
    %v902 = vld [vmem:[#allocation2 + $0x28] sm:$0xff]
    %v903 = vpack.c.bf16 %v894, %v894
    %905 = vrot.lane.b32.xlu0 %v903, 64
    %v906 = vpop.permute.xlu0 %905
    %v908 = vsel %vm684, %v906, 0
    %910 = vmatprep.subr.bf16.mxu0 %v742
    %911 = vmatpush1.bf16.msra.mxu0 %v741
    %912 = vmatprep.subr.bf16.mxu0 %v744
    %913 = vmatpush1.bf16.msra.mxu0 %v743
    %914 = vmatprep.subr.bf16.mxu0 %v746
    %915 = vmatpush1.bf16.msra.mxu0 %v745
    %916 = vmatprep.subr.bf16.mxu0 %v748
    %917 = vmatpush1.bf16.msra.mxu0 %v747
    %918 = vmatprep.subr.bf16.mxu0 0
    %919 = vmatpush1.bf16.msra.mxu0 0
    %920 = vmatprep.subr.bf16.mxu0 0
    %921 = vmatpush1.bf16.msra.mxu0 0
    %922 = vmatprep.subr.bf16.mxu0 0
    %923 = vmatpush1.bf16.msra.mxu0 0
    %924 = vmatprep.subr.bf16.mxu0 0
    %925 = vmatpush1.bf16.msra.mxu0 0
    %926 = vmatprep.subr.bf16.mxu0 0
    %927 = vmatpush1.bf16.msra.mxu0 0
    %928 = vmatprep.subr.bf16.mxu0 0
    %929 = vmatpush1.bf16.msra.mxu0 0
    %930 = vmatprep.subr.bf16.mxu0 0
    %931 = vmatpush1.bf16.msra.mxu0 0
    %932 = vmatprep.subr.bf16.mxu0 0
    %933 = vmatpush1.bf16.msra.mxu0 0
    %934 = vmatprep.subr.bf16.mxu0 0
    %935 = vmatpush1.bf16.msra.mxu0 0
    %936 = vmatprep.subr.bf16.mxu0 0
    %937 = vmatpush1.bf16.msra.mxu0 0
    %938 = vmatprep.subr.bf16.mxu0 0
    %939 = vmatpush1.bf16.msra.mxu0 0
    %940 = vmatprep.subr.bf16.mxu0 0
    %941 = vmatpush1.bf16.msra.mxu0 0
    %942 = vmatprep.mubr.bf16.mxu0 0
    %943 = vmatmul.mubr.bf16.gmra.mrb[0].mxu0 %v908
    %v944 = vpop.f32.mrb[0].mxu0
    %v945 = vadd.f32 0.0, %v944
    %v946 = vpop.f32.mrb[0].mxu0
    %v947 = vadd.f32 0.0, %v946
    %v948 = vpop.f32.mrb[0].mxu0
    %v949 = vpop.f32.mrb[0].mxu0
    %950 = vdwg.mxu0
    %v951 = vadd.f32 %v901, %v945
    %v952 = vxor.u32 %v951, 2147483648
    %v953 = vmul.f32 %v952, 1.442695
    %v954 = vpow.pop %v953
    %v955 = vadd.f32 %v954, 1.0
    %v956 = vrcp.pop %v955
    %v957 = vmul.f32 1.0, %v956
    %v958 = vadd.f32 %v947, %v713
    %v959 = vmul.f32 %v957, %v958
    %v960 = vadd.f32 %v902, %v959
    %v961 = vtanh.pop %v960
    %v962 = vsub.f32 1.0, %v957
    %964 = vrot.lane.b32.xlu0 %v961, 64
    %v965 = vpop.permute.xlu0 %964
    %v967 = vmul.f32 %v962, %v965
    %v968 = vmul.f32 %v957, %v894
    %v969 = vadd.f32 %v967, %v968
    %971 = vrot.lane.b32.xlu0 %v969, 64
    %v972 = vpop.permute.xlu0 %971
    %974 = vst.msk [vmem:[#allocation3 + $0x10] sm:$0xff] %vm684, %v972
    %975 = vst.msk [vmem:[#allocation4 + $0x28] sm:$0xff] %vm684, %v972
    %v976 = vld [vmem:[#allocation2 + $0x30] sm:$0xff]
    %v977 = vld [vmem:[#allocation2 + $0x38] sm:$0xff]
    %v978 = vpack.c.bf16 %v969, %v969
    %980 = vrot.lane.b32.xlu0 %v978, 64
    %v981 = vpop.permute.xlu0 %980
    %v983 = vsel %vm684, %v981, 0
    %985 = vmatprep.subr.bf16.mxu0 %v742
    %986 = vmatpush1.bf16.msra.mxu0 %v741
    %987 = vmatprep.subr.bf16.mxu0 %v744
    %988 = vmatpush1.bf16.msra.mxu0 %v743
    %989 = vmatprep.subr.bf16.mxu0 %v746
    %990 = vmatpush1.bf16.msra.mxu0 %v745
    %991 = vmatprep.subr.bf16.mxu0 %v748
    %992 = vmatpush1.bf16.msra.mxu0 %v747
    %993 = vmatprep.subr.bf16.mxu0 0
    %994 = vmatpush1.bf16.msra.mxu0 0
    %995 = vmatprep.subr.bf16.mxu0 0
    %996 = vmatpush1.bf16.msra.mxu0 0
    %997 = vmatprep.subr.bf16.mxu0 0
    %998 = vmatpush1.bf16.msra.mxu0 0
    %999 = vmatprep.subr.bf16.mxu0 0
    %1000 = vmatpush1.bf16.msra.mxu0 0
    %1001 = vmatprep.subr.bf16.mxu0 0
    %1002 = vmatpush1.bf16.msra.mxu0 0
    %1003 = vmatprep.subr.bf16.mxu0 0
    %1004 = vmatpush1.bf16.msra.mxu0 0
    %1005 = vmatprep.subr.bf16.mxu0 0
    %1006 = vmatpush1.bf16.msra.mxu0 0
    %1007 = vmatprep.subr.bf16.mxu0 0
    %1008 = vmatpush1.bf16.msra.mxu0 0
    %1009 = vmatprep.subr.bf16.mxu0 0
    %1010 = vmatpush1.bf16.msra.mxu0 0
    %1011 = vmatprep.subr.bf16.mxu0 0
    %1012 = vmatpush1.bf16.msra.mxu0 0
    %1013 = vmatprep.subr.bf16.mxu0 0
    %1014 = vmatpush1.bf16.msra.mxu0 0
    %1015 = vmatprep.subr.bf16.mxu0 0
    %1016 = vmatpush1.bf16.msra.mxu0 0
    %1017 = vmatprep.mubr.bf16.mxu0 0
    %1018 = vmatmul.mubr.bf16.gmra.mrb[0].mxu0 %v983
    %v1019 = vpop.f32.mrb[0].mxu0
    %v1020 = vadd.f32 0.0, %v1019
    %v1021 = vpop.f32.mrb[0].mxu0
    %v1022 = vadd.f32 0.0, %v1021
    %v1023 = vpop.f32.mrb[0].mxu0
    %v1024 = vpop.f32.mrb[0].mxu0
    %1025 = vdwg.mxu0
    %v1026 = vadd.f32 %v976, %v1020
    %v1027 = vxor.u32 %v1026, 2147483648
    %v1028 = vmul.f32 %v1027, 1.442695
    %v1029 = vpow.pop %v1028
    %v1030 = vadd.f32 %v1029, 1.0
    %v1031 = vrcp.pop %v1030
    %v1032 = vmul.f32 1.0, %v1031
    %v1033 = vadd.f32 %v1022, %v713
    %v1034 = vmul.f32 %v1032, %v1033
    %v1035 = vadd.f32 %v977, %v1034
    %v1036 = vtanh.pop %v1035
    %v1037 = vsub.f32 1.0, %v1032
    %1039 = vrot.lane.b32.xlu0 %v1036, 64
    %v1040 = vpop.permute.xlu0 %1039
    %v1042 = vmul.f32 %v1037, %v1040
    %v1043 = vmul.f32 %v1032, %v969
    %v1044 = vadd.f32 %v1042, %v1043
    %1046 = vrot.lane.b32.xlu0 %v1044, 64
    %v1047 = vpop.permute.xlu0 %1046
    %1049 = vst.msk [vmem:[#allocation3 + $0x18] sm:$0xff] %vm684, %v1047
    %1050 = vst.msk [vmem:[#allocation4 + $0x20] sm:$0xff] %vm684, %v1047
    %v1051 = vld [vmem:[#allocation2 + $0x40] sm:$0xff]
    %v1052 = vld [vmem:[#allocation2 + $0x48] sm:$0xff]
    %v1053 = vpack.c.bf16 %v1044, %v1044
    %1055 = vrot.lane.b32.xlu0 %v1053, 64
    %v1056 = vpop.permute.xlu0 %1055
    %v1058 = vsel %vm684, %v1056, 0
    %1060 = vmatprep.subr.bf16.mxu0 %v742
    %1061 = vmatpush1.bf16.msra.mxu0 %v741
    %1062 = vmatprep.subr.bf16.mxu0 %v744
    %1063 = vmatpush1.bf16.msra.mxu0 %v743
    %1064 = vmatprep.subr.bf16.mxu0 %v746
    %1065 = vmatpush1.bf16.msra.mxu0 %v745
    %1066 = vmatprep.subr.bf16.mxu0 %v748
    %1067 = vmatpush1.bf16.msra.mxu0 %v747
    %1068 = vmatprep.subr.bf16.mxu0 0
    %1069 = vmatpush1.bf16.msra.mxu0 0
    %1070 = vmatprep.subr.bf16.mxu0 0
    %1071 = vmatpush1.bf16.msra.mxu0 0
    %1072 = vmatprep.subr.bf16.mxu0 0
    %1073 = vmatpush1.bf16.msra.mxu0 0
    %1074 = vmatprep.subr.bf16.mxu0 0
    %1075 = vmatpush1.bf16.msra.mxu0 0
    %1076 = vmatprep.subr.bf16.mxu0 0
    %1077 = vmatpush1.bf16.msra.mxu0 0
    %1078 = vmatprep.subr.bf16.mxu0 0
    %1079 = vmatpush1.bf16.msra.mxu0 0
    %1080 = vmatprep.subr.bf16.mxu0 0
    %1081 = vmatpush1.bf16.msra.mxu0 0
    %1082 = vmatprep.subr.bf16.mxu0 0
    %1083 = vmatpush1.bf16.msra.mxu0 0
    %1084 = vmatprep.subr.bf16.mxu0 0
    %1085 = vmatpush1.bf16.msra.mxu0 0
    %1086 = vmatprep.subr.bf16.mxu0 0
    %1087 = vmatpush1.bf16.msra.mxu0 0
    %1088 = vmatprep.subr.bf16.mxu0 0
    %1089 = vmatpush1.bf16.msra.mxu0 0
    %1090 = vmatprep.subr.bf16.mxu0 0
    %1091 = vmatpush1.bf16.msra.mxu0 0
    %1092 = vmatprep.mubr.bf16.mxu0 0
    %1093 = vmatmul.mubr.bf16.gmra.mrb[0].mxu0 %v1058
    %v1094 = vpop.f32.mrb[0].mxu0
    %v1095 = vadd.f32 0.0, %v1094
    %v1096 = vpop.f32.mrb[0].mxu0
    %v1097 = vadd.f32 0.0, %v1096
    %v1098 = vpop.f32.mrb[0].mxu0
    %v1099 = vpop.f32.mrb[0].mxu0
    %1100 = vdwg.mxu0
    %v1101 = vadd.f32 %v1051, %v1095
    %v1102 = vxor.u32 %v1101, 2147483648
    %v1103 = vmul.f32 %v1102, 1.442695
    %v1104 = vpow.pop %v1103
    %v1105 = vadd.f32 %v1104, 1.0
    %v1106 = vrcp.pop %v1105
    %v1107 = vmul.f32 1.0, %v1106
    %v1108 = vadd.f32 %v1097, %v713
    %v1109 = vmul.f32 %v1107, %v1108
    %v1110 = vadd.f32 %v1052, %v1109
    %v1111 = vtanh.pop %v1110
    %v1112 = vsub.f32 1.0, %v1107
    %1114 = vrot.lane.b32.xlu0 %v1111, 64
    %v1115 = vpop.permute.xlu0 %1114
    %v1117 = vmul.f32 %v1112, %v1115
    %v1118 = vmul.f32 %v1107, %v1044
    %v1119 = vadd.f32 %v1117, %v1118
    %1121 = vrot.lane.b32.xlu0 %v1119, 64
    %v1122 = vpop.permute.xlu0 %1121
    %1124 = vst.msk [vmem:[#allocation3 + $0x20] sm:$0xff] %vm684, %v1122
    %1125 = vst.msk [vmem:[#allocation4 + $0x18] sm:$0xff] %vm684, %v1122
    %v1126 = vld [vmem:[#allocation2 + $0x50] sm:$0xff]
    %v1127 = vld [vmem:[#allocation2 + $0x58] sm:$0xff]
    %v1128 = vpack.c.bf16 %v1119, %v1119
    %1130 = vrot.lane.b32.xlu0 %v1128, 64
    %v1131 = vpop.permute.xlu0 %1130
    %v1133 = vsel %vm684, %v1131, 0
    %1135 = vmatprep.subr.bf16.mxu0 %v742
    %1136 = vmatpush1.bf16.msra.mxu0 %v741
    %1137 = vmatprep.subr.bf16.mxu0 %v744
    %1138 = vmatpush1.bf16.msra.mxu0 %v743
    %1139 = vmatprep.subr.bf16.mxu0 %v746
    %1140 = vmatpush1.bf16.msra.mxu0 %v745
    %1141 = vmatprep.subr.bf16.mxu0 %v748
    %1142 = vmatpush1.bf16.msra.mxu0 %v747
    %1143 = vmatprep.subr.bf16.mxu0 0
    %1144 = vmatpush1.bf16.msra.mxu0 0
    %1145 = vmatprep.subr.bf16.mxu0 0
    %1146 = vmatpush1.bf16.msra.mxu0 0
    %1147 = vmatprep.subr.bf16.mxu0 0
    %1148 = vmatpush1.bf16.msra.mxu0 0
    %1149 = vmatprep.subr.bf16.mxu0 0
    %1150 = vmatpush1.bf16.msra.mxu0 0
    %1151 = vmatprep.subr.bf16.mxu0 0
    %1152 = vmatpush1.bf16.msra.mxu0 0
    %1153 = vmatprep.subr.bf16.mxu0 0
    %1154 = vmatpush1.bf16.msra.mxu0 0
    %1155 = vmatprep.subr.bf16.mxu0 0
    %1156 = vmatpush1.bf16.msra.mxu0 0
    %1157 = vmatprep.subr.bf16.mxu0 0
    %1158 = vmatpush1.bf16.msra.mxu0 0
    %1159 = vmatprep.subr.bf16.mxu0 0
    %1160 = vmatpush1.bf16.msra.mxu0 0
    %1161 = vmatprep.subr.bf16.mxu0 0
    %1162 = vmatpush1.bf16.msra.mxu0 0
    %1163 = vmatprep.subr.bf16.mxu0 0
    %1164 = vmatpush1.bf16.msra.mxu0 0
    %1165 = vmatprep.subr.bf16.mxu0 0
    %1166 = vmatpush1.bf16.msra.mxu0 0
    %1167 = vmatprep.mubr.bf16.mxu0 0
    %1168 = vmatmul.mubr.bf16.gmra.mrb[0].mxu0 %v1133
    %v1169 = vpop.f32.mrb[0].mxu0
    %v1170 = vadd.f32 0.0, %v1169
    %v1171 = vpop.f32.mrb[0].mxu0
    %v1172 = vadd.f32 0.0, %v1171
    %v1173 = vpop.f32.mrb[0].mxu0
    %v1174 = vpop.f32.mrb[0].mxu0
    %1175 = vdwg.mxu0
    %v1176 = vadd.f32 %v1126, %v1170
    %v1177 = vxor.u32 %v1176, 2147483648
    %v1178 = vmul.f32 %v1177, 1.442695
    %v1179 = vpow.pop %v1178
    %v1180 = vadd.f32 %v1179, 1.0
    %v1181 = vrcp.pop %v1180
    %v1182 = vmul.f32 1.0, %v1181
    %v1183 = vadd.f32 %v1172, %v713
    %v1184 = vmul.f32 %v1182, %v1183
    %v1185 = vadd.f32 %v1127, %v1184
    %v1186 = vtanh.pop %v1185
    %v1187 = vsub.f32 1.0, %v1182
    %1189 = vrot.lane.b32.xlu0 %v1186, 64
    %v1190 = vpop.permute.xlu0 %1189
    %v1192 = vmul.f32 %v1187, %v1190
    %v1193 = vmul.f32 %v1182, %v1119
    %v1194 = vadd.f32 %v1192, %v1193
    %1196 = vrot.lane.b32.xlu0 %v1194, 64
    %v1197 = vpop.permute.xlu0 %1196
    %1199 = vst.msk [vmem:[#allocation3 + $0x28] sm:$0xff] %vm684, %v1197
    %1200 = vst.msk [vmem:[#allocation4 + $0x10] sm:$0xff] %vm684, %v1197
    %v1201 = vld [vmem:[#allocation2 + $0x60] sm:$0xff]
    %v1202 = vld [vmem:[#allocation2 + $0x68] sm:$0xff]
    %v1203 = vpack.c.bf16 %v1194, %v1194
    %1205 = vrot.lane.b32.xlu0 %v1203, 64
    %v1206 = vpop.permute.xlu0 %1205
    %v1208 = vsel %vm684, %v1206, 0
    %1210 = vmatprep.subr.bf16.mxu0 %v742
    %1211 = vmatpush1.bf16.msra.mxu0 %v741
    %1212 = vmatprep.subr.bf16.mxu0 %v744
    %1213 = vmatpush1.bf16.msra.mxu0 %v743
    %1214 = vmatprep.subr.bf16.mxu0 %v746
    %1215 = vmatpush1.bf16.msra.mxu0 %v745
    %1216 = vmatprep.subr.bf16.mxu0 %v748
    %1217 = vmatpush1.bf16.msra.mxu0 %v747
    %1218 = vmatprep.subr.bf16.mxu0 0
    %1219 = vmatpush1.bf16.msra.mxu0 0
    %1220 = vmatprep.subr.bf16.mxu0 0
    %1221 = vmatpush1.bf16.msra.mxu0 0
    %1222 = vmatprep.subr.bf16.mxu0 0
    %1223 = vmatpush1.bf16.msra.mxu0 0
    %1224 = vmatprep.subr.bf16.mxu0 0
    %1225 = vmatpush1.bf16.msra.mxu0 0
    %1226 = vmatprep.subr.bf16.mxu0 0
    %1227 = vmatpush1.bf16.msra.mxu0 0
    %1228 = vmatprep.subr.bf16.mxu0 0
    %1229 = vmatpush1.bf16.msra.mxu0 0
    %1230 = vmatprep.subr.bf16.mxu0 0
    %1231 = vmatpush1.bf16.msra.mxu0 0
    %1232 = vmatprep.subr.bf16.mxu0 0
    %1233 = vmatpush1.bf16.msra.mxu0 0
    %1234 = vmatprep.subr.bf16.mxu0 0
    %1235 = vmatpush1.bf16.msra.mxu0 0
    %1236 = vmatprep.subr.bf16.mxu0 0
    %1237 = vmatpush1.bf16.msra.mxu0 0
    %1238 = vmatprep.subr.bf16.mxu0 0
    %1239 = vmatpush1.bf16.msra.mxu0 0
    %1240 = vmatprep.subr.bf16.mxu0 0
    %1241 = vmatpush1.bf16.msra.mxu0 0
    %1242 = vmatprep.mubr.bf16.mxu0 0
    %1243 = vmatmul.mubr.bf16.gmra.mrb[0].mxu0 %v1208
    %v1244 = vpop.f32.mrb[0].mxu0
    %v1245 = vadd.f32 0.0, %v1244
    %v1246 = vpop.f32.mrb[0].mxu0
    %v1247 = vadd.f32 0.0, %v1246
    %v1248 = vpop.f32.mrb[0].mxu0
    %v1249 = vpop.f32.mrb[0].mxu0
    %1250 = vdwg.mxu0
    %v1251 = vadd.f32 %v1201, %v1245
    %v1252 = vxor.u32 %v1251, 2147483648
    %v1253 = vmul.f32 %v1252, 1.442695
    %v1254 = vpow.pop %v1253
    %v1255 = vadd.f32 %v1254, 1.0
    %v1256 = vrcp.pop %v1255
    %v1257 = vmul.f32 1.0, %v1256
    %v1258 = vadd.f32 %v1247, %v713
    %v1259 = vmul.f32 %v1257, %v1258
    %v1260 = vadd.f32 %v1202, %v1259
    %v1261 = vtanh.pop %v1260
    %v1262 = vsub.f32 1.0, %v1257
    %1264 = vrot.lane.b32.xlu0 %v1261, 64
    %v1265 = vpop.permute.xlu0 %1264
    %v1267 = vmul.f32 %v1262, %v1265
    %v1268 = vmul.f32 %v1257, %v1194
    %v1269 = vadd.f32 %v1267, %v1268
    %1271 = vrot.lane.b32.xlu0 %v1269, 64
    %v1272 = vpop.permute.xlu0 %1271
    %1274 = vst.msk [vmem:[#allocation3 + $0x30] sm:$0xff] %vm684, %v1272
    %1275 = vst.msk [vmem:[#allocation4 + $0x8] sm:$0xff] %vm684, %v1272
    %v1276 = vld [vmem:[#allocation2 + $0x70] sm:$0xff]
    %v1277 = vld [vmem:[#allocation2 + $0x78] sm:$0xff]
    %v1278 = vpack.c.bf16 %v1269, %v1269
    %1280 = vrot.lane.b32.xlu0 %v1278, 64
    %v1281 = vpop.permute.xlu0 %1280
    %v1283 = vsel %vm684, %v1281, 0
    %1285 = vmatprep.subr.bf16.mxu0 %v742
    %1286 = vmatpush1.bf16.msra.mxu0 %v741
    %1287 = vmatprep.subr.bf16.mxu0 %v744
    %1288 = vmatpush1.bf16.msra.mxu0 %v743
    %1289 = vmatprep.subr.bf16.mxu0 %v746
    %1290 = vmatpush1.bf16.msra.mxu0 %v745
    %1291 = vmatprep.subr.bf16.mxu0 %v748
    %1292 = vmatpush1.bf16.msra.mxu0 %v747
    %1293 = vmatprep.subr.bf16.mxu0 0
    %1294 = vmatpush1.bf16.msra.mxu0 0
    %1295 = vmatprep.subr.bf16.mxu0 0
    %1296 = vmatpush1.bf16.msra.mxu0 0
    %1297 = vmatprep.subr.bf16.mxu0 0
    %1298 = vmatpush1.bf16.msra.mxu0 0
    %1299 = vmatprep.subr.bf16.mxu0 0
    %1300 = vmatpush1.bf16.msra.mxu0 0
    %1301 = vmatprep.subr.bf16.mxu0 0
    %1302 = vmatpush1.bf16.msra.mxu0 0
    %1303 = vmatprep.subr.bf16.mxu0 0
    %1304 = vmatpush1.bf16.msra.mxu0 0
    %1305 = vmatprep.subr.bf16.mxu0 0
    %1306 = vmatpush1.bf16.msra.mxu0 0
    %1307 = vmatprep.subr.bf16.mxu0 0
    %1308 = vmatpush1.bf16.msra.mxu0 0
    %1309 = vmatprep.subr.bf16.mxu0 0
    %1310 = vmatpush1.bf16.msra.mxu0 0
    %1311 = vmatprep.subr.bf16.mxu0 0
    %1312 = vmatpush1.bf16.msra.mxu0 0
    %1313 = vmatprep.subr.bf16.mxu0 0
    %1314 = vmatpush1.bf16.msra.mxu0 0
    %1315 = vmatprep.subr.bf16.mxu0 0
    %1316 = vmatpush1.bf16.msra.mxu0 0
    %1317 = vmatprep.mubr.bf16.mxu0 0
    %1318 = vmatmul.mubr.bf16.gmra.mrb[0].mxu0 %v1283
    %v1319 = vpop.f32.mrb[0].mxu0
    %v1320 = vadd.f32 0.0, %v1319
    %v1321 = vpop.f32.mrb[0].mxu0
    %v1322 = vadd.f32 0.0, %v1321
    %v1323 = vpop.f32.mrb[0].mxu0
    %v1324 = vpop.f32.mrb[0].mxu0
    %1325 = vdwg.mxu0
    %v1326 = vadd.f32 %v1276, %v1320
    %v1327 = vxor.u32 %v1326, 2147483648
    %v1328 = vmul.f32 %v1327, 1.442695
    %v1329 = vpow.pop %v1328
    %v1330 = vadd.f32 %v1329, 1.0
    %v1331 = vrcp.pop %v1330
    %v1332 = vmul.f32 1.0, %v1331
    %v1333 = vadd.f32 %v1322, %v713
    %v1334 = vmul.f32 %v1332, %v1333
    %v1335 = vadd.f32 %v1277, %v1334
    %v1336 = vtanh.pop %v1335
    %v1337 = vsub.f32 1.0, %v1332
    %1339 = vrot.lane.b32.xlu0 %v1336, 64
    %v1340 = vpop.permute.xlu0 %1339
    %v1342 = vmul.f32 %v1337, %v1340
    %v1343 = vmul.f32 %v1332, %v1269
    %v1344 = vadd.f32 %v1342, %v1343
    %1346 = vrot.lane.b32.xlu0 %v1344, 64
    %v1347 = vpop.permute.xlu0 %1346
    %1349 = vst.msk [vmem:[#allocation3 + $0x38] sm:$0xff] %vm684, %v1347
    %1350 = vst.msk [vmem:[#allocation4] sm:$0xff] %vm684, %v1347
    %v1351 = vld [vmem:[#allocation3] sm:$0xff]
    %v1352 = vld [vmem:[#allocation3 + $0x8] sm:$0xff]
    %v1353 = vld [vmem:[#allocation3 + $0x10] sm:$0xff]
    %v1354 = vld [vmem:[#allocation3 + $0x18] sm:$0xff]
    %v1355 = vld [vmem:[#allocation3 + $0x20] sm:$0xff]
    %v1356 = vld [vmem:[#allocation3 + $0x28] sm:$0xff]
    %v1357 = vld [vmem:[#allocation3 + $0x30] sm:$0xff]
    %v1358 = vld [vmem:[#allocation3 + $0x38] sm:$0xff]
    %v1359 = vpack.c.bf16 %v1352, %v1351
    %v1360 = vpack.c.bf16 %v1354, %v1353
    %v1361 = vpack.c.bf16 %v1356, %v1355
    %v1362 = vpack.c.bf16 %v1358, %v1357
    %v1363 = vld [vmem:[#allocation4] sm:$0xff]
    %v1364 = vld [vmem:[#allocation4 + $0x8] sm:$0xff]
    %v1365 = vld [vmem:[#allocation4 + $0x10] sm:$0xff]
    %v1366 = vld [vmem:[#allocation4 + $0x18] sm:$0xff]
    %v1367 = vld [vmem:[#allocation4 + $0x20] sm:$0xff]
    %v1368 = vld [vmem:[#allocation4 + $0x28] sm:$0xff]
    %v1369 = vld [vmem:[#allocation4 + $0x30] sm:$0xff]
    %v1370 = vld [vmem:[#allocation4 + $0x38] sm:$0xff]
    %v1371 = vpack.c.bf16 %v1364, %v1363
    %v1372 = vpack.c.bf16 %v1366, %v1365
    %v1373 = vpack.c.bf16 %v1368, %v1367
    %v1374 = vpack.c.bf16 %v1370, %v1369
    %v1375 = vld [vmem:[#allocation13] sm:$0xff]
    %v1376 = vld [vmem:[#allocation13 + $0x8] sm:$0xff]
    %v1377 = vld [vmem:[#allocation13 + $0x10] sm:$0xff]
    %v1378 = vld [vmem:[#allocation13 + $0x18] sm:$0xff]
    %v1379 = vld [vmem:[#allocation13 + $0x20] sm:$0xff]
    %v1380 = vld [vmem:[#allocation13 + $0x28] sm:$0xff]
    %v1381 = vld [vmem:[#allocation13 + $0x30] sm:$0xff]
    %v1382 = vld [vmem:[#allocation13 + $0x38] sm:$0xff]
    %v1383 = vld [vmem:[#allocation14] sm:$0xff]
    %v1384 = vld [vmem:[#allocation14 + $0x8] sm:$0xff]
    %v1385 = vld [vmem:[#allocation14 + $0x10] sm:$0xff]
    %v1386 = vld [vmem:[#allocation14 + $0x18] sm:$0xff]
    %v1387 = vld [vmem:[#allocation14 + $0x20] sm:$0xff]
    %v1388 = vld [vmem:[#allocation14 + $0x28] sm:$0xff]
    %v1389 = vld [vmem:[#allocation14 + $0x30] sm:$0xff]
    %v1390 = vld [vmem:[#allocation14 + $0x38] sm:$0xff]
    %v1399 = vunpack.c.l.b16 %v1383
    %v1400 = vunpack.c.h.b16 %v1383
    %v1401 = vunpack.c.l.b16 %v1384
    %v1402 = vunpack.c.h.b16 %v1384
    %v1403 = vunpack.c.l.b16 %v1385
    %v1404 = vunpack.c.h.b16 %v1385
    %v1405 = vunpack.c.l.b16 %v1386
    %v1406 = vunpack.c.h.b16 %v1386
    %v1407 = vunpack.c.l.b16 %v1387
    %v1408 = vunpack.c.h.b16 %v1387
    %v1409 = vunpack.c.l.b16 %v1388
    %v1410 = vunpack.c.h.b16 %v1388
    %v1411 = vunpack.c.l.b16 %v1389
    %v1412 = vunpack.c.h.b16 %v1389
    %v1413 = vunpack.c.l.b16 %v1390
    %v1414 = vunpack.c.h.b16 %v1390
    %v1415 = vpack.c.b16 %v1401, %v1399
    %v1416 = vpack.c.b16 %v1402, %v1400
    %v1417 = vpack.c.b16 %v1405, %v1403
    %v1418 = vpack.c.b16 %v1406, %v1404
    %v1419 = vpack.c.b16 %v1409, %v1407
    %v1420 = vpack.c.b16 %v1410, %v1408
    %v1421 = vpack.c.b16 %v1413, %v1411
    %v1422 = vpack.c.b16 %v1414, %v1412
    %v1432 = vsel %vm684, %v1371, 0
    %v1435 = vsel %vm684, %v1372, 0
    %v1438 = vsel %vm684, %v1373, 0
    %v1441 = vsel %vm684, %v1374, 0
    %1443 = vmatprep.subr.bf16.mxu0 %v1416
    %1444 = vmatpush1.bf16.msra.mxu0 %v1415
    %1445 = vmatprep.subr.bf16.mxu0 %v1418
    %1446 = vmatpush1.bf16.msra.mxu0 %v1417
    %1447 = vmatprep.subr.bf16.mxu0 %v1420
    %1448 = vmatpush1.bf16.msra.mxu0 %v1419
    %1449 = vmatprep.subr.bf16.mxu0 %v1422
    %1450 = vmatpush1.bf16.msra.mxu0 %v1421
    %1451 = vmatprep.subr.bf16.mxu0 0
    %1452 = vmatpush1.bf16.msra.mxu0 0
    %1453 = vmatprep.subr.bf16.mxu0 0
    %1454 = vmatpush1.bf16.msra.mxu0 0
    %1455 = vmatprep.subr.bf16.mxu0 0
    %1456 = vmatpush1.bf16.msra.mxu0 0
    %1457 = vmatprep.subr.bf16.mxu0 0
    %1458 = vmatpush1.bf16.msra.mxu0 0
    %1459 = vmatprep.subr.bf16.mxu0 0
    %1460 = vmatpush1.bf16.msra.mxu0 0
    %1461 = vmatprep.subr.bf16.mxu0 0
    %1462 = vmatpush1.bf16.msra.mxu0 0
    %1463 = vmatprep.subr.bf16.mxu0 0
    %1464 = vmatpush1.bf16.msra.mxu0 0
    %1465 = vmatprep.subr.bf16.mxu0 0
    %1466 = vmatpush1.bf16.msra.mxu0 0
    %1467 = vmatprep.subr.bf16.mxu0 0
    %1468 = vmatpush1.bf16.msra.mxu0 0
    %1469 = vmatprep.subr.bf16.mxu0 0
    %1470 = vmatpush1.bf16.msra.mxu0 0
    %1471 = vmatprep.subr.bf16.mxu0 0
    %1472 = vmatpush1.bf16.msra.mxu0 0
    %1473 = vmatprep.subr.bf16.mxu0 0
    %1474 = vmatpush1.bf16.msra.mxu0 0
    %1475 = vmatprep.mubr.bf16.mxu0 0
    %1476 = vmatmul.mubr.bf16.gmra.mrb[0].mxu0 %v1432
    %v1477 = vpop.f32.mrb[0].mxu0
    %v1478 = vadd.f32 0.0, %v1477
    %v1479 = vpop.f32.mrb[0].mxu0
    %v1480 = vadd.f32 0.0, %v1479
    %v1481 = vpop.f32.mrb[0].mxu0
    %v1482 = vadd.f32 0.0, %v1481
    %v1483 = vpop.f32.mrb[0].mxu0
    %v1484 = vadd.f32 0.0, %v1483
    %1485 = vmatprep.mubr.bf16.mxu0 0
    %1486 = vmatmul.mubr.bf16.gmra.mrb[0].mxu0 %v1435
    %v1487 = vpop.f32.mrb[0].mxu0
    %v1488 = vadd.f32 0.0, %v1487
    %v1489 = vpop.f32.mrb[0].mxu0
    %v1490 = vadd.f32 0.0, %v1489
    %v1491 = vpop.f32.mrb[0].mxu0
    %v1492 = vadd.f32 0.0, %v1491
    %v1493 = vpop.f32.mrb[0].mxu0
    %v1494 = vadd.f32 0.0, %v1493
    %1495 = vmatprep.mubr.bf16.mxu0 0
    %1496 = vmatmul.mubr.bf16.gmra.mrb[0].mxu0 %v1438
    %v1497 = vpop.f32.mrb[0].mxu0
    %v1498 = vadd.f32 0.0, %v1497
    %v1499 = vpop.f32.mrb[0].mxu0
    %v1500 = vadd.f32 0.0, %v1499
    %v1501 = vpop.f32.mrb[0].mxu0
    %v1502 = vadd.f32 0.0, %v1501
    %v1503 = vpop.f32.mrb[0].mxu0
    %v1504 = vadd.f32 0.0, %v1503
    %1505 = vmatprep.mubr.bf16.mxu0 0
    %1506 = vmatmul.mubr.bf16.gmra.mrb[0].mxu0 %v1441
    %v1507 = vpop.f32.mrb[0].mxu0
    %v1508 = vadd.f32 0.0, %v1507
    %v1509 = vpop.f32.mrb[0].mxu0
    %v1510 = vadd.f32 0.0, %v1509
    %v1511 = vpop.f32.mrb[0].mxu0
    %v1512 = vadd.f32 0.0, %v1511
    %v1513 = vpop.f32.mrb[0].mxu0
    %v1514 = vadd.f32 0.0, %v1513
    %1515 = vdwg.mxu0
    %v1524 = vunpack.c.l.b16 %v1375
    %v1525 = vunpack.c.h.b16 %v1375
    %v1526 = vunpack.c.l.b16 %v1376
    %v1527 = vunpack.c.h.b16 %v1376
    %v1528 = vunpack.c.l.b16 %v1377
    %v1529 = vunpack.c.h.b16 %v1377
    %v1530 = vunpack.c.l.b16 %v1378
    %v1531 = vunpack.c.h.b16 %v1378
    %v1532 = vunpack.c.l.b16 %v1379
    %v1533 = vunpack.c.h.b16 %v1379
    %v1534 = vunpack.c.l.b16 %v1380
    %v1535 = vunpack.c.h.b16 %v1380
    %v1536 = vunpack.c.l.b16 %v1381
    %v1537 = vunpack.c.h.b16 %v1381
    %v1538 = vunpack.c.l.b16 %v1382
    %v1539 = vunpack.c.h.b16 %v1382
    %v1540 = vpack.c.b16 %v1526, %v1524
    %v1541 = vpack.c.b16 %v1527, %v1525
    %v1542 = vpack.c.b16 %v1530, %v1528
    %v1543 = vpack.c.b16 %v1531, %v1529
    %v1544 = vpack.c.b16 %v1534, %v1532
    %v1545 = vpack.c.b16 %v1535, %v1533
    %v1546 = vpack.c.b16 %v1538, %v1536
    %v1547 = vpack.c.b16 %v1539, %v1537
    %v1557 = vsel %vm684, %v1359, 0
    %v1560 = vsel %vm684, %v1360, 0
    %v1563 = vsel %vm684, %v1361, 0
    %v1566 = vsel %vm684, %v1362, 0
    %1568 = vmatprep.subr.bf16.mxu0 %v1541
    %1569 = vmatpush1.bf16.msra.mxu0 %v1540
    %1570 = vmatprep.subr.bf16.mxu0 %v1543
    %1571 = vmatpush1.bf16.msra.mxu0 %v1542
    %1572 = vmatprep.subr.bf16.mxu0 %v1545
    %1573 = vmatpush1.bf16.msra.mxu0 %v1544
    %1574 = vmatprep.subr.bf16.mxu0 %v1547
    %1575 = vmatpush1.bf16.msra.mxu0 %v1546
    %1576 = vmatprep.subr.bf16.mxu0 0
    %1577 = vmatpush1.bf16.msra.mxu0 0
    %1578 = vmatprep.subr.bf16.mxu0 0
    %1579 = vmatpush1.bf16.msra.mxu0 0
    %1580 = vmatprep.subr.bf16.mxu0 0
    %1581 = vmatpush1.bf16.msra.mxu0 0
    %1582 = vmatprep.subr.bf16.mxu0 0
    %1583 = vmatpush1.bf16.msra.mxu0 0
    %1584 = vmatprep.subr.bf16.mxu0 0
    %1585 = vmatpush1.bf16.msra.mxu0 0
    %1586 = vmatprep.subr.bf16.mxu0 0
    %1587 = vmatpush1.bf16.msra.mxu0 0
    %1588 = vmatprep.subr.bf16.mxu0 0
    %1589 = vmatpush1.bf16.msra.mxu0 0
    %1590 = vmatprep.subr.bf16.mxu0 0
    %1591 = vmatpush1.bf16.msra.mxu0 0
    %1592 = vmatprep.subr.bf16.mxu0 0
    %1593 = vmatpush1.bf16.msra.mxu0 0
    %1594 = vmatprep.subr.bf16.mxu0 0
    %1595 = vmatpush1.bf16.msra.mxu0 0
    %1596 = vmatprep.subr.bf16.mxu0 0
    %1597 = vmatpush1.bf16.msra.mxu0 0
    %1598 = vmatprep.subr.bf16.mxu0 0
    %1599 = vmatpush1.bf16.msra.mxu0 0
    %1600 = vmatprep.mubr.bf16.mxu0 0
    %1601 = vmatmul.mubr.bf16.gmra.mrb[0].mxu0 %v1557
    %v1602 = vpop.f32.mrb[0].mxu0
    %v1603 = vadd.f32 %v1478, %v1602
    %v1604 = vpop.f32.mrb[0].mxu0
    %v1605 = vadd.f32 %v1480, %v1604
    %v1606 = vpop.f32.mrb[0].mxu0
    %v1607 = vadd.f32 %v1482, %v1606
    %v1608 = vpop.f32.mrb[0].mxu0
    %v1609 = vadd.f32 %v1484, %v1608
    %1610 = vmatprep.mubr.bf16.mxu0 0
    %1611 = vmatmul.mubr.bf16.gmra.mrb[0].mxu0 %v1560
    %v1612 = vpop.f32.mrb[0].mxu0
    %v1613 = vadd.f32 %v1488, %v1612
    %v1614 = vpop.f32.mrb[0].mxu0
    %v1615 = vadd.f32 %v1490, %v1614
    %v1616 = vpop.f32.mrb[0].mxu0
    %v1617 = vadd.f32 %v1492, %v1616
    %v1618 = vpop.f32.mrb[0].mxu0
    %v1619 = vadd.f32 %v1494, %v1618
    %1620 = vmatprep.mubr.bf16.mxu0 0
    %1621 = vmatmul.mubr.bf16.gmra.mrb[0].mxu0 %v1563
    %v1622 = vpop.f32.mrb[0].mxu0
    %v1623 = vadd.f32 %v1498, %v1622
    %v1624 = vpop.f32.mrb[0].mxu0
    %v1625 = vadd.f32 %v1500, %v1624
    %v1626 = vpop.f32.mrb[0].mxu0
    %v1627 = vadd.f32 %v1502, %v1626
    %v1628 = vpop.f32.mrb[0].mxu0
    %v1629 = vadd.f32 %v1504, %v1628
    %1630 = vmatprep.mubr.bf16.mxu0 0
    %1631 = vmatmul.mubr.bf16.gmra.mrb[0].mxu0 %v1566
    %v1632 = vpop.f32.mrb[0].mxu0
    %v1633 = vadd.f32 %v1508, %v1632
    %v1634 = vpop.f32.mrb[0].mxu0
    %v1635 = vadd.f32 %v1510, %v1634
    %v1636 = vpop.f32.mrb[0].mxu0
    %v1637 = vadd.f32 %v1512, %v1636
    %v1638 = vpop.f32.mrb[0].mxu0
    %v1639 = vadd.f32 %v1514, %v1638
    %1640 = vdwg.mxu0
    %v1641 = vld [vmem:[#allocation16] sm:$0x3]
    %v1643 = vlaneseq
    %v1644 = vshrl.u32 %v1643, 7
    %v1645 = vsub.s32 0, %v1644
    %v1646 = vrot.slane %v1641, %v1645
    %v1647 = vlaneseq
    %v1648 = vshrl.u32 %v1647, 7
    %v1649 = vsub.s32 1, %v1648
    %v1650 = vrot.slane %v1641, %v1649
    %v1653 = vadd.f32 %v1603, %v1646
    %v1654 = vadd.f32 %v1605, %v1650
    %v1655 = vadd.f32 %v1607, %v1646
    %v1656 = vadd.f32 %v1609, %v1650
    %v1657 = vadd.f32 %v1613, %v1646
    %v1658 = vadd.f32 %v1615, %v1650
    %v1659 = vadd.f32 %v1617, %v1646
    %v1660 = vadd.f32 %v1619, %v1650
    %v1661 = vadd.f32 %v1623, %v1646
    %v1662 = vadd.f32 %v1625, %v1650
    %v1663 = vadd.f32 %v1627, %v1646
    %v1664 = vadd.f32 %v1629, %v1650
    %v1665 = vadd.f32 %v1633, %v1646
    %v1666 = vadd.f32 %v1635, %v1650
    %v1667 = vadd.f32 %v1637, %v1646
    %v1668 = vadd.f32 %v1639, %v1650
    %1669 = vst [vmem:[#allocation2] sm:$0xff] %v1653
    %1670 = vst.msk [vmem:[#allocation2 + $0x8] sm:$0xff] %vm684, %v1654
    %1671 = vst [vmem:[#allocation2 + $0x10] sm:$0xff] %v1655
    %1672 = vst.msk [vmem:[#allocation2 + $0x18] sm:$0xff] %vm684, %v1656
    %1673 = vst [vmem:[#allocation2 + $0x20] sm:$0xff] %v1657
    %1674 = vst.msk [vmem:[#allocation2 + $0x28] sm:$0xff] %vm684, %v1658
    %1675 = vst [vmem:[#allocation2 + $0x30] sm:$0xff] %v1659
    %1676 = vst.msk [vmem:[#allocation2 + $0x38] sm:$0xff] %vm684, %v1660
    %1677 = vst [vmem:[#allocation2 + $0x40] sm:$0xff] %v1661
    %1678 = vst.msk [vmem:[#allocation2 + $0x48] sm:$0xff] %vm684, %v1662
    %1679 = vst [vmem:[#allocation2 + $0x50] sm:$0xff] %v1663
    %1680 = vst.msk [vmem:[#allocation2 + $0x58] sm:$0xff] %vm684, %v1664
    %1681 = vst [vmem:[#allocation2 + $0x60] sm:$0xff] %v1665
    %1682 = vst.msk [vmem:[#allocation2 + $0x68] sm:$0xff] %vm684, %v1666
    %1683 = vst [vmem:[#allocation2 + $0x70] sm:$0xff] %v1667
    %1684 = vst.msk [vmem:[#allocation2 + $0x78] sm:$0xff] %vm684, %v1668
    %v1685 = vld [vmem:[#allocation17] sm:$0xff]
    %v1686 = vld [vmem:[#allocation17 + $0x8] sm:$0xff]
    %v1687 = vld [vmem:[#allocation17 + $0x10] sm:$0xff]
    %v1688 = vld [vmem:[#allocation17 + $0x18] sm:$0xff]
    %v1689 = vld [vmem:[#allocation17 + $0x20] sm:$0xff]
    %v1690 = vld [vmem:[#allocation17 + $0x28] sm:$0xff]
    %v1691 = vld [vmem:[#allocation17 + $0x30] sm:$0xff]
    %v1692 = vld [vmem:[#allocation17 + $0x38] sm:$0xff]
    %v1693 = vld [vmem:[#allocation19] sm:$0x1]
    %v1695 = vlaneseq
    %v1696 = vshrl.u32 %v1695, 7
    %v1697 = vsub.s32 0, %v1696
    %v1698 = vrot.slane %v1693, %v1697
    %v1700 = vld [vmem:[#allocation2] sm:$0xff]
    %v1701 = vld [vmem:[#allocation2 + $0x8] sm:$0xff]
    %v1710 = vunpack.c.l.b16 %v1685
    %v1711 = vunpack.c.h.b16 %v1685
    %v1712 = vunpack.c.l.b16 %v1686
    %v1713 = vunpack.c.h.b16 %v1686
    %v1714 = vunpack.c.l.b16 %v1687
    %v1715 = vunpack.c.h.b16 %v1687
    %v1716 = vunpack.c.l.b16 %v1688
    %v1717 = vunpack.c.h.b16 %v1688
    %v1718 = vunpack.c.l.b16 %v1689
    %v1719 = vunpack.c.h.b16 %v1689
    %v1720 = vunpack.c.l.b16 %v1690
    %v1721 = vunpack.c.h.b16 %v1690
    %v1722 = vunpack.c.l.b16 %v1691
    %v1723 = vunpack.c.h.b16 %v1691
    %v1724 = vunpack.c.l.b16 %v1692
    %v1725 = vunpack.c.h.b16 %v1692
    %v1726 = vpack.c.b16 %v1712, %v1710
    %v1727 = vpack.c.b16 %v1713, %v1711
    %v1728 = vpack.c.b16 %v1716, %v1714
    %v1729 = vpack.c.b16 %v1717, %v1715
    %v1730 = vpack.c.b16 %v1720, %v1718
    %v1731 = vpack.c.b16 %v1721, %v1719
    %v1732 = vpack.c.b16 %v1724, %v1722
    %v1733 = vpack.c.b16 %v1725, %v1723
    %1742 = vmatprep.subr.bf16.mxu0 %v1727
    %1743 = vmatpush1.bf16.msra.mxu0 %v1726
    %1744 = vmatprep.subr.bf16.mxu0 %v1729
    %1745 = vmatpush1.bf16.msra.mxu0 %v1728
    %1746 = vmatprep.subr.bf16.mxu0 %v1731
    %1747 = vmatpush1.bf16.msra.mxu0 %v1730
    %1748 = vmatprep.subr.bf16.mxu0 %v1733
    %1749 = vmatpush1.bf16.msra.mxu0 %v1732
    %1750 = vmatprep.subr.bf16.mxu0 0
    %1751 = vmatpush1.bf16.msra.mxu0 0
    %1752 = vmatprep.subr.bf16.mxu0 0
    %1753 = vmatpush1.bf16.msra.mxu0 0
    %1754 = vmatprep.subr.bf16.mxu0 0
    %1755 = vmatpush1.bf16.msra.mxu0 0
    %1756 = vmatprep.subr.bf16.mxu0 0
    %1757 = vmatpush1.bf16.msra.mxu0 0
    %1758 = vmatprep.subr.bf16.mxu0 0
    %1759 = vmatpush1.bf16.msra.mxu0 0
    %1760 = vmatprep.subr.bf16.mxu0 0
    %1761 = vmatpush1.bf16.msra.mxu0 0
    %1762 = vmatprep.subr.bf16.mxu0 0
    %1763 = vmatpush1.bf16.msra.mxu0 0
    %1764 = vmatprep.subr.bf16.mxu0 0
    %1765 = vmatpush1.bf16.msra.mxu0 0
    %1766 = vmatprep.subr.bf16.mxu0 0
    %1767 = vmatpush1.bf16.msra.mxu0 0
    %1768 = vmatprep.subr.bf16.mxu0 0
    %1769 = vmatpush1.bf16.msra.mxu0 0
    %1770 = vmatprep.subr.bf16.mxu0 0
    %1771 = vmatpush1.bf16.msra.mxu0 0
    %1772 = vmatprep.subr.bf16.mxu0 0
    %1773 = vmatpush1.bf16.msra.mxu0 0
    %1774 = vmatprep.mubr.bf16.mxu0 0
    %1775 = vmatmul.mubr.bf16.gmra.mrb[0].mxu0 %v758
    %v1776 = vpop.f32.mrb[0].mxu0
    %v1777 = vadd.f32 0.0, %v1776
    %v1778 = vpop.f32.mrb[0].mxu0
    %v1779 = vadd.f32 0.0, %v1778
    %v1780 = vpop.f32.mrb[0].mxu0
    %v1781 = vpop.f32.mrb[0].mxu0
    %1782 = vdwg.mxu0
    %v1783 = vadd.f32 %v1700, %v1777
    %v1784 = vxor.u32 %v1783, 2147483648
    %v1785 = vmul.f32 %v1784, 1.442695
    %v1786 = vpow.pop %v1785
    %v1787 = vadd.f32 %v1786, 1.0
    %v1788 = vrcp.pop %v1787
    %v1789 = vmul.f32 1.0, %v1788
    %v1790 = vadd.f32 %v1779, %v1698
    %v1791 = vmul.f32 %v1789, %v1790
    %v1792 = vadd.f32 %v1701, %v1791
    %v1793 = vtanh.pop %v1792
    %v1794 = vsub.f32 1.0, %v1789
    %1796 = vrot.lane.b32.xlu0 %v1793, 64
    %v1797 = vpop.permute.xlu0 %1796
    %v1799 = vmul.f32 %v1794, %v1797
    %v1800 = vmul.f32 %v1789, 0.0
    %v1801 = vadd.f32 %v1799, %v1800
    %1803 = vrot.lane.b32.xlu0 %v1801, 64
    %v1804 = vpop.permute.xlu0 %1803
    %1806 = vst.msk [vmem:[#allocation3] sm:$0xff] %vm684, %v1804
    %1807 = vst.msk [vmem:[#allocation4 + $0x38] sm:$0xff] %vm684, %v1804
    %v1808 = vld [vmem:[#allocation2 + $0x10] sm:$0xff]
    %v1809 = vld [vmem:[#allocation2 + $0x18] sm:$0xff]
    %v1810 = vpack.c.bf16 %v1801, %v1801
    %1812 = vrot.lane.b32.xlu0 %v1810, 64
    %v1813 = vpop.permute.xlu0 %1812
    %v1815 = vsel %vm684, %v1813, 0
    %1817 = vmatprep.subr.bf16.mxu0 %v1727
    %1818 = vmatpush1.bf16.msra.mxu0 %v1726
    %1819 = vmatprep.subr.bf16.mxu0 %v1729
    %1820 = vmatpush1.bf16.msra.mxu0 %v1728
    %1821 = vmatprep.subr.bf16.mxu0 %v1731
    %1822 = vmatpush1.bf16.msra.mxu0 %v1730
    %1823 = vmatprep.subr.bf16.mxu0 %v1733
    %1824 = vmatpush1.bf16.msra.mxu0 %v1732
    %1825 = vmatprep.subr.bf16.mxu0 0
    %1826 = vmatpush1.bf16.msra.mxu0 0
    %1827 = vmatprep.subr.bf16.mxu0 0
    %1828 = vmatpush1.bf16.msra.mxu0 0
    %1829 = vmatprep.subr.bf16.mxu0 0
    %1830 = vmatpush1.bf16.msra.mxu0 0
    %1831 = vmatprep.subr.bf16.mxu0 0
    %1832 = vmatpush1.bf16.msra.mxu0 0
    %1833 = vmatprep.subr.bf16.mxu0 0
    %1834 = vmatpush1.bf16.msra.mxu0 0
    %1835 = vmatprep.subr.bf16.mxu0 0
    %1836 = vmatpush1.bf16.msra.mxu0 0
    %1837 = vmatprep.subr.bf16.mxu0 0
    %1838 = vmatpush1.bf16.msra.mxu0 0
    %1839 = vmatprep.subr.bf16.mxu0 0
    %1840 = vmatpush1.bf16.msra.mxu0 0
    %1841 = vmatprep.subr.bf16.mxu0 0
    %1842 = vmatpush1.bf16.msra.mxu0 0
    %1843 = vmatprep.subr.bf16.mxu0 0
    %1844 = vmatpush1.bf16.msra.mxu0 0
    %1845 = vmatprep.subr.bf16.mxu0 0
    %1846 = vmatpush1.bf16.msra.mxu0 0
    %1847 = vmatprep.subr.bf16.mxu0 0
    %1848 = vmatpush1.bf16.msra.mxu0 0
    %1849 = vmatprep.mubr.bf16.mxu0 0
    %1850 = vmatmul.mubr.bf16.gmra.mrb[0].mxu0 %v1815
    %v1851 = vpop.f32.mrb[0].mxu0
    %v1852 = vadd.f32 0.0, %v1851
    %v1853 = vpop.f32.mrb[0].mxu0
    %v1854 = vadd.f32 0.0, %v1853
    %v1855 = vpop.f32.mrb[0].mxu0
    %v1856 = vpop.f32.mrb[0].mxu0
    %1857 = vdwg.mxu0
    %v1858 = vadd.f32 %v1808, %v1852
    %v1859 = vxor.u32 %v1858, 2147483648
    %v1860 = vmul.f32 %v1859, 1.442695
    %v1861 = vpow.pop %v1860
    %v1862 = vadd.f32 %v1861, 1.0
    %v1863 = vrcp.pop %v1862
    %v1864 = vmul.f32 1.0, %v1863
    %v1865 = vadd.f32 %v1854, %v1698
    %v1866 = vmul.f32 %v1864, %v1865
    %v1867 = vadd.f32 %v1809, %v1866
    %v1868 = vtanh.pop %v1867
    %v1869 = vsub.f32 1.0, %v1864
    %1871 = vrot.lane.b32.xlu0 %v1868, 64
    %v1872 = vpop.permute.xlu0 %1871
    %v1874 = vmul.f32 %v1869, %v1872
    %v1875 = vmul.f32 %v1864, %v1801
    %v1876 = vadd.f32 %v1874, %v1875
    %1878 = vrot.lane.b32.xlu0 %v1876, 64
    %v1879 = vpop.permute.xlu0 %1878
    %1881 = vst.msk [vmem:[#allocation3 + $0x8] sm:$0xff] %vm684, %v1879
    %1882 = vst.msk [vmem:[#allocation4 + $0x30] sm:$0xff] %vm684, %v1879
    %v1883 = vld [vmem:[#allocation2 + $0x20] sm:$0xff]
    %v1884 = vld [vmem:[#allocation2 + $0x28] sm:$0xff]
    %v1885 = vpack.c.bf16 %v1876, %v1876
    %1887 = vrot.lane.b32.xlu0 %v1885, 64
    %v1888 = vpop.permute.xlu0 %1887
    %v1890 = vsel %vm684, %v1888, 0
    %1892 = vmatprep.subr.bf16.mxu0 %v1727
    %1893 = vmatpush1.bf16.msra.mxu0 %v1726
    %1894 = vmatprep.subr.bf16.mxu0 %v1729
    %1895 = vmatpush1.bf16.msra.mxu0 %v1728
    %1896 = vmatprep.subr.bf16.mxu0 %v1731
    %1897 = vmatpush1.bf16.msra.mxu0 %v1730
    %1898 = vmatprep.subr.bf16.mxu0 %v1733
    %1899 = vmatpush1.bf16.msra.mxu0 %v1732
    %1900 = vmatprep.subr.bf16.mxu0 0
    %1901 = vmatpush1.bf16.msra.mxu0 0
    %1902 = vmatprep.subr.bf16.mxu0 0
    %1903 = vmatpush1.bf16.msra.mxu0 0
    %1904 = vmatprep.subr.bf16.mxu0 0
    %1905 = vmatpush1.bf16.msra.mxu0 0
    %1906 = vmatprep.subr.bf16.mxu0 0
    %1907 = vmatpush1.bf16.msra.mxu0 0
    %1908 = vmatprep.subr.bf16.mxu0 0
    %1909 = vmatpush1.bf16.msra.mxu0 0
    %1910 = vmatprep.subr.bf16.mxu0 0
    %1911 = vmatpush1.bf16.msra.mxu0 0
    %1912 = vmatprep.subr.bf16.mxu0 0
    %1913 = vmatpush1.bf16.msra.mxu0 0
    %1914 = vmatprep.subr.bf16.mxu0 0
    %1915 = vmatpush1.bf16.msra.mxu0 0
    %1916 = vmatprep.subr.bf16.mxu0 0
    %1917 = vmatpush1.bf16.msra.mxu0 0
    %1918 = vmatprep.subr.bf16.mxu0 0
    %1919 = vmatpush1.bf16.msra.mxu0 0
    %1920 = vmatprep.subr.bf16.mxu0 0
    %1921 = vmatpush1.bf16.msra.mxu0 0
    %1922 = vmatprep.subr.bf16.mxu0 0
    %1923 = vmatpush1.bf16.msra.mxu0 0
    %1924 = vmatprep.mubr.bf16.mxu0 0
    %1925 = vmatmul.mubr.bf16.gmra.mrb[0].mxu0 %v1890
    %v1926 = vpop.f32.mrb[0].mxu0
    %v1927 = vadd.f32 0.0, %v1926
    %v1928 = vpop.f32.mrb[0].mxu0
    %v1929 = vadd.f32 0.0, %v1928
    %v1930 = vpop.f32.mrb[0].mxu0
    %v1931 = vpop.f32.mrb[0].mxu0
    %1932 = vdwg.mxu0
    %v1933 = vadd.f32 %v1883, %v1927
    %v1934 = vxor.u32 %v1933, 2147483648
    %v1935 = vmul.f32 %v1934, 1.442695
    %v1936 = vpow.pop %v1935
    %v1937 = vadd.f32 %v1936, 1.0
    %v1938 = vrcp.pop %v1937
    %v1939 = vmul.f32 1.0, %v1938
    %v1940 = vadd.f32 %v1929, %v1698
    %v1941 = vmul.f32 %v1939, %v1940
    %v1942 = vadd.f32 %v1884, %v1941
    %v1943 = vtanh.pop %v1942
    %v1944 = vsub.f32 1.0, %v1939
    %1946 = vrot.lane.b32.xlu0 %v1943, 64
    %v1947 = vpop.permute.xlu0 %1946
    %v1949 = vmul.f32 %v1944, %v1947
    %v1950 = vmul.f32 %v1939, %v1876
    %v1951 = vadd.f32 %v1949, %v1950
    %1953 = vrot.lane.b32.xlu0 %v1951, 64
    %v1954 = vpop.permute.xlu0 %1953
    %1956 = vst.msk [vmem:[#allocation3 + $0x10] sm:$0xff] %vm684, %v1954
    %1957 = vst.msk [vmem:[#allocation4 + $0x28] sm:$0xff] %vm684, %v1954
    %v1958 = vld [vmem:[#allocation2 + $0x30] sm:$0xff]
    %v1959 = vld [vmem:[#allocation2 + $0x38] sm:$0xff]
    %v1960 = vpack.c.bf16 %v1951, %v1951
    %1962 = vrot.lane.b32.xlu0 %v1960, 64
    %v1963 = vpop.permute.xlu0 %1962
    %v1965 = vsel %vm684, %v1963, 0
    %1967 = vmatprep.subr.bf16.mxu0 %v1727
    %1968 = vmatpush1.bf16.msra.mxu0 %v1726
    %1969 = vmatprep.subr.bf16.mxu0 %v1729
    %1970 = vmatpush1.bf16.msra.mxu0 %v1728
    %1971 = vmatprep.subr.bf16.mxu0 %v1731
    %1972 = vmatpush1.bf16.msra.mxu0 %v1730
    %1973 = vmatprep.subr.bf16.mxu0 %v1733
    %1974 = vmatpush1.bf16.msra.mxu0 %v1732
    %1975 = vmatprep.subr.bf16.mxu0 0
    %1976 = vmatpush1.bf16.msra.mxu0 0
    %1977 = vmatprep.subr.bf16.mxu0 0
    %1978 = vmatpush1.bf16.msra.mxu0 0
    %1979 = vmatprep.subr.bf16.mxu0 0
    %1980 = vmatpush1.bf16.msra.mxu0 0
    %1981 = vmatprep.subr.bf16.mxu0 0
    %1982 = vmatpush1.bf16.msra.mxu0 0
    %1983 = vmatprep.subr.bf16.mxu0 0
    %1984 = vmatpush1.bf16.msra.mxu0 0
    %1985 = vmatprep.subr.bf16.mxu0 0
    %1986 = vmatpush1.bf16.msra.mxu0 0
    %1987 = vmatprep.subr.bf16.mxu0 0
    %1988 = vmatpush1.bf16.msra.mxu0 0
    %1989 = vmatprep.subr.bf16.mxu0 0
    %1990 = vmatpush1.bf16.msra.mxu0 0
    %1991 = vmatprep.subr.bf16.mxu0 0
    %1992 = vmatpush1.bf16.msra.mxu0 0
    %1993 = vmatprep.subr.bf16.mxu0 0
    %1994 = vmatpush1.bf16.msra.mxu0 0
    %1995 = vmatprep.subr.bf16.mxu0 0
    %1996 = vmatpush1.bf16.msra.mxu0 0
    %1997 = vmatprep.subr.bf16.mxu0 0
    %1998 = vmatpush1.bf16.msra.mxu0 0
    %1999 = vmatprep.mubr.bf16.mxu0 0
    %2000 = vmatmul.mubr.bf16.gmra.mrb[0].mxu0 %v1965
    %v2001 = vpop.f32.mrb[0].mxu0
    %v2002 = vadd.f32 0.0, %v2001
    %v2003 = vpop.f32.mrb[0].mxu0
    %v2004 = vadd.f32 0.0, %v2003
    %v2005 = vpop.f32.mrb[0].mxu0
    %v2006 = vpop.f32.mrb[0].mxu0
    %2007 = vdwg.mxu0
    %v2008 = vadd.f32 %v1958, %v2002
    %v2009 = vxor.u32 %v2008, 2147483648
    %v2010 = vmul.f32 %v2009, 1.442695
    %v2011 = vpow.pop %v2010
    %v2012 = vadd.f32 %v2011, 1.0
    %v2013 = vrcp.pop %v2012
    %v2014 = vmul.f32 1.0, %v2013
    %v2015 = vadd.f32 %v2004, %v1698
    %v2016 = vmul.f32 %v2014, %v2015
    %v2017 = vadd.f32 %v1959, %v2016
    %v2018 = vtanh.pop %v2017
    %v2019 = vsub.f32 1.0, %v2014
    %2021 = vrot.lane.b32.xlu0 %v2018, 64
    %v2022 = vpop.permute.xlu0 %2021
    %v2024 = vmul.f32 %v2019, %v2022
    %v2025 = vmul.f32 %v2014, %v1951
    %v2026 = vadd.f32 %v2024, %v2025
    %2028 = vrot.lane.b32.xlu0 %v2026, 64
    %v2029 = vpop.permute.xlu0 %2028
    %2031 = vst.msk [vmem:[#allocation3 + $0x18] sm:$0xff] %vm684, %v2029
    %2032 = vst.msk [vmem:[#allocation4 + $0x20] sm:$0xff] %vm684, %v2029
    %v2033 = vld [vmem:[#allocation2 + $0x40] sm:$0xff]
    %v2034 = vld [vmem:[#allocation2 + $0x48] sm:$0xff]
    %v2035 = vpack.c.bf16 %v2026, %v2026
    %2037 = vrot.lane.b32.xlu0 %v2035, 64
    %v2038 = vpop.permute.xlu0 %2037
    %v2040 = vsel %vm684, %v2038, 0
    %2042 = vmatprep.subr.bf16.mxu0 %v1727
    %2043 = vmatpush1.bf16.msra.mxu0 %v1726
    %2044 = vmatprep.subr.bf16.mxu0 %v1729
    %2045 = vmatpush1.bf16.msra.mxu0 %v1728
    %2046 = vmatprep.subr.bf16.mxu0 %v1731
    %2047 = vmatpush1.bf16.msra.mxu0 %v1730
    %2048 = vmatprep.subr.bf16.mxu0 %v1733
    %2049 = vmatpush1.bf16.msra.mxu0 %v1732
    %2050 = vmatprep.subr.bf16.mxu0 0
    %2051 = vmatpush1.bf16.msra.mxu0 0
    %2052 = vmatprep.subr.bf16.mxu0 0
    %2053 = vmatpush1.bf16.msra.mxu0 0
    %2054 = vmatprep.subr.bf16.mxu0 0
    %2055 = vmatpush1.bf16.msra.mxu0 0
    %2056 = vmatprep.subr.bf16.mxu0 0
    %2057 = vmatpush1.bf16.msra.mxu0 0
    %2058 = vmatprep.subr.bf16.mxu0 0
    %2059 = vmatpush1.bf16.msra.mxu0 0
    %2060 = vmatprep.subr.bf16.mxu0 0
    %2061 = vmatpush1.bf16.msra.mxu0 0
    %2062 = vmatprep.subr.bf16.mxu0 0
    %2063 = vmatpush1.bf16.msra.mxu0 0
    %2064 = vmatprep.subr.bf16.mxu0 0
    %2065 = vmatpush1.bf16.msra.mxu0 0
    %2066 = vmatprep.subr.bf16.mxu0 0
    %2067 = vmatpush1.bf16.msra.mxu0 0
    %2068 = vmatprep.subr.bf16.mxu0 0
    %2069 = vmatpush1.bf16.msra.mxu0 0
    %2070 = vmatprep.subr.bf16.mxu0 0
    %2071 = vmatpush1.bf16.msra.mxu0 0
    %2072 = vmatprep.subr.bf16.mxu0 0
    %2073 = vmatpush1.bf16.msra.mxu0 0
    %2074 = vmatprep.mubr.bf16.mxu0 0
    %2075 = vmatmul.mubr.bf16.gmra.mrb[0].mxu0 %v2040
    %v2076 = vpop.f32.mrb[0].mxu0
    %v2077 = vadd.f32 0.0, %v2076
    %v2078 = vpop.f32.mrb[0].mxu0
    %v2079 = vadd.f32 0.0, %v2078
    %v2080 = vpop.f32.mrb[0].mxu0
    %v2081 = vpop.f32.mrb[0].mxu0
    %2082 = vdwg.mxu0
    %v2083 = vadd.f32 %v2033, %v2077
    %v2084 = vxor.u32 %v2083, 2147483648
    %v2085 = vmul.f32 %v2084, 1.442695
    %v2086 = vpow.pop %v2085
    %v2087 = vadd.f32 %v2086, 1.0
    %v2088 = vrcp.pop %v2087
    %v2089 = vmul.f32 1.0, %v2088
    %v2090 = vadd.f32 %v2079, %v1698
    %v2091 = vmul.f32 %v2089, %v2090
    %v2092 = vadd.f32 %v2034, %v2091
    %v2093 = vtanh.pop %v2092
    %v2094 = vsub.f32 1.0, %v2089
    %2096 = vrot.lane.b32.xlu0 %v2093, 64
    %v2097 = vpop.permute.xlu0 %2096
    %v2099 = vmul.f32 %v2094, %v2097
    %v2100 = vmul.f32 %v2089, %v2026
    %v2101 = vadd.f32 %v2099, %v2100
    %2103 = vrot.lane.b32.xlu0 %v2101, 64
    %v2104 = vpop.permute.xlu0 %2103
    %2106 = vst.msk [vmem:[#allocation3 + $0x20] sm:$0xff] %vm684, %v2104
    %2107 = vst.msk [vmem:[#allocation4 + $0x18] sm:$0xff] %vm684, %v2104
    %v2108 = vld [vmem:[#allocation2 + $0x50] sm:$0xff]
    %v2109 = vld [vmem:[#allocation2 + $0x58] sm:$0xff]
    %v2110 = vpack.c.bf16 %v2101, %v2101
    %2112 = vrot.lane.b32.xlu0 %v2110, 64
    %v2113 = vpop.permute.xlu0 %2112
    %v2115 = vsel %vm684, %v2113, 0
    %2117 = vmatprep.subr.bf16.mxu0 %v1727
    %2118 = vmatpush1.bf16.msra.mxu0 %v1726
    %2119 = vmatprep.subr.bf16.mxu0 %v1729
    %2120 = vmatpush1.bf16.msra.mxu0 %v1728
    %2121 = vmatprep.subr.bf16.mxu0 %v1731
    %2122 = vmatpush1.bf16.msra.mxu0 %v1730
    %2123 = vmatprep.subr.bf16.mxu0 %v1733
    %2124 = vmatpush1.bf16.msra.mxu0 %v1732
    %2125 = vmatprep.subr.bf16.mxu0 0
    %2126 = vmatpush1.bf16.msra.mxu0 0
    %2127 = vmatprep.subr.bf16.mxu0 0
    %2128 = vmatpush1.bf16.msra.mxu0 0
    %2129 = vmatprep.subr.bf16.mxu0 0
    %2130 = vmatpush1.bf16.msra.mxu0 0
    %2131 = vmatprep.subr.bf16.mxu0 0
    %2132 = vmatpush1.bf16.msra.mxu0 0
    %2133 = vmatprep.subr.bf16.mxu0 0
    %2134 = vmatpush1.bf16.msra.mxu0 0
    %2135 = vmatprep.subr.bf16.mxu0 0
    %2136 = vmatpush1.bf16.msra.mxu0 0
    %2137 = vmatprep.subr.bf16.mxu0 0
    %2138 = vmatpush1.bf16.msra.mxu0 0
    %2139 = vmatprep.subr.bf16.mxu0 0
    %2140 = vmatpush1.bf16.msra.mxu0 0
    %2141 = vmatprep.subr.bf16.mxu0 0
    %2142 = vmatpush1.bf16.msra.mxu0 0
    %2143 = vmatprep.subr.bf16.mxu0 0
    %2144 = vmatpush1.bf16.msra.mxu0 0
    %2145 = vmatprep.subr.bf16.mxu0 0
    %2146 = vmatpush1.bf16.msra.mxu0 0
    %2147 = vmatprep.subr.bf16.mxu0 0
    %2148 = vmatpush1.bf16.msra.mxu0 0
    %2149 = vmatprep.mubr.bf16.mxu0 0
    %2150 = vmatmul.mubr.bf16.gmra.mrb[0].mxu0 %v2115
    %v2151 = vpop.f32.mrb[0].mxu0
    %v2152 = vadd.f32 0.0, %v2151
    %v2153 = vpop.f32.mrb[0].mxu0
    %v2154 = vadd.f32 0.0, %v2153
    %v2155 = vpop.f32.mrb[0].mxu0
    %v2156 = vpop.f32.mrb[0].mxu0
    %2157 = vdwg.mxu0
    %v2158 = vadd.f32 %v2108, %v2152
    %v2159 = vxor.u32 %v2158, 2147483648
    %v2160 = vmul.f32 %v2159, 1.442695
    %v2161 = vpow.pop %v2160
    %v2162 = vadd.f32 %v2161, 1.0
    %v2163 = vrcp.pop %v2162
    %v2164 = vmul.f32 1.0, %v2163
    %v2165 = vadd.f32 %v2154, %v1698
    %v2166 = vmul.f32 %v2164, %v2165
    %v2167 = vadd.f32 %v2109, %v2166
    %v2168 = vtanh.pop %v2167
    %v2169 = vsub.f32 1.0, %v2164
    %2171 = vrot.lane.b32.xlu0 %v2168, 64
    %v2172 = vpop.permute.xlu0 %2171
    %v2174 = vmul.f32 %v2169, %v2172
    %v2175 = vmul.f32 %v2164, %v2101
    %v2176 = vadd.f32 %v2174, %v2175
    %2178 = vrot.lane.b32.xlu0 %v2176, 64
    %v2179 = vpop.permute.xlu0 %2178
    %2181 = vst.msk [vmem:[#allocation3 + $0x28] sm:$0xff] %vm684, %v2179
    %2182 = vst.msk [vmem:[#allocation4 + $0x10] sm:$0xff] %vm684, %v2179
    %v2183 = vld [vmem:[#allocation2 + $0x60] sm:$0xff]
    %v2184 = vld [vmem:[#allocation2 + $0x68] sm:$0xff]
    %v2185 = vpack.c.bf16 %v2176, %v2176
    %2187 = vrot.lane.b32.xlu0 %v2185, 64
    %v2188 = vpop.permute.xlu0 %2187
    %v2190 = vsel %vm684, %v2188, 0
    %2192 = vmatprep.subr.bf16.mxu0 %v1727
    %2193 = vmatpush1.bf16.msra.mxu0 %v1726
    %2194 = vmatprep.subr.bf16.mxu0 %v1729
    %2195 = vmatpush1.bf16.msra.mxu0 %v1728
    %2196 = vmatprep.subr.bf16.mxu0 %v1731
    %2197 = vmatpush1.bf16.msra.mxu0 %v1730
    %2198 = vmatprep.subr.bf16.mxu0 %v1733
    %2199 = vmatpush1.bf16.msra.mxu0 %v1732
    %2200 = vmatprep.subr.bf16.mxu0 0
    %2201 = vmatpush1.bf16.msra.mxu0 0
    %2202 = vmatprep.subr.bf16.mxu0 0
    %2203 = vmatpush1.bf16.msra.mxu0 0
    %2204 = vmatprep.subr.bf16.mxu0 0
    %2205 = vmatpush1.bf16.msra.mxu0 0
    %2206 = vmatprep.subr.bf16.mxu0 0
    %2207 = vmatpush1.bf16.msra.mxu0 0
    %2208 = vmatprep.subr.bf16.mxu0 0
    %2209 = vmatpush1.bf16.msra.mxu0 0
    %2210 = vmatprep.subr.bf16.mxu0 0
    %2211 = vmatpush1.bf16.msra.mxu0 0
    %2212 = vmatprep.subr.bf16.mxu0 0
    %2213 = vmatpush1.bf16.msra.mxu0 0
    %2214 = vmatprep.subr.bf16.mxu0 0
    %2215 = vmatpush1.bf16.msra.mxu0 0
    %2216 = vmatprep.subr.bf16.mxu0 0
    %2217 = vmatpush1.bf16.msra.mxu0 0
    %2218 = vmatprep.subr.bf16.mxu0 0
    %2219 = vmatpush1.bf16.msra.mxu0 0
    %2220 = vmatprep.subr.bf16.mxu0 0
    %2221 = vmatpush1.bf16.msra.mxu0 0
    %2222 = vmatprep.subr.bf16.mxu0 0
    %2223 = vmatpush1.bf16.msra.mxu0 0
    %2224 = vmatprep.mubr.bf16.mxu0 0
    %2225 = vmatmul.mubr.bf16.gmra.mrb[0].mxu0 %v2190
    %v2226 = vpop.f32.mrb[0].mxu0
    %v2227 = vadd.f32 0.0, %v2226
    %v2228 = vpop.f32.mrb[0].mxu0
    %v2229 = vadd.f32 0.0, %v2228
    %v2230 = vpop.f32.mrb[0].mxu0
    %v2231 = vpop.f32.mrb[0].mxu0
    %2232 = vdwg.mxu0
    %v2233 = vadd.f32 %v2183, %v2227
    %v2234 = vxor.u32 %v2233, 2147483648
    %v2235 = vmul.f32 %v2234, 1.442695
    %v2236 = vpow.pop %v2235
    %v2237 = vadd.f32 %v2236, 1.0
    %v2238 = vrcp.pop %v2237
    %v2239 = vmul.f32 1.0, %v2238
    %v2240 = vadd.f32 %v2229, %v1698
    %v2241 = vmul.f32 %v2239, %v2240
    %v2242 = vadd.f32 %v2184, %v2241
    %v2243 = vtanh.pop %v2242
    %v2244 = vsub.f32 1.0, %v2239
    %2246 = vrot.lane.b32.xlu0 %v2243, 64
    %v2247 = vpop.permute.xlu0 %2246
    %v2249 = vmul.f32 %v2244, %v2247
    %v2250 = vmul.f32 %v2239, %v2176
    %v2251 = vadd.f32 %v2249, %v2250
    %2253 = vrot.lane.b32.xlu0 %v2251, 64
    %v2254 = vpop.permute.xlu0 %2253
    %2256 = vst.msk [vmem:[#allocation3 + $0x30] sm:$0xff] %vm684, %v2254
    %2257 = vst.msk [vmem:[#allocation4 + $0x8] sm:$0xff] %vm684, %v2254
    %v2258 = vld [vmem:[#allocation2 + $0x70] sm:$0xff]
    %v2259 = vld [vmem:[#allocation2 + $0x78] sm:$0xff]
    %v2260 = vpack.c.bf16 %v2251, %v2251
    %2262 = vrot.lane.b32.xlu0 %v2260, 64
    %v2263 = vpop.permute.xlu0 %2262
    %v2265 = vsel %vm684, %v2263, 0
    %2267 = vmatprep.subr.bf16.mxu0 %v1727
    %2268 = vmatpush1.bf16.msra.mxu0 %v1726
    %2269 = vmatprep.subr.bf16.mxu0 %v1729
    %2270 = vmatpush1.bf16.msra.mxu0 %v1728
    %2271 = vmatprep.subr.bf16.mxu0 %v1731
    %2272 = vmatpush1.bf16.msra.mxu0 %v1730
    %2273 = vmatprep.subr.bf16.mxu0 %v1733
    %2274 = vmatpush1.bf16.msra.mxu0 %v1732
    %2275 = vmatprep.subr.bf16.mxu0 0
    %2276 = vmatpush1.bf16.msra.mxu0 0
    %2277 = vmatprep.subr.bf16.mxu0 0
    %2278 = vmatpush1.bf16.msra.mxu0 0
    %2279 = vmatprep.subr.bf16.mxu0 0
    %2280 = vmatpush1.bf16.msra.mxu0 0
    %2281 = vmatprep.subr.bf16.mxu0 0
    %2282 = vmatpush1.bf16.msra.mxu0 0
    %2283 = vmatprep.subr.bf16.mxu0 0
    %2284 = vmatpush1.bf16.msra.mxu0 0
    %2285 = vmatprep.subr.bf16.mxu0 0
    %2286 = vmatpush1.bf16.msra.mxu0 0
    %2287 = vmatprep.subr.bf16.mxu0 0
    %2288 = vmatpush1.bf16.msra.mxu0 0
    %2289 = vmatprep.subr.bf16.mxu0 0
    %2290 = vmatpush1.bf16.msra.mxu0 0
    %2291 = vmatprep.subr.bf16.mxu0 0
    %2292 = vmatpush1.bf16.msra.mxu0 0
    %2293 = vmatprep.subr.bf16.mxu0 0
    %2294 = vmatpush1.bf16.msra.mxu0 0
    %2295 = vmatprep.subr.bf16.mxu0 0
    %2296 = vmatpush1.bf16.msra.mxu0 0
    %2297 = vmatprep.subr.bf16.mxu0 0
    %2298 = vmatpush1.bf16.msra.mxu0 0
    %2299 = vmatprep.mubr.bf16.mxu0 0
    %2300 = vmatmul.mubr.bf16.gmra.mrb[0].mxu0 %v2265
    %v2301 = vpop.f32.mrb[0].mxu0
    %v2302 = vadd.f32 0.0, %v2301
    %v2303 = vpop.f32.mrb[0].mxu0
    %v2304 = vadd.f32 0.0, %v2303
    %v2305 = vpop.f32.mrb[0].mxu0
    %v2306 = vpop.f32.mrb[0].mxu0
    %2307 = vdwg.mxu0
    %v2308 = vadd.f32 %v2258, %v2302
    %v2309 = vxor.u32 %v2308, 2147483648
    %v2310 = vmul.f32 %v2309, 1.442695
    %v2311 = vpow.pop %v2310
    %v2312 = vadd.f32 %v2311, 1.0
    %v2313 = vrcp.pop %v2312
    %v2314 = vmul.f32 1.0, %v2313
    %v2315 = vadd.f32 %v2304, %v1698
    %v2316 = vmul.f32 %v2314, %v2315
    %v2317 = vadd.f32 %v2259, %v2316
    %v2318 = vtanh.pop %v2317
    %v2319 = vsub.f32 1.0, %v2314
    %2321 = vrot.lane.b32.xlu0 %v2318, 64
    %v2322 = vpop.permute.xlu0 %2321
    %v2324 = vmul.f32 %v2319, %v2322
    %v2325 = vmul.f32 %v2314, %v2251
    %v2326 = vadd.f32 %v2324, %v2325
    %2328 = vrot.lane.b32.xlu0 %v2326, 64
    %v2329 = vpop.permute.xlu0 %2328
    %2331 = vst.msk [vmem:[#allocation3 + $0x38] sm:$0xff] %vm684, %v2329
    %2332 = vst.msk [vmem:[#allocation4] sm:$0xff] %vm684, %v2329
    %v2333 = vld [vmem:[#allocation3] sm:$0xff]
    %v2334 = vld [vmem:[#allocation3 + $0x8] sm:$0xff]
    %v2335 = vld [vmem:[#allocation3 + $0x10] sm:$0xff]
    %v2336 = vld [vmem:[#allocation3 + $0x18] sm:$0xff]
    %v2337 = vld [vmem:[#allocation3 + $0x20] sm:$0xff]
    %v2338 = vld [vmem:[#allocation3 + $0x28] sm:$0xff]
    %v2339 = vld [vmem:[#allocation3 + $0x30] sm:$0xff]
    %v2340 = vld [vmem:[#allocation3 + $0x38] sm:$0xff]
    %v2341 = vpack.c.bf16 %v2334, %v2333
    %v2342 = vpack.c.bf16 %v2336, %v2335
    %v2343 = vpack.c.bf16 %v2338, %v2337
    %v2344 = vpack.c.bf16 %v2340, %v2339
    %v2345 = vld [vmem:[#allocation4] sm:$0xff]
    %v2346 = vld [vmem:[#allocation4 + $0x8] sm:$0xff]
    %v2347 = vld [vmem:[#allocation4 + $0x10] sm:$0xff]
    %v2348 = vld [vmem:[#allocation4 + $0x18] sm:$0xff]
    %v2349 = vld [vmem:[#allocation4 + $0x20] sm:$0xff]
    %v2350 = vld [vmem:[#allocation4 + $0x28] sm:$0xff]
    %v2351 = vld [vmem:[#allocation4 + $0x30] sm:$0xff]
    %v2352 = vld [vmem:[#allocation4 + $0x38] sm:$0xff]
    %v2353 = vpack.c.bf16 %v2346, %v2345
    %v2354 = vpack.c.bf16 %v2348, %v2347
    %v2355 = vpack.c.bf16 %v2350, %v2349
    %v2356 = vpack.c.bf16 %v2352, %v2351
    %v2357 = vmax.bf16 %v2341, 0
    %v2358 = vmax.bf16 %v2342, 0
    %v2359 = vmax.bf16 %v2343, 0
    %v2360 = vmax.bf16 %v2344, 0
    %v2361 = vld [vmem:[%s14] sm:$0xf]
    %v2362 = vld [vmem:[%s14 + $0x4] sm:$0xf]
    %v2363 = vld [vmem:[%s14 + $0x8] sm:$0xf]
    %v2364 = vld [vmem:[%s14 + $0xc] sm:$0xf]
    %v2365 = vld [vmem:[%s14 + $0x10] sm:$0xf]
    %v2366 = vld [vmem:[%s14 + $0x14] sm:$0xf]
    %v2367 = vld [vmem:[%s14 + $0x18] sm:$0xf]
    %v2368 = vld [vmem:[%s14 + $0x1c] sm:$0xf]
    %v2369 = vmax.bf16 %v2353, 0
    %v2370 = vmax.bf16 %v2354, 0
    %v2371 = vmax.bf16 %v2355, 0
    %v2372 = vmax.bf16 %v2356, 0
    %v2373 = vld [vmem:[#allocation20] sm:$0xf]
    %v2374 = vld [vmem:[#allocation20 + $0x4] sm:$0xf]
    %v2375 = vld [vmem:[#allocation20 + $0x8] sm:$0xf]
    %v2376 = vld [vmem:[#allocation20 + $0xc] sm:$0xf]
    %v2377 = vld [vmem:[#allocation20 + $0x10] sm:$0xf]
    %v2378 = vld [vmem:[#allocation20 + $0x14] sm:$0xf]
    %v2379 = vld [vmem:[#allocation20 + $0x18] sm:$0xf]
    %v2380 = vld [vmem:[#allocation20 + $0x1c] sm:$0xf]
    %v2389 = vunpack.c.l.b16 %v2373
    %v2390 = vunpack.c.l.b16 %v2374
    %v2391 = vunpack.c.l.b16 %v2375
    %v2392 = vunpack.c.l.b16 %v2376
    %v2393 = vunpack.c.l.b16 %v2377
    %v2394 = vunpack.c.l.b16 %v2378
    %v2395 = vunpack.c.l.b16 %v2379
    %v2396 = vunpack.c.l.b16 %v2380
    %v2397 = vpack.c.b16 %v2390, %v2389
    %v2398 = vpack.c.b16 %v2392, %v2391
    %v2399 = vpack.c.b16 %v2394, %v2393
    %v2400 = vpack.c.b16 %v2396, %v2395
    %v2406 = vsel %vm684, %v2369, 0
    %v2409 = vsel %vm684, %v2370, 0
    %v2412 = vsel %vm684, %v2371, 0
    %v2415 = vsel %vm684, %v2372, 0
    %2417 = vmatprep.subr.bf16.mxu0 0
    %2418 = vmatpush1.bf16.msra.mxu0 %v2397
    %2419 = vmatprep.subr.bf16.mxu0 0
    %2420 = vmatpush1.bf16.msra.mxu0 %v2398
    %2421 = vmatprep.subr.bf16.mxu0 0
    %2422 = vmatpush1.bf16.msra.mxu0 %v2399
    %2423 = vmatprep.subr.bf16.mxu0 0
    %2424 = vmatpush1.bf16.msra.mxu0 %v2400
    %2425 = vmatprep.subr.bf16.mxu0 0
    %2426 = vmatpush1.bf16.msra.mxu0 0
    %2427 = vmatprep.subr.bf16.mxu0 0
    %2428 = vmatpush1.bf16.msra.mxu0 0
    %2429 = vmatprep.subr.bf16.mxu0 0
    %2430 = vmatpush1.bf16.msra.mxu0 0
    %2431 = vmatprep.subr.bf16.mxu0 0
    %2432 = vmatpush1.bf16.msra.mxu0 0
    %2433 = vmatprep.subr.bf16.mxu0 0
    %2434 = vmatpush1.bf16.msra.mxu0 0
    %2435 = vmatprep.subr.bf16.mxu0 0
    %2436 = vmatpush1.bf16.msra.mxu0 0
    %2437 = vmatprep.subr.bf16.mxu0 0
    %2438 = vmatpush1.bf16.msra.mxu0 0
    %2439 = vmatprep.subr.bf16.mxu0 0
    %2440 = vmatpush1.bf16.msra.mxu0 0
    %2441 = vmatprep.subr.bf16.mxu0 0
    %2442 = vmatpush1.bf16.msra.mxu0 0
    %2443 = vmatprep.subr.bf16.mxu0 0
    %2444 = vmatpush1.bf16.msra.mxu0 0
    %2445 = vmatprep.subr.bf16.mxu0 0
    %2446 = vmatpush1.bf16.msra.mxu0 0
    %2447 = vmatprep.subr.bf16.mxu0 0
    %2448 = vmatpush1.bf16.msra.mxu0 0
    %2449 = vmatprep.mubr.bf16.mxu0 0
    %2450 = vmatmul.mubr.bf16.gmra.mrb[0].mxu0 %v2406
    %v2451 = vpop.f32.mrb[0].mxu0
    %v2452 = vadd.f32 0.0, %v2451
    %v2453 = vpop.f32.mrb[0].mxu0
    %v2454 = vpop.f32.mrb[0].mxu0
    %v2455 = vadd.f32 0.0, %v2454
    %v2456 = vpop.f32.mrb[0].mxu0
    %2457 = vmatprep.mubr.bf16.mxu0 0
    %2458 = vmatmul.mubr.bf16.gmra.mrb[0].mxu0 %v2409
    %v2459 = vpop.f32.mrb[0].mxu0
    %v2460 = vadd.f32 0.0, %v2459
    %v2461 = vpop.f32.mrb[0].mxu0
    %v2462 = vpop.f32.mrb[0].mxu0
    %v2463 = vadd.f32 0.0, %v2462
    %v2464 = vpop.f32.mrb[0].mxu0
    %2465 = vmatprep.mubr.bf16.mxu0 0
    %2466 = vmatmul.mubr.bf16.gmra.mrb[0].mxu0 %v2412
    %v2467 = vpop.f32.mrb[0].mxu0
    %v2468 = vadd.f32 0.0, %v2467
    %v2469 = vpop.f32.mrb[0].mxu0
    %v2470 = vpop.f32.mrb[0].mxu0
    %v2471 = vadd.f32 0.0, %v2470
    %v2472 = vpop.f32.mrb[0].mxu0
    %2473 = vmatprep.mubr.bf16.mxu0 0
    %2474 = vmatmul.mubr.bf16.gmra.mrb[0].mxu0 %v2415
    %v2475 = vpop.f32.mrb[0].mxu0
    %v2476 = vadd.f32 0.0, %v2475
    %v2477 = vpop.f32.mrb[0].mxu0
    %v2478 = vpop.f32.mrb[0].mxu0
    %v2479 = vadd.f32 0.0, %v2478
    %v2480 = vpop.f32.mrb[0].mxu0
    %2481 = vdwg.mxu0
    %v2490 = vunpack.c.l.b16 %v2361
    %v2491 = vunpack.c.l.b16 %v2362
    %v2492 = vunpack.c.l.b16 %v2363
    %v2493 = vunpack.c.l.b16 %v2364
    %v2494 = vunpack.c.l.b16 %v2365
    %v2495 = vunpack.c.l.b16 %v2366
    %v2496 = vunpack.c.l.b16 %v2367
    %v2497 = vunpack.c.l.b16 %v2368
    %v2498 = vpack.c.b16 %v2491, %v2490
    %v2499 = vpack.c.b16 %v2493, %v2492
    %v2500 = vpack.c.b16 %v2495, %v2494
    %v2501 = vpack.c.b16 %v2497, %v2496
    %v2507 = vsel %vm684, %v2357, 0
    %v2510 = vsel %vm684, %v2358, 0
    %v2513 = vsel %vm684, %v2359, 0
    %v2516 = vsel %vm684, %v2360, 0
    %2518 = vmatprep.subr.bf16.mxu0 0
    %2519 = vmatpush1.bf16.msra.mxu0 %v2498
    %2520 = vmatprep.subr.bf16.mxu0 0
    %2521 = vmatpush1.bf16.msra.mxu0 %v2499
    %2522 = vmatprep.subr.bf16.mxu0 0
    %2523 = vmatpush1.bf16.msra.mxu0 %v2500
    %2524 = vmatprep.subr.bf16.mxu0 0
    %2525 = vmatpush1.bf16.msra.mxu0 %v2501
    %2526 = vmatprep.subr.bf16.mxu0 0
    %2527 = vmatpush1.bf16.msra.mxu0 0
    %2528 = vmatprep.subr.bf16.mxu0 0
    %2529 = vmatpush1.bf16.msra.mxu0 0
    %2530 = vmatprep.subr.bf16.mxu0 0
    %2531 = vmatpush1.bf16.msra.mxu0 0
    %2532 = vmatprep.subr.bf16.mxu0 0
    %2533 = vmatpush1.bf16.msra.mxu0 0
    %2534 = vmatprep.subr.bf16.mxu0 0
    %2535 = vmatpush1.bf16.msra.mxu0 0
    %2536 = vmatprep.subr.bf16.mxu0 0
    %2537 = vmatpush1.bf16.msra.mxu0 0
    %2538 = vmatprep.subr.bf16.mxu0 0
    %2539 = vmatpush1.bf16.msra.mxu0 0
    %2540 = vmatprep.subr.bf16.mxu0 0
    %2541 = vmatpush1.bf16.msra.mxu0 0
    %2542 = vmatprep.subr.bf16.mxu0 0
    %2543 = vmatpush1.bf16.msra.mxu0 0
    %2544 = vmatprep.subr.bf16.mxu0 0
    %2545 = vmatpush1.bf16.msra.mxu0 0
    %2546 = vmatprep.subr.bf16.mxu0 0
    %2547 = vmatpush1.bf16.msra.mxu0 0
    %2548 = vmatprep.subr.bf16.mxu0 0
    %2549 = vmatpush1.bf16.msra.mxu0 0
    %2550 = vmatprep.mubr.bf16.mxu0 0
    %2551 = vmatmul.mubr.bf16.gmra.mrb[0].mxu0 %v2507
    %v2552 = vpop.f32.mrb[0].mxu0
    %v2553 = vadd.f32 %v2452, %v2552
    %v2554 = vpop.f32.mrb[0].mxu0
    %v2555 = vpop.f32.mrb[0].mxu0
    %v2556 = vadd.f32 %v2455, %v2555
    %v2557 = vpop.f32.mrb[0].mxu0
    %2558 = vmatprep.mubr.bf16.mxu0 0
    %2559 = vmatmul.mubr.bf16.gmra.mrb[0].mxu0 %v2510
    %v2560 = vpop.f32.mrb[0].mxu0
    %v2561 = vadd.f32 %v2460, %v2560
    %v2562 = vpop.f32.mrb[0].mxu0
    %v2563 = vpop.f32.mrb[0].mxu0
    %v2564 = vadd.f32 %v2463, %v2563
    %v2565 = vpop.f32.mrb[0].mxu0
    %2566 = vmatprep.mubr.bf16.mxu0 0
    %2567 = vmatmul.mubr.bf16.gmra.mrb[0].mxu0 %v2513
    %v2568 = vpop.f32.mrb[0].mxu0
    %v2569 = vadd.f32 %v2468, %v2568
    %v2570 = vpop.f32.mrb[0].mxu0
    %v2571 = vpop.f32.mrb[0].mxu0
    %v2572 = vadd.f32 %v2471, %v2571
    %v2573 = vpop.f32.mrb[0].mxu0
    %2574 = vmatprep.mubr.bf16.mxu0 0
    %2575 = vmatmul.mubr.bf16.gmra.mrb[0].mxu0 %v2516
    %v2576 = vpop.f32.mrb[0].mxu0
    %v2577 = vadd.f32 %v2476, %v2576
    %v2578 = vpop.f32.mrb[0].mxu0
    %v2579 = vpop.f32.mrb[0].mxu0
    %v2580 = vadd.f32 %v2479, %v2579
    %v2581 = vpop.f32.mrb[0].mxu0
    %2582 = vdwg.mxu0
    %2583 = vst [vmem:[#allocation22] sm:$0xff] %v2553
    %2584 = vst [vmem:[#allocation22 + $0x8] sm:$0xff] %v2556
    %2585 = vst [vmem:[#allocation22 + $0x10] sm:$0xff] %v2561
    %2586 = vst [vmem:[#allocation22 + $0x18] sm:$0xff] %v2564
    %2587 = vst [vmem:[#allocation22 + $0x20] sm:$0xff] %v2569
    %2588 = vst [vmem:[#allocation22 + $0x28] sm:$0xff] %v2572
    %2589 = vst [vmem:[#allocation22 + $0x30] sm:$0xff] %v2577
    %2590 = vst [vmem:[#allocation22 + $0x38] sm:$0xff] %v2580
    // Predicated region
    $region106: #{tpu_custom_call.1} parent=1 // pred_check
      _
    $region107: #{tpu_custom_call.1} parent=1 // pred_check_branch
      %2592 = sbr.rel (0) target = $region109
    $region108: #{tpu_custom_call.1} parent=1 // pred_region
      %s2594 = ssub.s32 1024, 1024
      %2595 = vsyncadd [#allocation7], %s2594
      %s2596 = sshll.u32 [#allocation22], 4
      %s2597 = int_to_ptr.vmem [resolvable:$true] %s2596
      %2602 = dma.vmem_to_hbm [thread:$0]  %s2597, 1024, %s16, [#allocation7], 128, 128, 8
    $region109: #{tpu_custom_call.1} parent=1 // pred_fallthru
      _
    // Predicated region
    $region110: #{tpu_custom_call.1} parent=1 // pred_check
      _
    $region111: #{tpu_custom_call.1} parent=1 // pred_check_branch
      %2604 = sbr.rel (0) target = $region113
    $region112: #{tpu_custom_call.1} parent=1 // pred_region
      %2605 = dma.done [#allocation7], 1024
    $region113: #{tpu_custom_call.1} parent=1 // pred_fallthru
      _
    %2606 = vsyncpa [#allocation6], 1
    %2607 = vsyncpa [#allocation9], 1
    %2608 = vsyncpa [#allocation12], 1
    %2609 = vsyncpa [#allocation15], 1
    %2610 = vsyncpa [#allocation18], 1
    %2611 = vsyncpa [#allocation21], 1
    %2612 = vsyncpa [#allocation7], 1

</llo_original>
